<compile_context>
chip_gen: v5e
topology: v5e:2x2
jax: 0.10.0
libtpu: 0.0.40
codegen_flags: <defaults>
</compile_context>

<pallas_src>
import functools
import math

import jax
import jax.numpy as jnp
from jax.experimental import pallas as pl
from jax.experimental.pallas import tpu as pltpu


# ----------------------------------------------------------------------------
# Kernel 1: one BiLSTM layer, both directions fused via grid=(2,)
# ----------------------------------------------------------------------------
def _bilstm_layer_kernel(x_ref, wx_ref, wh_ref, b_ref, out_ref, xg_ref,
                         *, seq_len, batch):
    """One direction of one BiLSTM layer (grid point = direction).

    x_ref   : (C, T*B, Din)  f32  VMEM  input, split into C column chunks
    wx_ref  : (C, Din, 4H)   bf16 VMEM  input->gate weights (this direction)
    wh_ref  : (H, 4H)        bf16 VMEM  hidden->gate weights (this direction)
    b_ref   : (1, 4H)        f32  VMEM  gate bias (this direction)
    out_ref : (T*B, H)       f32  VMEM  hidden state at every time step
    xg_ref  : (T*B, 4H)      f32  VMEM scratch: precomputed x @ Wx + b
    Gate order: [f, i, c_hat, o].
    """
    C = x_ref.shape[0]
    TB = x_ref.shape[1]
    H = out_ref.shape[-1]
    H4 = 4 * H
    T, B = seq_len, batch

    # --- Prologue: hoisted input projection (+ bias) for the whole sequence.
    # One well-shaped (T*B, Din) x (Din, 4H) matmul per input chunk instead of
    # T tiny per-step matmuls on the serial critical path.
    acc = jnp.zeros((TB, H4), jnp.float32)
    for j in range(C):
        wj = wx_ref[j]                                           # (Din, 4H)
        acc = acc + jnp.dot(x_ref[j].astype(wj.dtype), wj,
                            preferred_element_type=jnp.float32)
    xg_ref[...] = acc + b_ref[...]                               # bias folded once

    wh = wh_ref[...]                                             # hoisted load
    rev = pl.program_id(0)                                       # 0 = fwd, 1 = bwd

    def make_body(reverse):
        # Fully unrolled time loop (static trip count): h/c live in vregs,
        # all time indices are static, no per-step concat / bias broadcast.
        def body():
            h = jnp.zeros((B, H), jnp.float32)
            c = jnp.zeros((B, H), jnp.float32)
            for s in range(T):
                t = T - 1 - s if reverse else s
                row = t * B
                g = xg_ref[pl.ds(row, B)] + jnp.dot(
                    h.astype(wh.dtype), wh, preferred_element_type=jnp.float32)
                f = jax.nn.sigmoid(g[:, 0:H])
                i = jax.nn.sigmoid(g[:, H:2 * H])
                c_hat = jnp.tanh(g[:, 2 * H:3 * H])
                o = jax.nn.sigmoid(g[:, 3 * H:4 * H])
                c = f * c + i * c_hat
                h = o * jnp.tanh(c)
                out_ref[pl.ds(row, B)] = h
        return body

    pl.when(rev == 0)(make_body(False))
    pl.when(rev == 1)(make_body(True))


def bilstm_layer(x, wx, wh, b, *, seq_len, batch):
    """x: (C, T*B, Din) f32; wx: (2, C, Din, 4H) bf16; wh: (2, H, 4H) bf16;
    b: (2, 1, 4H) f32 -> (2, T*B, H) f32: [0]=fwd hiddens, [1]=bwd hiddens,
    both already in original time order."""
    C, TB, Din = x.shape
    H = wh.shape[1]
    kernel = functools.partial(_bilstm_layer_kernel,
                               seq_len=seq_len, batch=batch)
    return pl.pallas_call(
        kernel,
        out_shape=jax.ShapeDtypeStruct((2, TB, H), jnp.float32),
        grid=(2,),
        in_specs=[
            pl.BlockSpec((C, TB, Din), lambda d: (0, 0, 0)),       # shared input
            pl.BlockSpec((None, C, Din, 4 * H), lambda d: (d, 0, 0, 0)),
            pl.BlockSpec((None, H, 4 * H), lambda d: (d, 0, 0)),
            pl.BlockSpec((None, 1, 4 * H), lambda d: (d, 0, 0)),
        ],
        out_specs=pl.BlockSpec((None, TB, H), lambda d: (d, 0, 0)),
        scratch_shapes=[pltpu.VMEM((TB, 4 * H), jnp.float32)],
        compiler_params=pltpu.CompilerParams(
            dimension_semantics=("parallel",)),   # fwd/bwd on separate TCs (v7x)
    )(x, wx, wh, b)


# ----------------------------------------------------------------------------
# Kernel 2: hidden2tag head (lane-dense, no concat of fwd/bwd hidden states)
# ----------------------------------------------------------------------------
def _tag_kernel(x_ref, w_ref, b_ref, o_ref):
    """x_ref: (2, T*B, H) f32; w_ref: (2, H, Np) bf16; b_ref: (1, Np) f32;
    o_ref: (T*B, Np) f32 with Np a multiple of 128 (lane-dense stores)."""
    w0 = w_ref[0]
    w1 = w_ref[1]
    o_ref[...] = (jnp.dot(x_ref[0].astype(w0.dtype), w0,
                          preferred_element_type=jnp.float32)
                  + jnp.dot(x_ref[1].astype(w1.dtype), w1,
                            preferred_element_type=jnp.float32)
                  + b_ref[...])


def tag_head(l2, wt, bt):
    _, TB, _ = l2.shape
    Np = wt.shape[-1]
    vmem = pl.BlockSpec(memory_space=pltpu.MemorySpace.VMEM)
    return pl.pallas_call(
        _tag_kernel,
        out_shape=jax.ShapeDtypeStruct((TB, Np), jnp.float32),
        in_specs=[vmem, vmem, vmem],
        out_specs=vmem,
    )(l2, wt, bt)


# ----------------------------------------------------------------------------
# Deterministic parameter construction (matches __init__ shapes & init law)
# ----------------------------------------------------------------------------
def _linear_wb(key, in_dim, out_dim):
    # PyTorch nn.Linear default init: U(-1/sqrt(in_dim), 1/sqrt(in_dim)).
    kw, kb = jax.random.split(key)
    bound = 1.0 / math.sqrt(in_dim)
    w = jax.random.uniform(kw, (out_dim, in_dim), jnp.float32, -bound, bound)
    b = jax.random.uniform(kb, (out_dim,), jnp.float32, -bound, bound)
    return w, b


def _lstm_dir_params(key, input_size, hidden, n_chunks):
    """Pack the 4 per-gate nn.Linear layers (ff_f, ff_i, ff_c, ff_o) acting on
    concat(x, h); split into chunked W_x (n_chunks, Din/n_chunks, 4H), W_h and b."""
    ws, bs = [], []
    for k in jax.random.split(key, 4):            # gate order f, i, c_hat, o
        w, b = _linear_wb(k, input_size + hidden, hidden)
        ws.append(w.T)                            # (concat, H)
        bs.append(b)
    W = jnp.concatenate(ws, axis=1)               # (concat, 4H)
    Wx = W[:input_size].reshape(n_chunks, input_size // n_chunks, 4 * hidden)
    Wh = W[input_size:]                           # (H, 4H)
    bias = jnp.concatenate(bs)[None, :]           # (1, 4H)
    return Wx, Wh, bias


def init_params(key, config):
    assert config['repr_type'] == 'a'
    E, H, NT = (config['embedding_dim'], config['hidden_dim'],
                config['tagset_size'])
    ks = jax.random.split(key, 6)

    emb = 0.1 * jax.random.normal(ks[0], (config['vocab_size'], E), jnp.float32)
    emb = emb.at[0].set(0.0)                      # padding_idx=0

    def both_dirs(kf, kb, din, n_chunks):
        xf, hf, bf = _lstm_dir_params(kf, din, H, n_chunks)
        xb, hb, bb = _lstm_dir_params(kb, din, H, n_chunks)
        return (jnp.stack([xf, xb]).astype(jnp.bfloat16),   # MXU in bf16
                jnp.stack([hf, hb]).astype(jnp.bfloat16),
                jnp.stack([bf, bb]))                         # bias stays f32

    w1x, w1h, b1 = both_dirs(ks[1], ks[2], E, 1)
    w2x, w2h, b2 = both_dirs(ks[3], ks[4], 2 * H, 2)

    # hidden2tag: columns padded to a lane-dense multiple of 128, rows split
    # into fwd/bwd halves so no concat of hidden states is needed.
    wt, bt = _linear_wb(ks[5], 2 * H, NT)
    NTp = ((NT + 127) // 128) * 128
    wt_p = jnp.zeros((2 * H, NTp), jnp.float32).at[:, :NT].set(wt.T)
    w_tag = wt_p.reshape(2, H, NTp).astype(jnp.bfloat16)
    b_tag = jnp.zeros((1, NTp), jnp.float32).at[:, :NT].set(bt)

    return dict(emb=emb, w1x=w1x, w1h=w1h, b1=b1,
                w2x=w2x, w2h=w2h, b2=b2, w_tag=w_tag, b_tag=b_tag)


# ----------------------------------------------------------------------------
# BiLSTMTagger forward (repr_type='a')
# ----------------------------------------------------------------------------
def bilstm_tagger_forward(params, word_indices, *, tagset_size):
    B, T = word_indices.shape
    B_pad = max(8, ((B + 7) // 8) * 8)            # sublane-aligned batch

    # embedding lookup (glue); dropout = identity (eval mode)
    embeds = params['emb'][word_indices]          # (B, T, E)
    x = jnp.transpose(embeds, (1, 0, 2))          # (T, B, E) time-major
    if B_pad != B:
        x = jnp.pad(x, ((0, 0), (0, B_pad - B), (0, 0)))
    E = x.shape[-1]
    x = x.reshape(1, T * B_pad, E)                # one input chunk, flat rows

    # BiLSTM layer 1 (fwd + bwd in one kernel)
    out1 = bilstm_layer(x, params['w1x'], params['w1h'], params['b1'],
                        seq_len=T, batch=B_pad)                  # (2, T*Bp, H)
    # BiLSTM layer 2 consumes fwd/bwd chunks directly (no concat in HBM)
    out2 = bilstm_layer(out1, params['w2x'], params['w2h'], params['b2'],
                        seq_len=T, batch=B_pad)                  # (2, T*Bp, H)
    # hidden2tag (lane-dense padded output)
    logits_p = tag_head(out2, params['w_tag'], params['b_tag'])  # (T*Bp, Np)

    Np = logits_p.shape[-1]
    logits = logits_p.reshape(T, B_pad, Np)[:, :B, :tagset_size]
    # match reference ordering: (B, T, tags) flattened batch-major
    return jnp.transpose(logits, (1, 0, 2)).reshape(B * T, tagset_size)


if __name__ == "__main__":
    config = dict(repr_type='a',
                  vocab_size=50,
                  embedding_dim=32,
                  hidden_dim=32,
                  tagset_size=16)
    key = jax.random.PRNGKey(0)
    kp, kd = jax.random.split(key)
    params = init_params(kp, config)

    B, T = 2, 8
    word_indices = jax.random.randint(kd, (B, T), 1, config['vocab_size'],
                                      dtype=jnp.int32)

    fwd = jax.jit(functools.partial(bilstm_tagger_forward,
                                    tagset_size=config['tagset_size']))
    logits = jax.block_until_ready(fwd(params, word_indices))

    assert logits.shape == (B * T, config['tagset_size'])
    assert logits.dtype == jnp.float32
    assert bool(jnp.all(jnp.isfinite(logits)))
    print("KERNEL_OK")
</pallas_src>

<mosaic_0001>
module attributes {stable_mosaic.version = 11 : i64} {
  func.func @_tag_kernel(%arg0: memref<2x64x32xf32, #tpu.memory_space<vmem>>, %arg1: memref<2x32x128xbf16, #tpu.memory_space<vmem>>, %arg2: memref<1x128xf32, #tpu.memory_space<vmem>>, %arg3: memref<64x128xf32, #tpu.memory_space<vmem>>) attributes {dimension_semantics = [], scalar_prefetch = 0 : i64, scratch_operands = 0 : i64, tpu.core_type = #tpu.core_type<tc>} {
    %c0 = arith.constant 0 : index
    %c0_0 = arith.constant 0 : index
    %c0_1 = arith.constant 0 : index
    %0 = vector.load %arg1[%c0, %c0_0, %c0_1] : memref<2x32x128xbf16, #tpu.memory_space<vmem>>, vector<1x32x128xbf16>
    %1 = vector.shape_cast %0 : vector<1x32x128xbf16> to vector<32x128xbf16>
    %c1 = arith.constant 1 : index
    %c0_2 = arith.constant 0 : index
    %c0_3 = arith.constant 0 : index
    %2 = vector.load %arg1[%c1, %c0_2, %c0_3] : memref<2x32x128xbf16, #tpu.memory_space<vmem>>, vector<1x32x128xbf16>
    %3 = vector.shape_cast %2 : vector<1x32x128xbf16> to vector<32x128xbf16>
    %c0_4 = arith.constant 0 : index
    %c0_5 = arith.constant 0 : index
    %c0_6 = arith.constant 0 : index
    %4 = vector.load %arg0[%c0_4, %c0_5, %c0_6] : memref<2x64x32xf32, #tpu.memory_space<vmem>>, vector<1x64x32xf32>
    %5 = vector.shape_cast %4 : vector<1x64x32xf32> to vector<64x32xf32>
    %6 = arith.truncf %5 : vector<64x32xf32> to vector<64x32xbf16>
    %cst = arith.constant dense<0.000000e+00> : vector<64x128xf32>
    %7 = tpu.matmul %6, %1, %cst {dimension_numbers = #tpu.dot_dimension_numbers<[1], [0], [0], [1], [0, 0, 1, 1], [], []>} : vector<64x32xbf16>, vector<32x128xbf16>, vector<64x128xf32> -> vector<64x128xf32>
    %c1_7 = arith.constant 1 : index
    %c0_8 = arith.constant 0 : index
    %c0_9 = arith.constant 0 : index
    %8 = vector.load %arg0[%c1_7, %c0_8, %c0_9] : memref<2x64x32xf32, #tpu.memory_space<vmem>>, vector<1x64x32xf32>
    %9 = vector.shape_cast %8 : vector<1x64x32xf32> to vector<64x32xf32>
    %10 = arith.truncf %9 : vector<64x32xf32> to vector<64x32xbf16>
    %cst_10 = arith.constant dense<0.000000e+00> : vector<64x128xf32>
    %11 = tpu.matmul %10, %3, %cst_10 {dimension_numbers = #tpu.dot_dimension_numbers<[1], [0], [0], [1], [0, 0, 1, 1], [], []>} : vector<64x32xbf16>, vector<32x128xbf16>, vector<64x128xf32> -> vector<64x128xf32>
    %12 = arith.addf %7, %11 : vector<64x128xf32>
    %c0_11 = arith.constant 0 : index
    %c0_12 = arith.constant 0 : index
    %13 = vector.load %arg2[%c0_11, %c0_12] : memref<1x128xf32, #tpu.memory_space<vmem>>, vector<1x128xf32>
    %14 = vector.broadcast %13 : vector<1x128xf32> to vector<64x128xf32>
    %15 = arith.addf %12, %14 : vector<64x128xf32>
    %c0_13 = arith.constant 0 : index
    %c0_14 = arith.constant 0 : index
    %16 = vector.load %arg3[%c0_13, %c0_14] : memref<64x128xf32, #tpu.memory_space<vmem>>, vector<64x128xf32>
    tpu.vector_store %arg3[%c0_13, %c0_14], %15 {strides = array<i32>} : memref<64x128xf32, #tpu.memory_space<vmem>>, vector<64x128xf32>,
    return
  }
}

module attributes {stable_mosaic.version = 11 : i64} {
  func.func @_bilstm_layer_kernel(%arg0: i32, %arg1: memref<1x64x32xf32, #tpu.memory_space<vmem>>, %arg2: memref<1x1x32x128xbf16, #tpu.memory_space<vmem>>, %arg3: memref<1x32x128xbf16, #tpu.memory_space<vmem>>, %arg4: memref<1x1x128xf32, #tpu.memory_space<vmem>>, %arg5: memref<1x64x32xf32, #tpu.memory_space<vmem>>, %arg6: memref<64x128xf32, #tpu.memory_space<vmem>>) attributes {dimension_semantics = [#tpu.dimension_semantics<parallel>], iteration_bounds = array<i64: 2>, scalar_prefetch = 0 : i64, scratch_operands = 1 : i64, tpu.core_type = #tpu.core_type<tc>, window_params = [{pipeline_mode = #tpu.pipeline_mode<synchronous>, transform_indices = @transform_0, window_bounds = array<i64: 1, 64, 32>}, {transform_indices = @transform_1, window_bounds = array<i64: 1, 1, 32, 128>}, {transform_indices = @transform_2, window_bounds = array<i64: 1, 32, 128>}, {transform_indices = @transform_3, window_bounds = array<i64: 1, 1, 128>}, {transform_indices = @transform_4, window_bounds = array<i64: 1, 64, 32>}]} {
    %cst = arith.constant 0.000000e+00 : f32
    %0 = vector.broadcast %cst : f32 to vector<64x128xf32>
    %c0 = arith.constant 0 : index
    %c0_0 = arith.constant 0 : index
    %c0_1 = arith.constant 0 : index
    %c0_2 = arith.constant 0 : index
    %1 = vector.load %arg2[%c0, %c0_0, %c0_1, %c0_2] : memref<1x1x32x128xbf16, #tpu.memory_space<vmem>>, vector<1x1x32x128xbf16>
    %2 = vector.shape_cast %1 : vector<1x1x32x128xbf16> to vector<32x128xbf16>
    %c0_3 = arith.constant 0 : index
    %c0_4 = arith.constant 0 : index
    %c0_5 = arith.constant 0 : index
    %3 = vector.load %arg1[%c0_3, %c0_4, %c0_5] : memref<1x64x32xf32, #tpu.memory_space<vmem>>, vector<1x64x32xf32>
    %4 = vector.shape_cast %3 : vector<1x64x32xf32> to vector<64x32xf32>
    %5 = arith.truncf %4 : vector<64x32xf32> to vector<64x32xbf16>
    %cst_6 = arith.constant dense<0.000000e+00> : vector<64x128xf32>
    %6 = tpu.matmul %5, %2, %cst_6 {dimension_numbers = #tpu.dot_dimension_numbers<[1], [0], [0], [1], [0, 0, 1, 1], [], []>} : vector<64x32xbf16>, vector<32x128xbf16>, vector<64x128xf32> -> vector<64x128xf32>
    %7 = arith.addf %0, %6 : vector<64x128xf32>
    %c0_7 = arith.constant 0 : index
    %c0_8 = arith.constant 0 : index
    %c0_9 = arith.constant 0 : index
    %8 = vector.load %arg4[%c0_7, %c0_8, %c0_9] : memref<1x1x128xf32, #tpu.memory_space<vmem>>, vector<1x1x128xf32>
    %9 = vector.shape_cast %8 : vector<1x1x128xf32> to vector<1x128xf32>
    %10 = vector.broadcast %9 : vector<1x128xf32> to vector<64x128xf32>
    %11 = arith.addf %7, %10 : vector<64x128xf32>
    %c0_10 = arith.constant 0 : index
    %c0_11 = arith.constant 0 : index
    %12 = vector.load %arg6[%c0_10, %c0_11] : memref<64x128xf32, #tpu.memory_space<vmem>>, vector<64x128xf32>
    tpu.vector_store %arg6[%c0_10, %c0_11], %11 {strides = array<i32>} : memref<64x128xf32, #tpu.memory_space<vmem>>, vector<64x128xf32>,
    %c0_12 = arith.constant 0 : index
    %c0_13 = arith.constant 0 : index
    %c0_14 = arith.constant 0 : index
    %13 = vector.load %arg3[%c0_12, %c0_13, %c0_14] : memref<1x32x128xbf16, #tpu.memory_space<vmem>>, vector<1x32x128xbf16>
    %14 = vector.shape_cast %13 : vector<1x32x128xbf16> to vector<32x128xbf16>
    %c0_i32 = arith.constant 0 : i32
    %15 = arith.cmpi eq, %arg0, %c0_i32 : i32
    %16 = arith.extui %15 : i1 to i32
    %c0_i32_15 = arith.constant 0 : i32
    %17 = arith.cmpi ne, %16, %c0_i32_15 : i32
    scf.if %17 {
      %cst_17 = arith.constant 0.000000e+00 : f32
      %21 = vector.broadcast %cst_17 : f32 to vector<8x32xf32>
      %cst_18 = arith.constant 0.000000e+00 : f32
      %22 = vector.broadcast %cst_18 : f32 to vector<8x32xf32>
      %c0_19 = arith.constant 0 : index
      %c0_20 = arith.constant 0 : index
      %23 = vector.load %arg6[%c0_19, %c0_20] : memref<64x128xf32, #tpu.memory_space<vmem>>, vector<8x128xf32>
      %24 = arith.truncf %21 : vector<8x32xf32> to vector<8x32xbf16>
      %cst_21 = arith.constant dense<0.000000e+00> : vector<8x128xf32>
      %25 = tpu.matmul %24, %14, %cst_21 {dimension_numbers = #tpu.dot_dimension_numbers<[1], [0], [0], [1], [0, 0, 1, 1], [], []>} : vector<8x32xbf16>, vector<32x128xbf16>, vector<8x128xf32> -> vector<8x128xf32>
      %26 = arith.addf %23, %25 : vector<8x128xf32>
      %27 = vector.extract_strided_slice %26 {offsets = [0, 0], sizes = [8, 32], strides = [1, 1]} : vector<8x128xf32> to vector<8x32xf32>
      %28 = arith.negf %27 : vector<8x32xf32>
      %29 = math.exp %28 : vector<8x32xf32>
      %cst_22 = arith.constant 1.000000e+00 : f32
      %30 = vector.broadcast %cst_22 : f32 to vector<8x32xf32>
      %31 = arith.addf %30, %29 : vector<8x32xf32>
      %32 = arith.divf %30, %31 : vector<8x32xf32>
      %33 = vector.extract_strided_slice %26 {offsets = [0, 32], sizes = [8, 32], strides = [1, 1]} : vector<8x128xf32> to vector<8x32xf32>
      %34 = arith.negf %33 : vector<8x32xf32>
      %35 = math.exp %34 : vector<8x32xf32>
      %cst_23 = arith.constant 1.000000e+00 : f32
      %36 = vector.broadcast %cst_23 : f32 to vector<8x32xf32>
      %37 = arith.addf %36, %35 : vector<8x32xf32>
      %38 = arith.divf %36, %37 : vector<8x32xf32>
      %39 = vector.extract_strided_slice %26 {offsets = [0, 64], sizes = [8, 32], strides = [1, 1]} : vector<8x128xf32> to vector<8x32xf32>
      %40 = math.tanh %39 : vector<8x32xf32>
      %41 = vector.extract_strided_slice %26 {offsets = [0, 96], sizes = [8, 32], strides = [1, 1]} : vector<8x128xf32> to vector<8x32xf32>
      %42 = arith.negf %41 : vector<8x32xf32>
      %43 = math.exp %42 : vector<8x32xf32>
      %cst_24 = arith.constant 1.000000e+00 : f32
      %44 = vector.broadcast %cst_24 : f32 to vector<8x32xf32>
      %45 = arith.addf %44, %43 : vector<8x32xf32>
      %46 = arith.divf %44, %45 : vector<8x32xf32>
      %47 = arith.mulf %32, %22 : vector<8x32xf32>
      %48 = arith.mulf %38, %40 : vector<8x32xf32>
      %49 = arith.addf %47, %48 : vector<8x32xf32>
      %50 = math.tanh %49 : vector<8x32xf32>
      %51 = arith.mulf %46, %50 : vector<8x32xf32>
      %c0_25 = arith.constant 0 : index
      %c0_26 = arith.constant 0 : index
      %c0_27 = arith.constant 0 : index
      %52 = vector.load %arg5[%c0_25, %c0_26, %c0_27] : memref<1x64x32xf32, #tpu.memory_space<vmem>>, vector<1x8x32xf32>
      %53 = vector.shape_cast %52 : vector<1x8x32xf32> to vector<8x32xf32>
      %54 = vector.shape_cast %51 : vector<8x32xf32> to vector<1x8x32xf32>
      tpu.vector_store %arg5[%c0_25, %c0_26, %c0_27], %54 {strides = array<i32>} : memref<1x64x32xf32, #tpu.memory_space<vmem>>, vector<1x8x32xf32>,
      %c8 = arith.constant 8 : index
      %c0_28 = arith.constant 0 : index
      %55 = vector.load %arg6[%c8, %c0_28] : memref<64x128xf32, #tpu.memory_space<vmem>>, vector<8x128xf32>
      %56 = arith.truncf %51 : vector<8x32xf32> to vector<8x32xbf16>
      %cst_29 = arith.constant dense<0.000000e+00> : vector<8x128xf32>
      %57 = tpu.matmul %56, %14, %cst_29 {dimension_numbers = #tpu.dot_dimension_numbers<[1], [0], [0], [1], [0, 0, 1, 1], [], []>} : vector<8x32xbf16>, vector<32x128xbf16>, vector<8x128xf32> -> vector<8x128xf32>
      %58 = arith.addf %55, %57 : vector<8x128xf32>
      %59 = vector.extract_strided_slice %58 {offsets = [0, 0], sizes = [8, 32], strides = [1, 1]} : vector<8x128xf32> to vector<8x32xf32>
      %60 = arith.negf %59 : vector<8x32xf32>
      %61 = math.exp %60 : vector<8x32xf32>
      %cst_30 = arith.constant 1.000000e+00 : f32
      %62 = vector.broadcast %cst_30 : f32 to vector<8x32xf32>
      %63 = arith.addf %62, %61 : vector<8x32xf32>
      %64 = arith.divf %62, %63 : vector<8x32xf32>
      %65 = vector.extract_strided_slice %58 {offsets = [0, 32], sizes = [8, 32], strides = [1, 1]} : vector<8x128xf32> to vector<8x32xf32>
      %66 = arith.negf %65 : vector<8x32xf32>
      %67 = math.exp %66 : vector<8x32xf32>
      %cst_31 = arith.constant 1.000000e+00 : f32
      %68 = vector.broadcast %cst_31 : f32 to vector<8x32xf32>
      %69 = arith.addf %68, %67 : vector<8x32xf32>
      %70 = arith.divf %68, %69 : vector<8x32xf32>
      %71 = vector.extract_strided_slice %58 {offsets = [0, 64], sizes = [8, 32], strides = [1, 1]} : vector<8x128xf32> to vector<8x32xf32>
      %72 = math.tanh %71 : vector<8x32xf32>
      %73 = vector.extract_strided_slice %58 {offsets = [0, 96], sizes = [8, 32], strides = [1, 1]} : vector<8x128xf32> to vector<8x32xf32>
      %74 = arith.negf %73 : vector<8x32xf32>
      %75 = math.exp %74 : vector<8x32xf32>
      %cst_32 = arith.constant 1.000000e+00 : f32
      %76 = vector.broadcast %cst_32 : f32 to vector<8x32xf32>
      %77 = arith.addf %76, %75 : vector<8x32xf32>
      %78 = arith.divf %76, %77 : vector<8x32xf32>
      %79 = arith.mulf %64, %49 : vector<8x32xf32>
      %80 = arith.mulf %70, %72 : vector<8x32xf32>
      %81 = arith.addf %79, %80 : vector<8x32xf32>
      %82 = math.tanh %81 : vector<8x32xf32>
      %83 = arith.mulf %78, %82 : vector<8x32xf32>
      %c0_33 = arith.constant 0 : index
      %c8_34 = arith.constant 8 : index
      %c0_35 = arith.constant 0 : index
      %84 = vector.load %arg5[%c0_33, %c8_34, %c0_35] : memref<1x64x32xf32, #tpu.memory_space<vmem>>, vector<1x8x32xf32>
      %85 = vector.shape_cast %84 : vector<1x8x32xf32> to vector<8x32xf32>
      %86 = vector.shape_cast %83 : vector<8x32xf32> to vector<1x8x32xf32>
      tpu.vector_store %arg5[%c0_33, %c8_34, %c0_35], %86 {strides = array<i32>} : memref<1x64x32xf32, #tpu.memory_space<vmem>>, vector<1x8x32xf32>,
      %c16 = arith.constant 16 : index
      %c0_36 = arith.constant 0 : index
      %87 = vector.load %arg6[%c16, %c0_36] : memref<64x128xf32, #tpu.memory_space<vmem>>, vector<8x128xf32>
      %88 = arith.truncf %83 : vector<8x32xf32> to vector<8x32xbf16>
      %cst_37 = arith.constant dense<0.000000e+00> : vector<8x128xf32>
      %89 = tpu.matmul %88, %14, %cst_37 {dimension_numbers = #tpu.dot_dimension_numbers<[1], [0], [0], [1], [0, 0, 1, 1], [], []>} : vector<8x32xbf16>, vector<32x128xbf16>, vector<8x128xf32> -> vector<8x128xf32>
      %90 = arith.addf %87, %89 : vector<8x128xf32>
      %91 = vector.extract_strided_slice %90 {offsets = [0, 0], sizes = [8, 32], strides = [1, 1]} : vector<8x128xf32> to vector<8x32xf32>
      %92 = arith.negf %91 : vector<8x32xf32>
      %93 = math.exp %92 : vector<8x32xf32>
      %cst_38 = arith.constant 1.000000e+00 : f32
      %94 = vector.broadcast %cst_38 : f32 to vector<8x32xf32>
      %95 = arith.addf %94, %93 : vector<8x32xf32>
      %96 = arith.divf %94, %95 : vector<8x32xf32>
      %97 = vector.extract_strided_slice %90 {offsets = [0, 32], sizes = [8, 32], strides = [1, 1]} : vector<8x128xf32> to vector<8x32xf32>
      %98 = arith.negf %97 : vector<8x32xf32>
      %99 = math.exp %98 : vector<8x32xf32>
      %cst_39 = arith.constant 1.000000e+00 : f32
      %100 = vector.broadcast %cst_39 : f32 to vector<8x32xf32>
      %101 = arith.addf %100, %99 : vector<8x32xf32>
      %102 = arith.divf %100, %101 : vector<8x32xf32>
      %103 = vector.extract_strided_slice %90 {offsets = [0, 64], sizes = [8, 32], strides = [1, 1]} : vector<8x128xf32> to vector<8x32xf32>
      %104 = math.tanh %103 : vector<8x32xf32>
      %105 = vector.extract_strided_slice %90 {offsets = [0, 96], sizes = [8, 32], strides = [1, 1]} : vector<8x128xf32> to vector<8x32xf32>
      %106 = arith.negf %105 : vector<8x32xf32>
      %107 = math.exp %106 : vector<8x32xf32>
      %cst_40 = arith.constant 1.000000e+00 : f32
      %108 = vector.broadcast %cst_40 : f32 to vector<8x32xf32>
      %109 = arith.addf %108, %107 : vector<8x32xf32>
      %110 = arith.divf %108, %109 : vector<8x32xf32>
      %111 = arith.mulf %96, %81 : vector<8x32xf32>
      %112 = arith.mulf %102, %104 : vector<8x32xf32>
      %113 = arith.addf %111, %112 : vector<8x32xf32>
      %114 = math.tanh %113 : vector<8x32xf32>
      %115 = arith.mulf %110, %114 : vector<8x32xf32>
      %c0_41 = arith.constant 0 : index
      %c16_42 = arith.constant 16 : index
      %c0_43 = arith.constant 0 : index
      %116 = vector.load %arg5[%c0_41, %c16_42, %c0_43] : memref<1x64x32xf32, #tpu.memory_space<vmem>>, vector<1x8x32xf32>
      %117 = vector.shape_cast %116 : vector<1x8x32xf32> to vector<8x32xf32>
      %118 = vector.shape_cast %115 : vector<8x32xf32> to vector<1x8x32xf32>
      tpu.vector_store %arg5[%c0_41, %c16_42, %c0_43], %118 {strides = array<i32>} : memref<1x64x32xf32, #tpu.memory_space<vmem>>, vector<1x8x32xf32>,
      %c24 = arith.constant 24 : index
      %c0_44 = arith.constant 0 : index
      %119 = vector.load %arg6[%c24, %c0_44] : memref<64x128xf32, #tpu.memory_space<vmem>>, vector<8x128xf32>
      %120 = arith.truncf %115 : vector<8x32xf32> to vector<8x32xbf16>
      %cst_45 = arith.constant dense<0.000000e+00> : vector<8x128xf32>
      %121 = tpu.matmul %120, %14, %cst_45 {dimension_numbers = #tpu.dot_dimension_numbers<[1], [0], [0], [1], [0, 0, 1, 1], [], []>} : vector<8x32xbf16>, vector<32x128xbf16>, vector<8x128xf32> -> vector<8x128xf32>
      %122 = arith.addf %119, %121 : vector<8x128xf32>
      %123 = vector.extract_strided_slice %122 {offsets = [0, 0], sizes = [8, 32], strides = [1, 1]} : vector<8x128xf32> to vector<8x32xf32>
      %124 = arith.negf %123 : vector<8x32xf32>
      %125 = math.exp %124 : vector<8x32xf32>
      %cst_46 = arith.constant 1.000000e+00 : f32
      %126 = vector.broadcast %cst_46 : f32 to vector<8x32xf32>
      %127 = arith.addf %126, %125 : vector<8x32xf32>
      %128 = arith.divf %126, %127 : vector<8x32xf32>
      %129 = vector.extract_strided_slice %122 {offsets = [0, 32], sizes = [8, 32], strides = [1, 1]} : vector<8x128xf32> to vector<8x32xf32>
      %130 = arith.negf %129 : vector<8x32xf32>
      %131 = math.exp %130 : vector<8x32xf32>
      %cst_47 = arith.constant 1.000000e+00 : f32
      %132 = vector.broadcast %cst_47 : f32 to vector<8x32xf32>
      %133 = arith.addf %132, %131 : vector<8x32xf32>
      %134 = arith.divf %132, %133 : vector<8x32xf32>
      %135 = vector.extract_strided_slice %122 {offsets = [0, 64], sizes = [8, 32], strides = [1, 1]} : vector<8x128xf32> to vector<8x32xf32>
      %136 = math.tanh %135 : vector<8x32xf32>
      %137 = vector.extract_strided_slice %122 {offsets = [0, 96], sizes = [8, 32], strides = [1, 1]} : vector<8x128xf32> to vector<8x32xf32>
      %138 = arith.negf %137 : vector<8x32xf32>
      %139 = math.exp %138 : vector<8x32xf32>
      %cst_48 = arith.constant 1.000000e+00 : f32
      %140 = vector.broadcast %cst_48 : f32 to vector<8x32xf32>
      %141 = arith.addf %140, %139 : vector<8x32xf32>
      %142 = arith.divf %140, %141 : vector<8x32xf32>
      %143 = arith.mulf %128, %113 : vector<8x32xf32>
      %144 = arith.mulf %134, %136 : vector<8x32xf32>
      %145 = arith.addf %143, %144 : vector<8x32xf32>
      %146 = math.tanh %145 : vector<8x32xf32>
      %147 = arith.mulf %142, %146 : vector<8x32xf32>
      %c0_49 = arith.constant 0 : index
      %c24_50 = arith.constant 24 : index
      %c0_51 = arith.constant 0 : index
      %148 = vector.load %arg5[%c0_49, %c24_50, %c0_51] : memref<1x64x32xf32, #tpu.memory_space<vmem>>, vector<1x8x32xf32>
      %149 = vector.shape_cast %148 : vector<1x8x32xf32> to vector<8x32xf32>
      %150 = vector.shape_cast %147 : vector<8x32xf32> to vector<1x8x32xf32>
      tpu.vector_store %arg5[%c0_49, %c24_50, %c0_51], %150 {strides = array<i32>} : memref<1x64x32xf32, #tpu.memory_space<vmem>>, vector<1x8x32xf32>,
      %c32 = arith.constant 32 : index
      %c0_52 = arith.constant 0 : index
      %151 = vector.load %arg6[%c32, %c0_52] : memref<64x128xf32, #tpu.memory_space<vmem>>, vector<8x128xf32>
      %152 = arith.truncf %147 : vector<8x32xf32> to vector<8x32xbf16>
      %cst_53 = arith.constant dense<0.000000e+00> : vector<8x128xf32>
      %153 = tpu.matmul %152, %14, %cst_53 {dimension_numbers = #tpu.dot_dimension_numbers<[1], [0], [0], [1], [0, 0, 1, 1], [], []>} : vector<8x32xbf16>, vector<32x128xbf16>, vector<8x128xf32> -> vector<8x128xf32>
      %154 = arith.addf %151, %153 : vector<8x128xf32>
      %155 = vector.extract_strided_slice %154 {offsets = [0, 0], sizes = [8, 32], strides = [1, 1]} : vector<8x128xf32> to vector<8x32xf32>
      %156 = arith.negf %155 : vector<8x32xf32>
      %157 = math.exp %156 : vector<8x32xf32>
      %cst_54 = arith.constant 1.000000e+00 : f32
      %158 = vector.broadcast %cst_54 : f32 to vector<8x32xf32>
      %159 = arith.addf %158, %157 : vector<8x32xf32>
      %160 = arith.divf %158, %159 : vector<8x32xf32>
      %161 = vector.extract_strided_slice %154 {offsets = [0, 32], sizes = [8, 32], strides = [1, 1]} : vector<8x128xf32> to vector<8x32xf32>
      %162 = arith.negf %161 : vector<8x32xf32>
      %163 = math.exp %162 : vector<8x32xf32>
      %cst_55 = arith.constant 1.000000e+00 : f32
      %164 = vector.broadcast %cst_55 : f32 to vector<8x32xf32>
      %165 = arith.addf %164, %163 : vector<8x32xf32>
      %166 = arith.divf %164, %165 : vector<8x32xf32>
      %167 = vector.extract_strided_slice %154 {offsets = [0, 64], sizes = [8, 32], strides = [1, 1]} : vector<8x128xf32> to vector<8x32xf32>
      %168 = math.tanh %167 : vector<8x32xf32>
      %169 = vector.extract_strided_slice %154 {offsets = [0, 96], sizes = [8, 32], strides = [1, 1]} : vector<8x128xf32> to vector<8x32xf32>
      %170 = arith.negf %169 : vector<8x32xf32>
      %171 = math.exp %170 : vector<8x32xf32>
      %cst_56 = arith.constant 1.000000e+00 : f32
      %172 = vector.broadcast %cst_56 : f32 to vector<8x32xf32>
      %173 = arith.addf %172, %171 : vector<8x32xf32>
      %174 = arith.divf %172, %173 : vector<8x32xf32>
      %175 = arith.mulf %160, %145 : vector<8x32xf32>
      %176 = arith.mulf %166, %168 : vector<8x32xf32>
      %177 = arith.addf %175, %176 : vector<8x32xf32>
      %178 = math.tanh %177 : vector<8x32xf32>
      %179 = arith.mulf %174, %178 : vector<8x32xf32>
      %c0_57 = arith.constant 0 : index
      %c32_58 = arith.constant 32 : index
      %c0_59 = arith.constant 0 : index
      %180 = vector.load %arg5[%c0_57, %c32_58, %c0_59] : memref<1x64x32xf32, #tpu.memory_space<vmem>>, vector<1x8x32xf32>
      %181 = vector.shape_cast %180 : vector<1x8x32xf32> to vector<8x32xf32>
      %182 = vector.shape_cast %179 : vector<8x32xf32> to vector<1x8x32xf32>
      tpu.vector_store %arg5[%c0_57, %c32_58, %c0_59], %182 {strides = array<i32>} : memref<1x64x32xf32, #tpu.memory_space<vmem>>, vector<1x8x32xf32>,
      %c40 = arith.constant 40 : index
      %c0_60 = arith.constant 0 : index
      %183 = vector.load %arg6[%c40, %c0_60] : memref<64x128xf32, #tpu.memory_space<vmem>>, vector<8x128xf32>
      %184 = arith.truncf %179 : vector<8x32xf32> to vector<8x32xbf16>
      %cst_61 = arith.constant dense<0.000000e+00> : vector<8x128xf32>
      %185 = tpu.matmul %184, %14, %cst_61 {dimension_numbers = #tpu.dot_dimension_numbers<[1], [0], [0], [1], [0, 0, 1, 1], [], []>} : vector<8x32xbf16>, vector<32x128xbf16>, vector<8x128xf32> -> vector<8x128xf32>
      %186 = arith.addf %183, %185 : vector<8x128xf32>
      %187 = vector.extract_strided_slice %186 {offsets = [0, 0], sizes = [8, 32], strides = [1, 1]} : vector<8x128xf32> to vector<8x32xf32>
      %188 = arith.negf %187 : vector<8x32xf32>
      %189 = math.exp %188 : vector<8x32xf32>
      %cst_62 = arith.constant 1.000000e+00 : f32
      %190 = vector.broadcast %cst_62 : f32 to vector<8x32xf32>
      %191 = arith.addf %190, %189 : vector<8x32xf32>
      %192 = arith.divf %190, %191 : vector<8x32xf32>
      %193 = vector.extract_strided_slice %186 {offsets = [0, 32], sizes = [8, 32], strides = [1, 1]} : vector<8x128xf32> to vector<8x32xf32>
      %194 = arith.negf %193 : vector<8x32xf32>
      %195 = math.exp %194 : vector<8x32xf32>
      %cst_63 = arith.constant 1.000000e+00 : f32
      %196 = vector.broadcast %cst_63 : f32 to vector<8x32xf32>
      %197 = arith.addf %196, %195 : vector<8x32xf32>
      %198 = arith.divf %196, %197 : vector<8x32xf32>
      %199 = vector.extract_strided_slice %186 {offsets = [0, 64], sizes = [8, 32], strides = [1, 1]} : vector<8x128xf32> to vector<8x32xf32>
      %200 = math.tanh %199 : vector<8x32xf32>
      %201 = vector.extract_strided_slice %186 {offsets = [0, 96], sizes = [8, 32], strides = [1, 1]} : vector<8x128xf32> to vector<8x32xf32>
      %202 = arith.negf %201 : vector<8x32xf32>
      %203 = math.exp %202 : vector<8x32xf32>
      %cst_64 = arith.constant 1.000000e+00 : f32
      %204 = vector.broadcast %cst_64 : f32 to vector<8x32xf32>
      %205 = arith.addf %204, %203 : vector<8x32xf32>
      %206 = arith.divf %204, %205 : vector<8x32xf32>
      %207 = arith.mulf %192, %177 : vector<8x32xf32>
      %208 = arith.mulf %198, %200 : vector<8x32xf32>
      %209 = arith.addf %207, %208 : vector<8x32xf32>
      %210 = math.tanh %209 : vector<8x32xf32>
      %211 = arith.mulf %206, %210 : vector<8x32xf32>
      %c0_65 = arith.constant 0 : index
      %c40_66 = arith.constant 40 : index
      %c0_67 = arith.constant 0 : index
      %212 = vector.load %arg5[%c0_65, %c40_66, %c0_67] : memref<1x64x32xf32, #tpu.memory_space<vmem>>, vector<1x8x32xf32>
      %213 = vector.shape_cast %212 : vector<1x8x32xf32> to vector<8x32xf32>
      %214 = vector.shape_cast %211 : vector<8x32xf32> to vector<1x8x32xf32>
      tpu.vector_store %arg5[%c0_65, %c40_66, %c0_67], %214 {strides = array<i32>} : memref<1x64x32xf32, #tpu.memory_space<vmem>>, vector<1x8x32xf32>,
      %c48 = arith.constant 48 : index
      %c0_68 = arith.constant 0 : index
      %215 = vector.load %arg6[%c48, %c0_68] : memref<64x128xf32, #tpu.memory_space<vmem>>, vector<8x128xf32>
      %216 = arith.truncf %211 : vector<8x32xf32> to vector<8x32xbf16>
      %cst_69 = arith.constant dense<0.000000e+00> : vector<8x128xf32>
      %217 = tpu.matmul %216, %14, %cst_69 {dimension_numbers = #tpu.dot_dimension_numbers<[1], [0], [0], [1], [0, 0, 1, 1], [], []>} : vector<8x32xbf16>, vector<32x128xbf16>, vector<8x128xf32> -> vector<8x128xf32>
      %218 = arith.addf %215, %217 : vector<8x128xf32>
      %219 = vector.extract_strided_slice %218 {offsets = [0, 0], sizes = [8, 32], strides = [1, 1]} : vector<8x128xf32> to vector<8x32xf32>
      %220 = arith.negf %219 : vector<8x32xf32>
      %221 = math.exp %220 : vector<8x32xf32>
      %cst_70 = arith.constant 1.000000e+00 : f32
      %222 = vector.broadcast %cst_70 : f32 to vector<8x32xf32>
      %223 = arith.addf %222, %221 : vector<8x32xf32>
      %224 = arith.divf %222, %223 : vector<8x32xf32>
      %225 = vector.extract_strided_slice %218 {offsets = [0, 32], sizes = [8, 32], strides = [1, 1]} : vector<8x128xf32> to vector<8x32xf32>
      %226 = arith.negf %225 : vector<8x32xf32>
      %227 = math.exp %226 : vector<8x32xf32>
      %cst_71 = arith.constant 1.000000e+00 : f32
      %228 = vector.broadcast %cst_71 : f32 to vector<8x32xf32>
      %229 = arith.addf %228, %227 : vector<8x32xf32>
      %230 = arith.divf %228, %229 : vector<8x32xf32>
      %231 = vector.extract_strided_slice %218 {offsets = [0, 64], sizes = [8, 32], strides = [1, 1]} : vector<8x128xf32> to vector<8x32xf32>
      %232 = math.tanh %231 : vector<8x32xf32>
      %233 = vector.extract_strided_slice %218 {offsets = [0, 96], sizes = [8, 32], strides = [1, 1]} : vector<8x128xf32> to vector<8x32xf32>
      %234 = arith.negf %233 : vector<8x32xf32>
      %235 = math.exp %234 : vector<8x32xf32>
      %cst_72 = arith.constant 1.000000e+00 : f32
      %236 = vector.broadcast %cst_72 : f32 to vector<8x32xf32>
      %237 = arith.addf %236, %235 : vector<8x32xf32>
      %238 = arith.divf %236, %237 : vector<8x32xf32>
      %239 = arith.mulf %224, %209 : vector<8x32xf32>
      %240 = arith.mulf %230, %232 : vector<8x32xf32>
      %241 = arith.addf %239, %240 : vector<8x32xf32>
      %242 = math.tanh %241 : vector<8x32xf32>
      %243 = arith.mulf %238, %242 : vector<8x32xf32>
      %c0_73 = arith.constant 0 : index
      %c48_74 = arith.constant 48 : index
      %c0_75 = arith.constant 0 : index
      %244 = vector.load %arg5[%c0_73, %c48_74, %c0_75] : memref<1x64x32xf32, #tpu.memory_space<vmem>>, vector<1x8x32xf32>
      %245 = vector.shape_cast %244 : vector<1x8x32xf32> to vector<8x32xf32>
      %246 = vector.shape_cast %243 : vector<8x32xf32> to vector<1x8x32xf32>
      tpu.vector_store %arg5[%c0_73, %c48_74, %c0_75], %246 {strides = array<i32>} : memref<1x64x32xf32, #tpu.memory_space<vmem>>, vector<1x8x32xf32>,
      %c56 = arith.constant 56 : index
      %c0_76 = arith.constant 0 : index
      %247 = vector.load %arg6[%c56, %c0_76] : memref<64x128xf32, #tpu.memory_space<vmem>>, vector<8x128xf32>
      %248 = arith.truncf %243 : vector<8x32xf32> to vector<8x32xbf16>
      %cst_77 = arith.constant dense<0.000000e+00> : vector<8x128xf32>
      %249 = tpu.matmul %248, %14, %cst_77 {dimension_numbers = #tpu.dot_dimension_numbers<[1], [0], [0], [1], [0, 0, 1, 1], [], []>} : vector<8x32xbf16>, vector<32x128xbf16>, vector<8x128xf32> -> vector<8x128xf32>
      %250 = arith.addf %247, %249 : vector<8x128xf32>
      %251 = vector.extract_strided_slice %250 {offsets = [0, 0], sizes = [8, 32], strides = [1, 1]} : vector<8x128xf32> to vector<8x32xf32>
      %252 = arith.negf %251 : vector<8x32xf32>
      %253 = math.exp %252 : vector<8x32xf32>
      %cst_78 = arith.constant 1.000000e+00 : f32
      %254 = vector.broadcast %cst_78 : f32 to vector<8x32xf32>
      %255 = arith.addf %254, %253 : vector<8x32xf32>
      %256 = arith.divf %254, %255 : vector<8x32xf32>
      %257 = vector.extract_strided_slice %250 {offsets = [0, 32], sizes = [8, 32], strides = [1, 1]} : vector<8x128xf32> to vector<8x32xf32>
      %258 = arith.negf %257 : vector<8x32xf32>
      %259 = math.exp %258 : vector<8x32xf32>
      %cst_79 = arith.constant 1.000000e+00 : f32
      %260 = vector.broadcast %cst_79 : f32 to vector<8x32xf32>
      %261 = arith.addf %260, %259 : vector<8x32xf32>
      %262 = arith.divf %260, %261 : vector<8x32xf32>
      %263 = vector.extract_strided_slice %250 {offsets = [0, 64], sizes = [8, 32], strides = [1, 1]} : vector<8x128xf32> to vector<8x32xf32>
      %264 = math.tanh %263 : vector<8x32xf32>
      %265 = vector.extract_strided_slice %250 {offsets = [0, 96], sizes = [8, 32], strides = [1, 1]} : vector<8x128xf32> to vector<8x32xf32>
      %266 = arith.negf %265 : vector<8x32xf32>
      %267 = math.exp %266 : vector<8x32xf32>
      %cst_80 = arith.constant 1.000000e+00 : f32
      %268 = vector.broadcast %cst_80 : f32 to vector<8x32xf32>
      %269 = arith.addf %268, %267 : vector<8x32xf32>
      %270 = arith.divf %268, %269 : vector<8x32xf32>
      %271 = arith.mulf %256, %241 : vector<8x32xf32>
      %272 = arith.mulf %262, %264 : vector<8x32xf32>
      %273 = arith.addf %271, %272 : vector<8x32xf32>
      %274 = math.tanh %273 : vector<8x32xf32>
      %275 = arith.mulf %270, %274 : vector<8x32xf32>
      %c0_81 = arith.constant 0 : index
      %c56_82 = arith.constant 56 : index
      %c0_83 = arith.constant 0 : index
      %276 = vector.load %arg5[%c0_81, %c56_82, %c0_83] : memref<1x64x32xf32, #tpu.memory_space<vmem>>, vector<1x8x32xf32>
      %277 = vector.shape_cast %276 : vector<1x8x32xf32> to vector<8x32xf32>
      %278 = vector.shape_cast %275 : vector<8x32xf32> to vector<1x8x32xf32>
      tpu.vector_store %arg5[%c0_81, %c56_82, %c0_83], %278 {strides = array<i32>} : memref<1x64x32xf32, #tpu.memory_space<vmem>>, vector<1x8x32xf32>,
    } else {
    }
    %c1_i32 = arith.constant 1 : i32
    %18 = arith.cmpi eq, %arg0, %c1_i32 : i32
    %19 = arith.extui %18 : i1 to i32
    %c0_i32_16 = arith.constant 0 : i32
    %20 = arith.cmpi ne, %19, %c0_i32_16 : i32
    scf.if %20 {
      %cst_17 = arith.constant 0.000000e+00 : f32
      %21 = vector.broadcast %cst_17 : f32 to vector<8x32xf32>
      %cst_18 = arith.constant 0.000000e+00 : f32
      %22 = vector.broadcast %cst_18 : f32 to vector<8x32xf32>
      %c56 = arith.constant 56 : index
      %c0_19 = arith.constant 0 : index
      %23 = vector.load %arg6[%c56, %c0_19] : memref<64x128xf32, #tpu.memory_space<vmem>>, vector<8x128xf32>
      %24 = arith.truncf %21 : vector<8x32xf32> to vector<8x32xbf16>
      %cst_20 = arith.constant dense<0.000000e+00> : vector<8x128xf32>
      %25 = tpu.matmul %24, %14, %cst_20 {dimension_numbers = #tpu.dot_dimension_numbers<[1], [0], [0], [1], [0, 0, 1, 1], [], []>} : vector<8x32xbf16>, vector<32x128xbf16>, vector<8x128xf32> -> vector<8x128xf32>
      %26 = arith.addf %23, %25 : vector<8x128xf32>
      %27 = vector.extract_strided_slice %26 {offsets = [0, 0], sizes = [8, 32], strides = [1, 1]} : vector<8x128xf32> to vector<8x32xf32>
      %28 = arith.negf %27 : vector<8x32xf32>
      %29 = math.exp %28 : vector<8x32xf32>
      %cst_21 = arith.constant 1.000000e+00 : f32
      %30 = vector.broadcast %cst_21 : f32 to vector<8x32xf32>
      %31 = arith.addf %30, %29 : vector<8x32xf32>
      %32 = arith.divf %30, %31 : vector<8x32xf32>
      %33 = vector.extract_strided_slice %26 {offsets = [0, 32], sizes = [8, 32], strides = [1, 1]} : vector<8x128xf32> to vector<8x32xf32>
      %34 = arith.negf %33 : vector<8x32xf32>
      %35 = math.exp %34 : vector<8x32xf32>
      %cst_22 = arith.constant 1.000000e+00 : f32
      %36 = vector.broadcast %cst_22 : f32 to vector<8x32xf32>
      %37 = arith.addf %36, %35 : vector<8x32xf32>
      %38 = arith.divf %36, %37 : vector<8x32xf32>
      %39 = vector.extract_strided_slice %26 {offsets = [0, 64], sizes = [8, 32], strides = [1, 1]} : vector<8x128xf32> to vector<8x32xf32>
      %40 = math.tanh %39 : vector<8x32xf32>
      %41 = vector.extract_strided_slice %26 {offsets = [0, 96], sizes = [8, 32], strides = [1, 1]} : vector<8x128xf32> to vector<8x32xf32>
      %42 = arith.negf %41 : vector<8x32xf32>
      %43 = math.exp %42 : vector<8x32xf32>
      %cst_23 = arith.constant 1.000000e+00 : f32
      %44 = vector.broadcast %cst_23 : f32 to vector<8x32xf32>
      %45 = arith.addf %44, %43 : vector<8x32xf32>
      %46 = arith.divf %44, %45 : vector<8x32xf32>
      %47 = arith.mulf %32, %22 : vector<8x32xf32>
      %48 = arith.mulf %38, %40 : vector<8x32xf32>
      %49 = arith.addf %47, %48 : vector<8x32xf32>
      %50 = math.tanh %49 : vector<8x32xf32>
      %51 = arith.mulf %46, %50 : vector<8x32xf32>
      %c0_24 = arith.constant 0 : index
      %c56_25 = arith.constant 56 : index
      %c0_26 = arith.constant 0 : index
      %52 = vector.load %arg5[%c0_24, %c56_25, %c0_26] : memref<1x64x32xf32, #tpu.memory_space<vmem>>, vector<1x8x32xf32>
      %53 = vector.shape_cast %52 : vector<1x8x32xf32> to vector<8x32xf32>
      %54 = vector.shape_cast %51 : vector<8x32xf32> to vector<1x8x32xf32>
      tpu.vector_store %arg5[%c0_24, %c56_25, %c0_26], %54 {strides = array<i32>} : memref<1x64x32xf32, #tpu.memory_space<vmem>>, vector<1x8x32xf32>,
      %c48 = arith.constant 48 : index
      %c0_27 = arith.constant 0 : index
      %55 = vector.load %arg6[%c48, %c0_27] : memref<64x128xf32, #tpu.memory_space<vmem>>, vector<8x128xf32>
      %56 = arith.truncf %51 : vector<8x32xf32> to vector<8x32xbf16>
      %cst_28 = arith.constant dense<0.000000e+00> : vector<8x128xf32>
      %57 = tpu.matmul %56, %14, %cst_28 {dimension_numbers = #tpu.dot_dimension_numbers<[1], [0], [0], [1], [0, 0, 1, 1], [], []>} : vector<8x32xbf16>, vector<32x128xbf16>, vector<8x128xf32> -> vector<8x128xf32>
      %58 = arith.addf %55, %57 : vector<8x128xf32>
      %59 = vector.extract_strided_slice %58 {offsets = [0, 0], sizes = [8, 32], strides = [1, 1]} : vector<8x128xf32> to vector<8x32xf32>
      %60 = arith.negf %59 : vector<8x32xf32>
      %61 = math.exp %60 : vector<8x32xf32>
      %cst_29 = arith.constant 1.000000e+00 : f32
      %62 = vector.broadcast %cst_29 : f32 to vector<8x32xf32>
      %63 = arith.addf %62, %61 : vector<8x32xf32>
      %64 = arith.divf %62, %63 : vector<8x32xf32>
      %65 = vector.extract_strided_slice %58 {offsets = [0, 32], sizes = [8, 32], strides = [1, 1]} : vector<8x128xf32> to vector<8x32xf32>
      %66 = arith.negf %65 : vector<8x32xf32>
      %67 = math.exp %66 : vector<8x32xf32>
      %cst_30 = arith.constant 1.000000e+00 : f32
      %68 = vector.broadcast %cst_30 : f32 to vector<8x32xf32>
      %69 = arith.addf %68, %67 : vector<8x32xf32>
      %70 = arith.divf %68, %69 : vector<8x32xf32>
      %71 = vector.extract_strided_slice %58 {offsets = [0, 64], sizes = [8, 32], strides = [1, 1]} : vector<8x128xf32> to vector<8x32xf32>
      %72 = math.tanh %71 : vector<8x32xf32>
      %73 = vector.extract_strided_slice %58 {offsets = [0, 96], sizes = [8, 32], strides = [1, 1]} : vector<8x128xf32> to vector<8x32xf32>
      %74 = arith.negf %73 : vector<8x32xf32>
      %75 = math.exp %74 : vector<8x32xf32>
      %cst_31 = arith.constant 1.000000e+00 : f32
      %76 = vector.broadcast %cst_31 : f32 to vector<8x32xf32>
      %77 = arith.addf %76, %75 : vector<8x32xf32>
      %78 = arith.divf %76, %77 : vector<8x32xf32>
      %79 = arith.mulf %64, %49 : vector<8x32xf32>
      %80 = arith.mulf %70, %72 : vector<8x32xf32>
      %81 = arith.addf %79, %80 : vector<8x32xf32>
      %82 = math.tanh %81 : vector<8x32xf32>
      %83 = arith.mulf %78, %82 : vector<8x32xf32>
      %c0_32 = arith.constant 0 : index
      %c48_33 = arith.constant 48 : index
      %c0_34 = arith.constant 0 : index
      %84 = vector.load %arg5[%c0_32, %c48_33, %c0_34] : memref<1x64x32xf32, #tpu.memory_space<vmem>>, vector<1x8x32xf32>
      %85 = vector.shape_cast %84 : vector<1x8x32xf32> to vector<8x32xf32>
      %86 = vector.shape_cast %83 : vector<8x32xf32> to vector<1x8x32xf32>
      tpu.vector_store %arg5[%c0_32, %c48_33, %c0_34], %86 {strides = array<i32>} : memref<1x64x32xf32, #tpu.memory_space<vmem>>, vector<1x8x32xf32>,
      %c40 = arith.constant 40 : index
      %c0_35 = arith.constant 0 : index
      %87 = vector.load %arg6[%c40, %c0_35] : memref<64x128xf32, #tpu.memory_space<vmem>>, vector<8x128xf32>
      %88 = arith.truncf %83 : vector<8x32xf32> to vector<8x32xbf16>
      %cst_36 = arith.constant dense<0.000000e+00> : vector<8x128xf32>
      %89 = tpu.matmul %88, %14, %cst_36 {dimension_numbers = #tpu.dot_dimension_numbers<[1], [0], [0], [1], [0, 0, 1, 1], [], []>} : vector<8x32xbf16>, vector<32x128xbf16>, vector<8x128xf32> -> vector<8x128xf32>
      %90 = arith.addf %87, %89 : vector<8x128xf32>
      %91 = vector.extract_strided_slice %90 {offsets = [0, 0], sizes = [8, 32], strides = [1, 1]} : vector<8x128xf32> to vector<8x32xf32>
      %92 = arith.negf %91 : vector<8x32xf32>
      %93 = math.exp %92 : vector<8x32xf32>
      %cst_37 = arith.constant 1.000000e+00 : f32
      %94 = vector.broadcast %cst_37 : f32 to vector<8x32xf32>
      %95 = arith.addf %94, %93 : vector<8x32xf32>
      %96 = arith.divf %94, %95 : vector<8x32xf32>
      %97 = vector.extract_strided_slice %90 {offsets = [0, 32], sizes = [8, 32], strides = [1, 1]} : vector<8x128xf32> to vector<8x32xf32>
      %98 = arith.negf %97 : vector<8x32xf32>
      %99 = math.exp %98 : vector<8x32xf32>
      %cst_38 = arith.constant 1.000000e+00 : f32
      %100 = vector.broadcast %cst_38 : f32 to vector<8x32xf32>
      %101 = arith.addf %100, %99 : vector<8x32xf32>
      %102 = arith.divf %100, %101 : vector<8x32xf32>
      %103 = vector.extract_strided_slice %90 {offsets = [0, 64], sizes = [8, 32], strides = [1, 1]} : vector<8x128xf32> to vector<8x32xf32>
      %104 = math.tanh %103 : vector<8x32xf32>
      %105 = vector.extract_strided_slice %90 {offsets = [0, 96], sizes = [8, 32], strides = [1, 1]} : vector<8x128xf32> to vector<8x32xf32>
      %106 = arith.negf %105 : vector<8x32xf32>
      %107 = math.exp %106 : vector<8x32xf32>
      %cst_39 = arith.constant 1.000000e+00 : f32
      %108 = vector.broadcast %cst_39 : f32 to vector<8x32xf32>
      %109 = arith.addf %108, %107 : vector<8x32xf32>
      %110 = arith.divf %108, %109 : vector<8x32xf32>
      %111 = arith.mulf %96, %81 : vector<8x32xf32>
      %112 = arith.mulf %102, %104 : vector<8x32xf32>
      %113 = arith.addf %111, %112 : vector<8x32xf32>
      %114 = math.tanh %113 : vector<8x32xf32>
      %115 = arith.mulf %110, %114 : vector<8x32xf32>
      %c0_40 = arith.constant 0 : index
      %c40_41 = arith.constant 40 : index
      %c0_42 = arith.constant 0 : index
      %116 = vector.load %arg5[%c0_40, %c40_41, %c0_42] : memref<1x64x32xf32, #tpu.memory_space<vmem>>, vector<1x8x32xf32>
      %117 = vector.shape_cast %116 : vector<1x8x32xf32> to vector<8x32xf32>
      %118 = vector.shape_cast %115 : vector<8x32xf32> to vector<1x8x32xf32>
      tpu.vector_store %arg5[%c0_40, %c40_41, %c0_42], %118 {strides = array<i32>} : memref<1x64x32xf32, #tpu.memory_space<vmem>>, vector<1x8x32xf32>,
      %c32 = arith.constant 32 : index
      %c0_43 = arith.constant 0 : index
      %119 = vector.load %arg6[%c32, %c0_43] : memref<64x128xf32, #tpu.memory_space<vmem>>, vector<8x128xf32>
      %120 = arith.truncf %115 : vector<8x32xf32> to vector<8x32xbf16>
      %cst_44 = arith.constant dense<0.000000e+00> : vector<8x128xf32>
      %121 = tpu.matmul %120, %14, %cst_44 {dimension_numbers = #tpu.dot_dimension_numbers<[1], [0], [0], [1], [0, 0, 1, 1], [], []>} : vector<8x32xbf16>, vector<32x128xbf16>, vector<8x128xf32> -> vector<8x128xf32>
      %122 = arith.addf %119, %121 : vector<8x128xf32>
      %123 = vector.extract_strided_slice %122 {offsets = [0, 0], sizes = [8, 32], strides = [1, 1]} : vector<8x128xf32> to vector<8x32xf32>
      %124 = arith.negf %123 : vector<8x32xf32>
      %125 = math.exp %124 : vector<8x32xf32>
      %cst_45 = arith.constant 1.000000e+00 : f32
      %126 = vector.broadcast %cst_45 : f32 to vector<8x32xf32>
      %127 = arith.addf %126, %125 : vector<8x32xf32>
      %128 = arith.divf %126, %127 : vector<8x32xf32>
      %129 = vector.extract_strided_slice %122 {offsets = [0, 32], sizes = [8, 32], strides = [1, 1]} : vector<8x128xf32> to vector<8x32xf32>
      %130 = arith.negf %129 : vector<8x32xf32>
      %131 = math.exp %130 : vector<8x32xf32>
      %cst_46 = arith.constant 1.000000e+00 : f32
      %132 = vector.broadcast %cst_46 : f32 to vector<8x32xf32>
      %133 = arith.addf %132, %131 : vector<8x32xf32>
      %134 = arith.divf %132, %133 : vector<8x32xf32>
      %135 = vector.extract_strided_slice %122 {offsets = [0, 64], sizes = [8, 32], strides = [1, 1]} : vector<8x128xf32> to vector<8x32xf32>
      %136 = math.tanh %135 : vector<8x32xf32>
      %137 = vector.extract_strided_slice %122 {offsets = [0, 96], sizes = [8, 32], strides = [1, 1]} : vector<8x128xf32> to vector<8x32xf32>
      %138 = arith.negf %137 : vector<8x32xf32>
      %139 = math.exp %138 : vector<8x32xf32>
      %cst_47 = arith.constant 1.000000e+00 : f32
      %140 = vector.broadcast %cst_47 : f32 to vector<8x32xf32>
      %141 = arith.addf %140, %139 : vector<8x32xf32>
      %142 = arith.divf %140, %141 : vector<8x32xf32>
      %143 = arith.mulf %128, %113 : vector<8x32xf32>
      %144 = arith.mulf %134, %136 : vector<8x32xf32>
      %145 = arith.addf %143, %144 : vector<8x32xf32>
      %146 = math.tanh %145 : vector<8x32xf32>
      %147 = arith.mulf %142, %146 : vector<8x32xf32>
      %c0_48 = arith.constant 0 : index
      %c32_49 = arith.constant 32 : index
      %c0_50 = arith.constant 0 : index
      %148 = vector.load %arg5[%c0_48, %c32_49, %c0_50] : memref<1x64x32xf32, #tpu.memory_space<vmem>>, vector<1x8x32xf32>
      %149 = vector.shape_cast %148 : vector<1x8x32xf32> to vector<8x32xf32>
      %150 = vector.shape_cast %147 : vector<8x32xf32> to vector<1x8x32xf32>
      tpu.vector_store %arg5[%c0_48, %c32_49, %c0_50], %150 {strides = array<i32>} : memref<1x64x32xf32, #tpu.memory_space<vmem>>, vector<1x8x32xf32>,
      %c24 = arith.constant 24 : index
      %c0_51 = arith.constant 0 : index
      %151 = vector.load %arg6[%c24, %c0_51] : memref<64x128xf32, #tpu.memory_space<vmem>>, vector<8x128xf32>
      %152 = arith.truncf %147 : vector<8x32xf32> to vector<8x32xbf16>
      %cst_52 = arith.constant dense<0.000000e+00> : vector<8x128xf32>
      %153 = tpu.matmul %152, %14, %cst_52 {dimension_numbers = #tpu.dot_dimension_numbers<[1], [0], [0], [1], [0, 0, 1, 1], [], []>} : vector<8x32xbf16>, vector<32x128xbf16>, vector<8x128xf32> -> vector<8x128xf32>
      %154 = arith.addf %151, %153 : vector<8x128xf32>
      %155 = vector.extract_strided_slice %154 {offsets = [0, 0], sizes = [8, 32], strides = [1, 1]} : vector<8x128xf32> to vector<8x32xf32>
      %156 = arith.negf %155 : vector<8x32xf32>
      %157 = math.exp %156 : vector<8x32xf32>
      %cst_53 = arith.constant 1.000000e+00 : f32
      %158 = vector.broadcast %cst_53 : f32 to vector<8x32xf32>
      %159 = arith.addf %158, %157 : vector<8x32xf32>
      %160 = arith.divf %158, %159 : vector<8x32xf32>
      %161 = vector.extract_strided_slice %154 {offsets = [0, 32], sizes = [8, 32], strides = [1, 1]} : vector<8x128xf32> to vector<8x32xf32>
      %162 = arith.negf %161 : vector<8x32xf32>
      %163 = math.exp %162 : vector<8x32xf32>
      %cst_54 = arith.constant 1.000000e+00 : f32
      %164 = vector.broadcast %cst_54 : f32 to vector<8x32xf32>
      %165 = arith.addf %164, %163 : vector<8x32xf32>
      %166 = arith.divf %164, %165 : vector<8x32xf32>
      %167 = vector.extract_strided_slice %154 {offsets = [0, 64], sizes = [8, 32], strides = [1, 1]} : vector<8x128xf32> to vector<8x32xf32>
      %168 = math.tanh %167 : vector<8x32xf32>
      %169 = vector.extract_strided_slice %154 {offsets = [0, 96], sizes = [8, 32], strides = [1, 1]} : vector<8x128xf32> to vector<8x32xf32>
      %170 = arith.negf %169 : vector<8x32xf32>
      %171 = math.exp %170 : vector<8x32xf32>
      %cst_55 = arith.constant 1.000000e+00 : f32
      %172 = vector.broadcast %cst_55 : f32 to vector<8x32xf32>
      %173 = arith.addf %172, %171 : vector<8x32xf32>
      %174 = arith.divf %172, %173 : vector<8x32xf32>
      %175 = arith.mulf %160, %145 : vector<8x32xf32>
      %176 = arith.mulf %166, %168 : vector<8x32xf32>
      %177 = arith.addf %175, %176 : vector<8x32xf32>
      %178 = math.tanh %177 : vector<8x32xf32>
      %179 = arith.mulf %174, %178 : vector<8x32xf32>
      %c0_56 = arith.constant 0 : index
      %c24_57 = arith.constant 24 : index
      %c0_58 = arith.constant 0 : index
      %180 = vector.load %arg5[%c0_56, %c24_57, %c0_58] : memref<1x64x32xf32, #tpu.memory_space<vmem>>, vector<1x8x32xf32>
      %181 = vector.shape_cast %180 : vector<1x8x32xf32> to vector<8x32xf32>
      %182 = vector.shape_cast %179 : vector<8x32xf32> to vector<1x8x32xf32>
      tpu.vector_store %arg5[%c0_56, %c24_57, %c0_58], %182 {strides = array<i32>} : memref<1x64x32xf32, #tpu.memory_space<vmem>>, vector<1x8x32xf32>,
      %c16 = arith.constant 16 : index
      %c0_59 = arith.constant 0 : index
      %183 = vector.load %arg6[%c16, %c0_59] : memref<64x128xf32, #tpu.memory_space<vmem>>, vector<8x128xf32>
      %184 = arith.truncf %179 : vector<8x32xf32> to vector<8x32xbf16>
      %cst_60 = arith.constant dense<0.000000e+00> : vector<8x128xf32>
      %185 = tpu.matmul %184, %14, %cst_60 {dimension_numbers = #tpu.dot_dimension_numbers<[1], [0], [0], [1], [0, 0, 1, 1], [], []>} : vector<8x32xbf16>, vector<32x128xbf16>, vector<8x128xf32> -> vector<8x128xf32>
      %186 = arith.addf %183, %185 : vector<8x128xf32>
      %187 = vector.extract_strided_slice %186 {offsets = [0, 0], sizes = [8, 32], strides = [1, 1]} : vector<8x128xf32> to vector<8x32xf32>
      %188 = arith.negf %187 : vector<8x32xf32>
      %189 = math.exp %188 : vector<8x32xf32>
      %cst_61 = arith.constant 1.000000e+00 : f32
      %190 = vector.broadcast %cst_61 : f32 to vector<8x32xf32>
      %191 = arith.addf %190, %189 : vector<8x32xf32>
      %192 = arith.divf %190, %191 : vector<8x32xf32>
      %193 = vector.extract_strided_slice %186 {offsets = [0, 32], sizes = [8, 32], strides = [1, 1]} : vector<8x128xf32> to vector<8x32xf32>
      %194 = arith.negf %193 : vector<8x32xf32>
      %195 = math.exp %194 : vector<8x32xf32>
      %cst_62 = arith.constant 1.000000e+00 : f32
      %196 = vector.broadcast %cst_62 : f32 to vector<8x32xf32>
      %197 = arith.addf %196, %195 : vector<8x32xf32>
      %198 = arith.divf %196, %197 : vector<8x32xf32>
      %199 = vector.extract_strided_slice %186 {offsets = [0, 64], sizes = [8, 32], strides = [1, 1]} : vector<8x128xf32> to vector<8x32xf32>
      %200 = math.tanh %199 : vector<8x32xf32>
      %201 = vector.extract_strided_slice %186 {offsets = [0, 96], sizes = [8, 32], strides = [1, 1]} : vector<8x128xf32> to vector<8x32xf32>
      %202 = arith.negf %201 : vector<8x32xf32>
      %203 = math.exp %202 : vector<8x32xf32>
      %cst_63 = arith.constant 1.000000e+00 : f32
      %204 = vector.broadcast %cst_63 : f32 to vector<8x32xf32>
      %205 = arith.addf %204, %203 : vector<8x32xf32>
      %206 = arith.divf %204, %205 : vector<8x32xf32>
      %207 = arith.mulf %192, %177 : vector<8x32xf32>
      %208 = arith.mulf %198, %200 : vector<8x32xf32>
      %209 = arith.addf %207, %208 : vector<8x32xf32>
      %210 = math.tanh %209 : vector<8x32xf32>
      %211 = arith.mulf %206, %210 : vector<8x32xf32>
      %c0_64 = arith.constant 0 : index
      %c16_65 = arith.constant 16 : index
      %c0_66 = arith.constant 0 : index
      %212 = vector.load %arg5[%c0_64, %c16_65, %c0_66] : memref<1x64x32xf32, #tpu.memory_space<vmem>>, vector<1x8x32xf32>
      %213 = vector.shape_cast %212 : vector<1x8x32xf32> to vector<8x32xf32>
      %214 = vector.shape_cast %211 : vector<8x32xf32> to vector<1x8x32xf32>
      tpu.vector_store %arg5[%c0_64, %c16_65, %c0_66], %214 {strides = array<i32>} : memref<1x64x32xf32, #tpu.memory_space<vmem>>, vector<1x8x32xf32>,
      %c8 = arith.constant 8 : index
      %c0_67 = arith.constant 0 : index
      %215 = vector.load %arg6[%c8, %c0_67] : memref<64x128xf32, #tpu.memory_space<vmem>>, vector<8x128xf32>
      %216 = arith.truncf %211 : vector<8x32xf32> to vector<8x32xbf16>
      %cst_68 = arith.constant dense<0.000000e+00> : vector<8x128xf32>
      %217 = tpu.matmul %216, %14, %cst_68 {dimension_numbers = #tpu.dot_dimension_numbers<[1], [0], [0], [1], [0, 0, 1, 1], [], []>} : vector<8x32xbf16>, vector<32x128xbf16>, vector<8x128xf32> -> vector<8x128xf32>
      %218 = arith.addf %215, %217 : vector<8x128xf32>
      %219 = vector.extract_strided_slice %218 {offsets = [0, 0], sizes = [8, 32], strides = [1, 1]} : vector<8x128xf32> to vector<8x32xf32>
      %220 = arith.negf %219 : vector<8x32xf32>
      %221 = math.exp %220 : vector<8x32xf32>
      %cst_69 = arith.constant 1.000000e+00 : f32
      %222 = vector.broadcast %cst_69 : f32 to vector<8x32xf32>
      %223 = arith.addf %222, %221 : vector<8x32xf32>
      %224 = arith.divf %222, %223 : vector<8x32xf32>
      %225 = vector.extract_strided_slice %218 {offsets = [0, 32], sizes = [8, 32], strides = [1, 1]} : vector<8x128xf32> to vector<8x32xf32>
      %226 = arith.negf %225 : vector<8x32xf32>
      %227 = math.exp %226 : vector<8x32xf32>
      %cst_70 = arith.constant 1.000000e+00 : f32
      %228 = vector.broadcast %cst_70 : f32 to vector<8x32xf32>
      %229 = arith.addf %228, %227 : vector<8x32xf32>
      %230 = arith.divf %228, %229 : vector<8x32xf32>
      %231 = vector.extract_strided_slice %218 {offsets = [0, 64], sizes = [8, 32], strides = [1, 1]} : vector<8x128xf32> to vector<8x32xf32>
      %232 = math.tanh %231 : vector<8x32xf32>
      %233 = vector.extract_strided_slice %218 {offsets = [0, 96], sizes = [8, 32], strides = [1, 1]} : vector<8x128xf32> to vector<8x32xf32>
      %234 = arith.negf %233 : vector<8x32xf32>
      %235 = math.exp %234 : vector<8x32xf32>
      %cst_71 = arith.constant 1.000000e+00 : f32
      %236 = vector.broadcast %cst_71 : f32 to vector<8x32xf32>
      %237 = arith.addf %236, %235 : vector<8x32xf32>
      %238 = arith.divf %236, %237 : vector<8x32xf32>
      %239 = arith.mulf %224, %209 : vector<8x32xf32>
      %240 = arith.mulf %230, %232 : vector<8x32xf32>
      %241 = arith.addf %239, %240 : vector<8x32xf32>
      %242 = math.tanh %241 : vector<8x32xf32>
      %243 = arith.mulf %238, %242 : vector<8x32xf32>
      %c0_72 = arith.constant 0 : index
      %c8_73 = arith.constant 8 : index
      %c0_74 = arith.constant 0 : index
      %244 = vector.load %arg5[%c0_72, %c8_73, %c0_74] : memref<1x64x32xf32, #tpu.memory_space<vmem>>, vector<1x8x32xf32>
      %245 = vector.shape_cast %244 : vector<1x8x32xf32> to vector<8x32xf32>
      %246 = vector.shape_cast %243 : vector<8x32xf32> to vector<1x8x32xf32>
      tpu.vector_store %arg5[%c0_72, %c8_73, %c0_74], %246 {strides = array<i32>} : memref<1x64x32xf32, #tpu.memory_space<vmem>>, vector<1x8x32xf32>,
      %c0_75 = arith.constant 0 : index
      %c0_76 = arith.constant 0 : index
      %247 = vector.load %arg6[%c0_75, %c0_76] : memref<64x128xf32, #tpu.memory_space<vmem>>, vector<8x128xf32>
      %248 = arith.truncf %243 : vector<8x32xf32> to vector<8x32xbf16>
      %cst_77 = arith.constant dense<0.000000e+00> : vector<8x128xf32>
      %249 = tpu.matmul %248, %14, %cst_77 {dimension_numbers = #tpu.dot_dimension_numbers<[1], [0], [0], [1], [0, 0, 1, 1], [], []>} : vector<8x32xbf16>, vector<32x128xbf16>, vector<8x128xf32> -> vector<8x128xf32>
      %250 = arith.addf %247, %249 : vector<8x128xf32>
      %251 = vector.extract_strided_slice %250 {offsets = [0, 0], sizes = [8, 32], strides = [1, 1]} : vector<8x128xf32> to vector<8x32xf32>
      %252 = arith.negf %251 : vector<8x32xf32>
      %253 = math.exp %252 : vector<8x32xf32>
      %cst_78 = arith.constant 1.000000e+00 : f32
      %254 = vector.broadcast %cst_78 : f32 to vector<8x32xf32>
      %255 = arith.addf %254, %253 : vector<8x32xf32>
      %256 = arith.divf %254, %255 : vector<8x32xf32>
      %257 = vector.extract_strided_slice %250 {offsets = [0, 32], sizes = [8, 32], strides = [1, 1]} : vector<8x128xf32> to vector<8x32xf32>
      %258 = arith.negf %257 : vector<8x32xf32>
      %259 = math.exp %258 : vector<8x32xf32>
      %cst_79 = arith.constant 1.000000e+00 : f32
      %260 = vector.broadcast %cst_79 : f32 to vector<8x32xf32>
      %261 = arith.addf %260, %259 : vector<8x32xf32>
      %262 = arith.divf %260, %261 : vector<8x32xf32>
      %263 = vector.extract_strided_slice %250 {offsets = [0, 64], sizes = [8, 32], strides = [1, 1]} : vector<8x128xf32> to vector<8x32xf32>
      %264 = math.tanh %263 : vector<8x32xf32>
      %265 = vector.extract_strided_slice %250 {offsets = [0, 96], sizes = [8, 32], strides = [1, 1]} : vector<8x128xf32> to vector<8x32xf32>
      %266 = arith.negf %265 : vector<8x32xf32>
      %267 = math.exp %266 : vector<8x32xf32>
      %cst_80 = arith.constant 1.000000e+00 : f32
      %268 = vector.broadcast %cst_80 : f32 to vector<8x32xf32>
      %269 = arith.addf %268, %267 : vector<8x32xf32>
      %270 = arith.divf %268, %269 : vector<8x32xf32>
      %271 = arith.mulf %256, %241 : vector<8x32xf32>
      %272 = arith.mulf %262, %264 : vector<8x32xf32>
      %273 = arith.addf %271, %272 : vector<8x32xf32>
      %274 = math.tanh %273 : vector<8x32xf32>
      %275 = arith.mulf %270, %274 : vector<8x32xf32>
      %c0_81 = arith.constant 0 : index
      %c0_82 = arith.constant 0 : index
      %c0_83 = arith.constant 0 : index
      %276 = vector.load %arg5[%c0_81, %c0_82, %c0_83] : memref<1x64x32xf32, #tpu.memory_space<vmem>>, vector<1x8x32xf32>
      %277 = vector.shape_cast %276 : vector<1x8x32xf32> to vector<8x32xf32>
      %278 = vector.shape_cast %275 : vector<8x32xf32> to vector<1x8x32xf32>
      tpu.vector_store %arg5[%c0_81, %c0_82, %c0_83], %278 {strides = array<i32>} : memref<1x64x32xf32, #tpu.memory_space<vmem>>, vector<1x8x32xf32>,
    } else {
    }
    return
  }
  func.func @transform_0(%arg0: i32) -> (i32, i32, i32) {
    %c0_i32 = arith.constant 0 : i32
    %c0_i32_0 = arith.constant 0 : i32
    %c0_i32_1 = arith.constant 0 : i32
    %c0_i32_2 = arith.constant 0 : i32
    return %c0_i32, %c0_i32_0, %c0_i32_1 : i32, i32, i32
  }
  func.func @transform_1(%arg0: i32) -> (i32, i32, i32, i32) {
    %c0_i32 = arith.constant 0 : i32
    %c0_i32_0 = arith.constant 0 : i32
    %c0_i32_1 = arith.constant 0 : i32
    %c0_i32_2 = arith.constant 0 : i32
    return %arg0, %c0_i32, %c0_i32_0, %c0_i32_1 : i32, i32, i32, i32
  }
  func.func @transform_2(%arg0: i32) -> (i32, i32, i32) {
    %c0_i32 = arith.constant 0 : i32
    %c0_i32_0 = arith.constant 0 : i32
    %c0_i32_1 = arith.constant 0 : i32
    return %arg0, %c0_i32, %c0_i32_0 : i32, i32, i32
  }
  func.func @transform_3(%arg0: i32) -> (i32, i32, i32) {
    %c0_i32 = arith.constant 0 : i32
    %c0_i32_0 = arith.constant 0 : i32
    %c0_i32_1 = arith.constant 0 : i32
    return %arg0, %c0_i32, %c0_i32_0 : i32, i32, i32
  }
  func.func @transform_4(%arg0: i32) -> (i32, i32, i32) {
    %c0_i32 = arith.constant 0 : i32
    %c0_i32_0 = arith.constant 0 : i32
    %c0_i32_1 = arith.constant 0 : i32
    return %arg0, %c0_i32, %c0_i32_0 : i32, i32, i32
  }
}

module attributes {stable_mosaic.version = 11 : i64} {
  func.func @_bilstm_layer_kernel(%arg0: i32, %arg1: memref<2x64x32xf32, #tpu.memory_space<vmem>>, %arg2: memref<1x2x32x128xbf16, #tpu.memory_space<vmem>>, %arg3: memref<1x32x128xbf16, #tpu.memory_space<vmem>>, %arg4: memref<1x1x128xf32, #tpu.memory_space<vmem>>, %arg5: memref<1x64x32xf32, #tpu.memory_space<vmem>>, %arg6: memref<64x128xf32, #tpu.memory_space<vmem>>) attributes {dimension_semantics = [#tpu.dimension_semantics<parallel>], iteration_bounds = array<i64: 2>, scalar_prefetch = 0 : i64, scratch_operands = 1 : i64, tpu.core_type = #tpu.core_type<tc>, window_params = [{pipeline_mode = #tpu.pipeline_mode<synchronous>, transform_indices = @transform_0, window_bounds = array<i64: 2, 64, 32>}, {transform_indices = @transform_1, window_bounds = array<i64: 1, 2, 32, 128>}, {transform_indices = @transform_2, window_bounds = array<i64: 1, 32, 128>}, {transform_indices = @transform_3, window_bounds = array<i64: 1, 1, 128>}, {transform_indices = @transform_4, window_bounds = array<i64: 1, 64, 32>}]} {
    %cst = arith.constant 0.000000e+00 : f32
    %0 = vector.broadcast %cst : f32 to vector<64x128xf32>
    %c0 = arith.constant 0 : index
    %c0_0 = arith.constant 0 : index
    %c0_1 = arith.constant 0 : index
    %c0_2 = arith.constant 0 : index
    %1 = vector.load %arg2[%c0, %c0_0, %c0_1, %c0_2] : memref<1x2x32x128xbf16, #tpu.memory_space<vmem>>, vector<1x1x32x128xbf16>
    %2 = vector.shape_cast %1 : vector<1x1x32x128xbf16> to vector<32x128xbf16>
    %c0_3 = arith.constant 0 : index
    %c0_4 = arith.constant 0 : index
    %c0_5 = arith.constant 0 : index
    %3 = vector.load %arg1[%c0_3, %c0_4, %c0_5] : memref<2x64x32xf32, #tpu.memory_space<vmem>>, vector<1x64x32xf32>
    %4 = vector.shape_cast %3 : vector<1x64x32xf32> to vector<64x32xf32>
    %5 = arith.truncf %4 : vector<64x32xf32> to vector<64x32xbf16>
    %cst_6 = arith.constant dense<0.000000e+00> : vector<64x128xf32>
    %6 = tpu.matmul %5, %2, %cst_6 {dimension_numbers = #tpu.dot_dimension_numbers<[1], [0], [0], [1], [0, 0, 1, 1], [], []>} : vector<64x32xbf16>, vector<32x128xbf16>, vector<64x128xf32> -> vector<64x128xf32>
    %7 = arith.addf %0, %6 : vector<64x128xf32>
    %c0_7 = arith.constant 0 : index
    %c1 = arith.constant 1 : index
    %c0_8 = arith.constant 0 : index
    %c0_9 = arith.constant 0 : index
    %8 = vector.load %arg2[%c0_7, %c1, %c0_8, %c0_9] : memref<1x2x32x128xbf16, #tpu.memory_space<vmem>>, vector<1x1x32x128xbf16>
    %9 = vector.shape_cast %8 : vector<1x1x32x128xbf16> to vector<32x128xbf16>
    %c1_10 = arith.constant 1 : index
    %c0_11 = arith.constant 0 : index
    %c0_12 = arith.constant 0 : index
    %10 = vector.load %arg1[%c1_10, %c0_11, %c0_12] : memref<2x64x32xf32, #tpu.memory_space<vmem>>, vector<1x64x32xf32>
    %11 = vector.shape_cast %10 : vector<1x64x32xf32> to vector<64x32xf32>
    %12 = arith.truncf %11 : vector<64x32xf32> to vector<64x32xbf16>
    %cst_13 = arith.constant dense<0.000000e+00> : vector<64x128xf32>
    %13 = tpu.matmul %12, %9, %cst_13 {dimension_numbers = #tpu.dot_dimension_numbers<[1], [0], [0], [1], [0, 0, 1, 1], [], []>} : vector<64x32xbf16>, vector<32x128xbf16>, vector<64x128xf32> -> vector<64x128xf32>
    %14 = arith.addf %7, %13 : vector<64x128xf32>
    %c0_14 = arith.constant 0 : index
    %c0_15 = arith.constant 0 : index
    %c0_16 = arith.constant 0 : index
    %15 = vector.load %arg4[%c0_14, %c0_15, %c0_16] : memref<1x1x128xf32, #tpu.memory_space<vmem>>, vector<1x1x128xf32>
    %16 = vector.shape_cast %15 : vector<1x1x128xf32> to vector<1x128xf32>
    %17 = vector.broadcast %16 : vector<1x128xf32> to vector<64x128xf32>
    %18 = arith.addf %14, %17 : vector<64x128xf32>
    %c0_17 = arith.constant 0 : index
    %c0_18 = arith.constant 0 : index
    %19 = vector.load %arg6[%c0_17, %c0_18] : memref<64x128xf32, #tpu.memory_space<vmem>>, vector<64x128xf32>
    tpu.vector_store %arg6[%c0_17, %c0_18], %18 {strides = array<i32>} : memref<64x128xf32, #tpu.memory_space<vmem>>, vector<64x128xf32>,
    %c0_19 = arith.constant 0 : index
    %c0_20 = arith.constant 0 : index
    %c0_21 = arith.constant 0 : index
    %20 = vector.load %arg3[%c0_19, %c0_20, %c0_21] : memref<1x32x128xbf16, #tpu.memory_space<vmem>>, vector<1x32x128xbf16>
    %21 = vector.shape_cast %20 : vector<1x32x128xbf16> to vector<32x128xbf16>
    %c0_i32 = arith.constant 0 : i32
    %22 = arith.cmpi eq, %arg0, %c0_i32 : i32
    %23 = arith.extui %22 : i1 to i32
    %c0_i32_22 = arith.constant 0 : i32
    %24 = arith.cmpi ne, %23, %c0_i32_22 : i32
    scf.if %24 {
      %cst_24 = arith.constant 0.000000e+00 : f32
      %28 = vector.broadcast %cst_24 : f32 to vector<8x32xf32>
      %cst_25 = arith.constant 0.000000e+00 : f32
      %29 = vector.broadcast %cst_25 : f32 to vector<8x32xf32>
      %c0_26 = arith.constant 0 : index
      %c0_27 = arith.constant 0 : index
      %30 = vector.load %arg6[%c0_26, %c0_27] : memref<64x128xf32, #tpu.memory_space<vmem>>, vector<8x128xf32>
      %31 = arith.truncf %28 : vector<8x32xf32> to vector<8x32xbf16>
      %cst_28 = arith.constant dense<0.000000e+00> : vector<8x128xf32>
      %32 = tpu.matmul %31, %21, %cst_28 {dimension_numbers = #tpu.dot_dimension_numbers<[1], [0], [0], [1], [0, 0, 1, 1], [], []>} : vector<8x32xbf16>, vector<32x128xbf16>, vector<8x128xf32> -> vector<8x128xf32>
      %33 = arith.addf %30, %32 : vector<8x128xf32>
      %34 = vector.extract_strided_slice %33 {offsets = [0, 0], sizes = [8, 32], strides = [1, 1]} : vector<8x128xf32> to vector<8x32xf32>
      %35 = arith.negf %34 : vector<8x32xf32>
      %36 = math.exp %35 : vector<8x32xf32>
      %cst_29 = arith.constant 1.000000e+00 : f32
      %37 = vector.broadcast %cst_29 : f32 to vector<8x32xf32>
      %38 = arith.addf %37, %36 : vector<8x32xf32>
      %39 = arith.divf %37, %38 : vector<8x32xf32>
      %40 = vector.extract_strided_slice %33 {offsets = [0, 32], sizes = [8, 32], strides = [1, 1]} : vector<8x128xf32> to vector<8x32xf32>
      %41 = arith.negf %40 : vector<8x32xf32>
      %42 = math.exp %41 : vector<8x32xf32>
      %cst_30 = arith.constant 1.000000e+00 : f32
      %43 = vector.broadcast %cst_30 : f32 to vector<8x32xf32>
      %44 = arith.addf %43, %42 : vector<8x32xf32>
      %45 = arith.divf %43, %44 : vector<8x32xf32>
      %46 = vector.extract_strided_slice %33 {offsets = [0, 64], sizes = [8, 32], strides = [1, 1]} : vector<8x128xf32> to vector<8x32xf32>
      %47 = math.tanh %46 : vector<8x32xf32>
      %48 = vector.extract_strided_slice %33 {offsets = [0, 96], sizes = [8, 32], strides = [1, 1]} : vector<8x128xf32> to vector<8x32xf32>
      %49 = arith.negf %48 : vector<8x32xf32>
      %50 = math.exp %49 : vector<8x32xf32>
      %cst_31 = arith.constant 1.000000e+00 : f32
      %51 = vector.broadcast %cst_31 : f32 to vector<8x32xf32>
      %52 = arith.addf %51, %50 : vector<8x32xf32>
      %53 = arith.divf %51, %52 : vector<8x32xf32>
      %54 = arith.mulf %39, %29 : vector<8x32xf32>
      %55 = arith.mulf %45, %47 : vector<8x32xf32>
      %56 = arith.addf %54, %55 : vector<8x32xf32>
      %57 = math.tanh %56 : vector<8x32xf32>
      %58 = arith.mulf %53, %57 : vector<8x32xf32>
      %c0_32 = arith.constant 0 : index
      %c0_33 = arith.constant 0 : index
      %c0_34 = arith.constant 0 : index
      %59 = vector.load %arg5[%c0_32, %c0_33, %c0_34] : memref<1x64x32xf32, #tpu.memory_space<vmem>>, vector<1x8x32xf32>
      %60 = vector.shape_cast %59 : vector<1x8x32xf32> to vector<8x32xf32>
      %61 = vector.shape_cast %58 : vector<8x32xf32> to vector<1x8x32xf32>
      tpu.vector_store %arg5[%c0_32, %c0_33, %c0_34], %61 {strides = array<i32>} : memref<1x64x32xf32, #tpu.memory_space<vmem>>, vector<1x8x32xf32>,
      %c8 = arith.constant 8 : index
      %c0_35 = arith.constant 0 : index
      %62 = vector.load %arg6[%c8, %c0_35] : memref<64x128xf32, #tpu.memory_space<vmem>>, vector<8x128xf32>
      %63 = arith.truncf %58 : vector<8x32xf32> to vector<8x32xbf16>
      %cst_36 = arith.constant dense<0.000000e+00> : vector<8x128xf32>
      %64 = tpu.matmul %63, %21, %cst_36 {dimension_numbers = #tpu.dot_dimension_numbers<[1], [0], [0], [1], [0, 0, 1, 1], [], []>} : vector<8x32xbf16>, vector<32x128xbf16>, vector<8x128xf32> -> vector<8x128xf32>
      %65 = arith.addf %62, %64 : vector<8x128xf32>
      %66 = vector.extract_strided_slice %65 {offsets = [0, 0], sizes = [8, 32], strides = [1, 1]} : vector<8x128xf32> to vector<8x32xf32>
      %67 = arith.negf %66 : vector<8x32xf32>
      %68 = math.exp %67 : vector<8x32xf32>
      %cst_37 = arith.constant 1.000000e+00 : f32
      %69 = vector.broadcast %cst_37 : f32 to vector<8x32xf32>
      %70 = arith.addf %69, %68 : vector<8x32xf32>
      %71 = arith.divf %69, %70 : vector<8x32xf32>
      %72 = vector.extract_strided_slice %65 {offsets = [0, 32], sizes = [8, 32], strides = [1, 1]} : vector<8x128xf32> to vector<8x32xf32>
      %73 = arith.negf %72 : vector<8x32xf32>
      %74 = math.exp %73 : vector<8x32xf32>
      %cst_38 = arith.constant 1.000000e+00 : f32
      %75 = vector.broadcast %cst_38 : f32 to vector<8x32xf32>
      %76 = arith.addf %75, %74 : vector<8x32xf32>
      %77 = arith.divf %75, %76 : vector<8x32xf32>
      %78 = vector.extract_strided_slice %65 {offsets = [0, 64], sizes = [8, 32], strides = [1, 1]} : vector<8x128xf32> to vector<8x32xf32>
      %79 = math.tanh %78 : vector<8x32xf32>
      %80 = vector.extract_strided_slice %65 {offsets = [0, 96], sizes = [8, 32], strides = [1, 1]} : vector<8x128xf32> to vector<8x32xf32>
      %81 = arith.negf %80 : vector<8x32xf32>
      %82 = math.exp %81 : vector<8x32xf32>
      %cst_39 = arith.constant 1.000000e+00 : f32
      %83 = vector.broadcast %cst_39 : f32 to vector<8x32xf32>
      %84 = arith.addf %83, %82 : vector<8x32xf32>
      %85 = arith.divf %83, %84 : vector<8x32xf32>
      %86 = arith.mulf %71, %56 : vector<8x32xf32>
      %87 = arith.mulf %77, %79 : vector<8x32xf32>
      %88 = arith.addf %86, %87 : vector<8x32xf32>
      %89 = math.tanh %88 : vector<8x32xf32>
      %90 = arith.mulf %85, %89 : vector<8x32xf32>
      %c0_40 = arith.constant 0 : index
      %c8_41 = arith.constant 8 : index
      %c0_42 = arith.constant 0 : index
      %91 = vector.load %arg5[%c0_40, %c8_41, %c0_42] : memref<1x64x32xf32, #tpu.memory_space<vmem>>, vector<1x8x32xf32>
      %92 = vector.shape_cast %91 : vector<1x8x32xf32> to vector<8x32xf32>
      %93 = vector.shape_cast %90 : vector<8x32xf32> to vector<1x8x32xf32>
      tpu.vector_store %arg5[%c0_40, %c8_41, %c0_42], %93 {strides = array<i32>} : memref<1x64x32xf32, #tpu.memory_space<vmem>>, vector<1x8x32xf32>,
      %c16 = arith.constant 16 : index
      %c0_43 = arith.constant 0 : index
      %94 = vector.load %arg6[%c16, %c0_43] : memref<64x128xf32, #tpu.memory_space<vmem>>, vector<8x128xf32>
      %95 = arith.truncf %90 : vector<8x32xf32> to vector<8x32xbf16>
      %cst_44 = arith.constant dense<0.000000e+00> : vector<8x128xf32>
      %96 = tpu.matmul %95, %21, %cst_44 {dimension_numbers = #tpu.dot_dimension_numbers<[1], [0], [0], [1], [0, 0, 1, 1], [], []>} : vector<8x32xbf16>, vector<32x128xbf16>, vector<8x128xf32> -> vector<8x128xf32>
      %97 = arith.addf %94, %96 : vector<8x128xf32>
      %98 = vector.extract_strided_slice %97 {offsets = [0, 0], sizes = [8, 32], strides = [1, 1]} : vector<8x128xf32> to vector<8x32xf32>
      %99 = arith.negf %98 : vector<8x32xf32>
      %100 = math.exp %99 : vector<8x32xf32>
      %cst_45 = arith.constant 1.000000e+00 : f32
      %101 = vector.broadcast %cst_45 : f32 to vector<8x32xf32>
      %102 = arith.addf %101, %100 : vector<8x32xf32>
      %103 = arith.divf %101, %102 : vector<8x32xf32>
      %104 = vector.extract_strided_slice %97 {offsets = [0, 32], sizes = [8, 32], strides = [1, 1]} : vector<8x128xf32> to vector<8x32xf32>
      %105 = arith.negf %104 : vector<8x32xf32>
      %106 = math.exp %105 : vector<8x32xf32>
      %cst_46 = arith.constant 1.000000e+00 : f32
      %107 = vector.broadcast %cst_46 : f32 to vector<8x32xf32>
      %108 = arith.addf %107, %106 : vector<8x32xf32>
      %109 = arith.divf %107, %108 : vector<8x32xf32>
      %110 = vector.extract_strided_slice %97 {offsets = [0, 64], sizes = [8, 32], strides = [1, 1]} : vector<8x128xf32> to vector<8x32xf32>
      %111 = math.tanh %110 : vector<8x32xf32>
      %112 = vector.extract_strided_slice %97 {offsets = [0, 96], sizes = [8, 32], strides = [1, 1]} : vector<8x128xf32> to vector<8x32xf32>
      %113 = arith.negf %112 : vector<8x32xf32>
      %114 = math.exp %113 : vector<8x32xf32>
      %cst_47 = arith.constant 1.000000e+00 : f32
      %115 = vector.broadcast %cst_47 : f32 to vector<8x32xf32>
      %116 = arith.addf %115, %114 : vector<8x32xf32>
      %117 = arith.divf %115, %116 : vector<8x32xf32>
      %118 = arith.mulf %103, %88 : vector<8x32xf32>
      %119 = arith.mulf %109, %111 : vector<8x32xf32>
      %120 = arith.addf %118, %119 : vector<8x32xf32>
      %121 = math.tanh %120 : vector<8x32xf32>
      %122 = arith.mulf %117, %121 : vector<8x32xf32>
      %c0_48 = arith.constant 0 : index
      %c16_49 = arith.constant 16 : index
      %c0_50 = arith.constant 0 : index
      %123 = vector.load %arg5[%c0_48, %c16_49, %c0_50] : memref<1x64x32xf32, #tpu.memory_space<vmem>>, vector<1x8x32xf32>
      %124 = vector.shape_cast %123 : vector<1x8x32xf32> to vector<8x32xf32>
      %125 = vector.shape_cast %122 : vector<8x32xf32> to vector<1x8x32xf32>
      tpu.vector_store %arg5[%c0_48, %c16_49, %c0_50], %125 {strides = array<i32>} : memref<1x64x32xf32, #tpu.memory_space<vmem>>, vector<1x8x32xf32>,
      %c24 = arith.constant 24 : index
      %c0_51 = arith.constant 0 : index
      %126 = vector.load %arg6[%c24, %c0_51] : memref<64x128xf32, #tpu.memory_space<vmem>>, vector<8x128xf32>
      %127 = arith.truncf %122 : vector<8x32xf32> to vector<8x32xbf16>
      %cst_52 = arith.constant dense<0.000000e+00> : vector<8x128xf32>
      %128 = tpu.matmul %127, %21, %cst_52 {dimension_numbers = #tpu.dot_dimension_numbers<[1], [0], [0], [1], [0, 0, 1, 1], [], []>} : vector<8x32xbf16>, vector<32x128xbf16>, vector<8x128xf32> -> vector<8x128xf32>
      %129 = arith.addf %126, %128 : vector<8x128xf32>
      %130 = vector.extract_strided_slice %129 {offsets = [0, 0], sizes = [8, 32], strides = [1, 1]} : vector<8x128xf32> to vector<8x32xf32>
      %131 = arith.negf %130 : vector<8x32xf32>
      %132 = math.exp %131 : vector<8x32xf32>
      %cst_53 = arith.constant 1.000000e+00 : f32
      %133 = vector.broadcast %cst_53 : f32 to vector<8x32xf32>
      %134 = arith.addf %133, %132 : vector<8x32xf32>
      %135 = arith.divf %133, %134 : vector<8x32xf32>
      %136 = vector.extract_strided_slice %129 {offsets = [0, 32], sizes = [8, 32], strides = [1, 1]} : vector<8x128xf32> to vector<8x32xf32>
      %137 = arith.negf %136 : vector<8x32xf32>
      %138 = math.exp %137 : vector<8x32xf32>
      %cst_54 = arith.constant 1.000000e+00 : f32
      %139 = vector.broadcast %cst_54 : f32 to vector<8x32xf32>
      %140 = arith.addf %139, %138 : vector<8x32xf32>
      %141 = arith.divf %139, %140 : vector<8x32xf32>
      %142 = vector.extract_strided_slice %129 {offsets = [0, 64], sizes = [8, 32], strides = [1, 1]} : vector<8x128xf32> to vector<8x32xf32>
      %143 = math.tanh %142 : vector<8x32xf32>
      %144 = vector.extract_strided_slice %129 {offsets = [0, 96], sizes = [8, 32], strides = [1, 1]} : vector<8x128xf32> to vector<8x32xf32>
      %145 = arith.negf %144 : vector<8x32xf32>
      %146 = math.exp %145 : vector<8x32xf32>
      %cst_55 = arith.constant 1.000000e+00 : f32
      %147 = vector.broadcast %cst_55 : f32 to vector<8x32xf32>
      %148 = arith.addf %147, %146 : vector<8x32xf32>
      %149 = arith.divf %147, %148 : vector<8x32xf32>
      %150 = arith.mulf %135, %120 : vector<8x32xf32>
      %151 = arith.mulf %141, %143 : vector<8x32xf32>
      %152 = arith.addf %150, %151 : vector<8x32xf32>
      %153 = math.tanh %152 : vector<8x32xf32>
      %154 = arith.mulf %149, %153 : vector<8x32xf32>
      %c0_56 = arith.constant 0 : index
      %c24_57 = arith.constant 24 : index
      %c0_58 = arith.constant 0 : index
      %155 = vector.load %arg5[%c0_56, %c24_57, %c0_58] : memref<1x64x32xf32, #tpu.memory_space<vmem>>, vector<1x8x32xf32>
      %156 = vector.shape_cast %155 : vector<1x8x32xf32> to vector<8x32xf32>
      %157 = vector.shape_cast %154 : vector<8x32xf32> to vector<1x8x32xf32>
      tpu.vector_store %arg5[%c0_56, %c24_57, %c0_58], %157 {strides = array<i32>} : memref<1x64x32xf32, #tpu.memory_space<vmem>>, vector<1x8x32xf32>,
      %c32 = arith.constant 32 : index
      %c0_59 = arith.constant 0 : index
      %158 = vector.load %arg6[%c32, %c0_59] : memref<64x128xf32, #tpu.memory_space<vmem>>, vector<8x128xf32>
      %159 = arith.truncf %154 : vector<8x32xf32> to vector<8x32xbf16>
      %cst_60 = arith.constant dense<0.000000e+00> : vector<8x128xf32>
      %160 = tpu.matmul %159, %21, %cst_60 {dimension_numbers = #tpu.dot_dimension_numbers<[1], [0], [0], [1], [0, 0, 1, 1], [], []>} : vector<8x32xbf16>, vector<32x128xbf16>, vector<8x128xf32> -> vector<8x128xf32>
      %161 = arith.addf %158, %160 : vector<8x128xf32>
      %162 = vector.extract_strided_slice %161 {offsets = [0, 0], sizes = [8, 32], strides = [1, 1]} : vector<8x128xf32> to vector<8x32xf32>
      %163 = arith.negf %162 : vector<8x32xf32>
      %164 = math.exp %163 : vector<8x32xf32>
      %cst_61 = arith.constant 1.000000e+00 : f32
      %165 = vector.broadcast %cst_61 : f32 to vector<8x32xf32>
      %166 = arith.addf %165, %164 : vector<8x32xf32>
      %167 = arith.divf %165, %166 : vector<8x32xf32>
      %168 = vector.extract_strided_slice %161 {offsets = [0, 32], sizes = [8, 32], strides = [1, 1]} : vector<8x128xf32> to vector<8x32xf32>
      %169 = arith.negf %168 : vector<8x32xf32>
      %170 = math.exp %169 : vector<8x32xf32>
      %cst_62 = arith.constant 1.000000e+00 : f32
      %171 = vector.broadcast %cst_62 : f32 to vector<8x32xf32>
      %172 = arith.addf %171, %170 : vector<8x32xf32>
      %173 = arith.divf %171, %172 : vector<8x32xf32>
      %174 = vector.extract_strided_slice %161 {offsets = [0, 64], sizes = [8, 32], strides = [1, 1]} : vector<8x128xf32> to vector<8x32xf32>
      %175 = math.tanh %174 : vector<8x32xf32>
      %176 = vector.extract_strided_slice %161 {offsets = [0, 96], sizes = [8, 32], strides = [1, 1]} : vector<8x128xf32> to vector<8x32xf32>
      %177 = arith.negf %176 : vector<8x32xf32>
      %178 = math.exp %177 : vector<8x32xf32>
      %cst_63 = arith.constant 1.000000e+00 : f32
      %179 = vector.broadcast %cst_63 : f32 to vector<8x32xf32>
      %180 = arith.addf %179, %178 : vector<8x32xf32>
      %181 = arith.divf %179, %180 : vector<8x32xf32>
      %182 = arith.mulf %167, %152 : vector<8x32xf32>
      %183 = arith.mulf %173, %175 : vector<8x32xf32>
      %184 = arith.addf %182, %183 : vector<8x32xf32>
      %185 = math.tanh %184 : vector<8x32xf32>
      %186 = arith.mulf %181, %185 : vector<8x32xf32>
      %c0_64 = arith.constant 0 : index
      %c32_65 = arith.constant 32 : index
      %c0_66 = arith.constant 0 : index
      %187 = vector.load %arg5[%c0_64, %c32_65, %c0_66] : memref<1x64x32xf32, #tpu.memory_space<vmem>>, vector<1x8x32xf32>
      %188 = vector.shape_cast %187 : vector<1x8x32xf32> to vector<8x32xf32>
      %189 = vector.shape_cast %186 : vector<8x32xf32> to vector<1x8x32xf32>
      tpu.vector_store %arg5[%c0_64, %c32_65, %c0_66], %189 {strides = array<i32>} : memref<1x64x32xf32, #tpu.memory_space<vmem>>, vector<1x8x32xf32>,
      %c40 = arith.constant 40 : index
      %c0_67 = arith.constant 0 : index
      %190 = vector.load %arg6[%c40, %c0_67] : memref<64x128xf32, #tpu.memory_space<vmem>>, vector<8x128xf32>
      %191 = arith.truncf %186 : vector<8x32xf32> to vector<8x32xbf16>
      %cst_68 = arith.constant dense<0.000000e+00> : vector<8x128xf32>
      %192 = tpu.matmul %191, %21, %cst_68 {dimension_numbers = #tpu.dot_dimension_numbers<[1], [0], [0], [1], [0, 0, 1, 1], [], []>} : vector<8x32xbf16>, vector<32x128xbf16>, vector<8x128xf32> -> vector<8x128xf32>
      %193 = arith.addf %190, %192 : vector<8x128xf32>
      %194 = vector.extract_strided_slice %193 {offsets = [0, 0], sizes = [8, 32], strides = [1, 1]} : vector<8x128xf32> to vector<8x32xf32>
      %195 = arith.negf %194 : vector<8x32xf32>
      %196 = math.exp %195 : vector<8x32xf32>
      %cst_69 = arith.constant 1.000000e+00 : f32
      %197 = vector.broadcast %cst_69 : f32 to vector<8x32xf32>
      %198 = arith.addf %197, %196 : vector<8x32xf32>
      %199 = arith.divf %197, %198 : vector<8x32xf32>
      %200 = vector.extract_strided_slice %193 {offsets = [0, 32], sizes = [8, 32], strides = [1, 1]} : vector<8x128xf32> to vector<8x32xf32>
      %201 = arith.negf %200 : vector<8x32xf32>
      %202 = math.exp %201 : vector<8x32xf32>
      %cst_70 = arith.constant 1.000000e+00 : f32
      %203 = vector.broadcast %cst_70 : f32 to vector<8x32xf32>
      %204 = arith.addf %203, %202 : vector<8x32xf32>
      %205 = arith.divf %203, %204 : vector<8x32xf32>
      %206 = vector.extract_strided_slice %193 {offsets = [0, 64], sizes = [8, 32], strides = [1, 1]} : vector<8x128xf32> to vector<8x32xf32>
      %207 = math.tanh %206 : vector<8x32xf32>
      %208 = vector.extract_strided_slice %193 {offsets = [0, 96], sizes = [8, 32], strides = [1, 1]} : vector<8x128xf32> to vector<8x32xf32>
      %209 = arith.negf %208 : vector<8x32xf32>
      %210 = math.exp %209 : vector<8x32xf32>
      %cst_71 = arith.constant 1.000000e+00 : f32
      %211 = vector.broadcast %cst_71 : f32 to vector<8x32xf32>
      %212 = arith.addf %211, %210 : vector<8x32xf32>
      %213 = arith.divf %211, %212 : vector<8x32xf32>
      %214 = arith.mulf %199, %184 : vector<8x32xf32>
      %215 = arith.mulf %205, %207 : vector<8x32xf32>
      %216 = arith.addf %214, %215 : vector<8x32xf32>
      %217 = math.tanh %216 : vector<8x32xf32>
      %218 = arith.mulf %213, %217 : vector<8x32xf32>
      %c0_72 = arith.constant 0 : index
      %c40_73 = arith.constant 40 : index
      %c0_74 = arith.constant 0 : index
      %219 = vector.load %arg5[%c0_72, %c40_73, %c0_74] : memref<1x64x32xf32, #tpu.memory_space<vmem>>, vector<1x8x32xf32>
      %220 = vector.shape_cast %219 : vector<1x8x32xf32> to vector<8x32xf32>
      %221 = vector.shape_cast %218 : vector<8x32xf32> to vector<1x8x32xf32>
      tpu.vector_store %arg5[%c0_72, %c40_73, %c0_74], %221 {strides = array<i32>} : memref<1x64x32xf32, #tpu.memory_space<vmem>>, vector<1x8x32xf32>,
      %c48 = arith.constant 48 : index
      %c0_75 = arith.constant 0 : index
      %222 = vector.load %arg6[%c48, %c0_75] : memref<64x128xf32, #tpu.memory_space<vmem>>, vector<8x128xf32>
      %223 = arith.truncf %218 : vector<8x32xf32> to vector<8x32xbf16>
      %cst_76 = arith.constant dense<0.000000e+00> : vector<8x128xf32>
      %224 = tpu.matmul %223, %21, %cst_76 {dimension_numbers = #tpu.dot_dimension_numbers<[1], [0], [0], [1], [0, 0, 1, 1], [], []>} : vector<8x32xbf16>, vector<32x128xbf16>, vector<8x128xf32> -> vector<8x128xf32>
      %225 = arith.addf %222, %224 : vector<8x128xf32>
      %226 = vector.extract_strided_slice %225 {offsets = [0, 0], sizes = [8, 32], strides = [1, 1]} : vector<8x128xf32> to vector<8x32xf32>
      %227 = arith.negf %226 : vector<8x32xf32>
      %228 = math.exp %227 : vector<8x32xf32>
      %cst_77 = arith.constant 1.000000e+00 : f32
      %229 = vector.broadcast %cst_77 : f32 to vector<8x32xf32>
      %230 = arith.addf %229, %228 : vector<8x32xf32>
      %231 = arith.divf %229, %230 : vector<8x32xf32>
      %232 = vector.extract_strided_slice %225 {offsets = [0, 32], sizes = [8, 32], strides = [1, 1]} : vector<8x128xf32> to vector<8x32xf32>
      %233 = arith.negf %232 : vector<8x32xf32>
      %234 = math.exp %233 : vector<8x32xf32>
      %cst_78 = arith.constant 1.000000e+00 : f32
      %235 = vector.broadcast %cst_78 : f32 to vector<8x32xf32>
      %236 = arith.addf %235, %234 : vector<8x32xf32>
      %237 = arith.divf %235, %236 : vector<8x32xf32>
      %238 = vector.extract_strided_slice %225 {offsets = [0, 64], sizes = [8, 32], strides = [1, 1]} : vector<8x128xf32> to vector<8x32xf32>
      %239 = math.tanh %238 : vector<8x32xf32>
      %240 = vector.extract_strided_slice %225 {offsets = [0, 96], sizes = [8, 32], strides = [1, 1]} : vector<8x128xf32> to vector<8x32xf32>
      %241 = arith.negf %240 : vector<8x32xf32>
      %242 = math.exp %241 : vector<8x32xf32>
      %cst_79 = arith.constant 1.000000e+00 : f32
      %243 = vector.broadcast %cst_79 : f32 to vector<8x32xf32>
      %244 = arith.addf %243, %242 : vector<8x32xf32>
      %245 = arith.divf %243, %244 : vector<8x32xf32>
      %246 = arith.mulf %231, %216 : vector<8x32xf32>
      %247 = arith.mulf %237, %239 : vector<8x32xf32>
      %248 = arith.addf %246, %247 : vector<8x32xf32>
      %249 = math.tanh %248 : vector<8x32xf32>
      %250 = arith.mulf %245, %249 : vector<8x32xf32>
      %c0_80 = arith.constant 0 : index
      %c48_81 = arith.constant 48 : index
      %c0_82 = arith.constant 0 : index
      %251 = vector.load %arg5[%c0_80, %c48_81, %c0_82] : memref<1x64x32xf32, #tpu.memory_space<vmem>>, vector<1x8x32xf32>
      %252 = vector.shape_cast %251 : vector<1x8x32xf32> to vector<8x32xf32>
      %253 = vector.shape_cast %250 : vector<8x32xf32> to vector<1x8x32xf32>
      tpu.vector_store %arg5[%c0_80, %c48_81, %c0_82], %253 {strides = array<i32>} : memref<1x64x32xf32, #tpu.memory_space<vmem>>, vector<1x8x32xf32>,
      %c56 = arith.constant 56 : index
      %c0_83 = arith.constant 0 : index
      %254 = vector.load %arg6[%c56, %c0_83] : memref<64x128xf32, #tpu.memory_space<vmem>>, vector<8x128xf32>
      %255 = arith.truncf %250 : vector<8x32xf32> to vector<8x32xbf16>
      %cst_84 = arith.constant dense<0.000000e+00> : vector<8x128xf32>
      %256 = tpu.matmul %255, %21, %cst_84 {dimension_numbers = #tpu.dot_dimension_numbers<[1], [0], [0], [1], [0, 0, 1, 1], [], []>} : vector<8x32xbf16>, vector<32x128xbf16>, vector<8x128xf32> -> vector<8x128xf32>
      %257 = arith.addf %254, %256 : vector<8x128xf32>
      %258 = vector.extract_strided_slice %257 {offsets = [0, 0], sizes = [8, 32], strides = [1, 1]} : vector<8x128xf32> to vector<8x32xf32>
      %259 = arith.negf %258 : vector<8x32xf32>
      %260 = math.exp %259 : vector<8x32xf32>
      %cst_85 = arith.constant 1.000000e+00 : f32
      %261 = vector.broadcast %cst_85 : f32 to vector<8x32xf32>
      %262 = arith.addf %261, %260 : vector<8x32xf32>
      %263 = arith.divf %261, %262 : vector<8x32xf32>
      %264 = vector.extract_strided_slice %257 {offsets = [0, 32], sizes = [8, 32], strides = [1, 1]} : vector<8x128xf32> to vector<8x32xf32>
      %265 = arith.negf %264 : vector<8x32xf32>
      %266 = math.exp %265 : vector<8x32xf32>
      %cst_86 = arith.constant 1.000000e+00 : f32
      %267 = vector.broadcast %cst_86 : f32 to vector<8x32xf32>
      %268 = arith.addf %267, %266 : vector<8x32xf32>
      %269 = arith.divf %267, %268 : vector<8x32xf32>
      %270 = vector.extract_strided_slice %257 {offsets = [0, 64], sizes = [8, 32], strides = [1, 1]} : vector<8x128xf32> to vector<8x32xf32>
      %271 = math.tanh %270 : vector<8x32xf32>
      %272 = vector.extract_strided_slice %257 {offsets = [0, 96], sizes = [8, 32], strides = [1, 1]} : vector<8x128xf32> to vector<8x32xf32>
      %273 = arith.negf %272 : vector<8x32xf32>
      %274 = math.exp %273 : vector<8x32xf32>
      %cst_87 = arith.constant 1.000000e+00 : f32
      %275 = vector.broadcast %cst_87 : f32 to vector<8x32xf32>
      %276 = arith.addf %275, %274 : vector<8x32xf32>
      %277 = arith.divf %275, %276 : vector<8x32xf32>
      %278 = arith.mulf %263, %248 : vector<8x32xf32>
      %279 = arith.mulf %269, %271 : vector<8x32xf32>
      %280 = arith.addf %278, %279 : vector<8x32xf32>
      %281 = math.tanh %280 : vector<8x32xf32>
      %282 = arith.mulf %277, %281 : vector<8x32xf32>
      %c0_88 = arith.constant 0 : index
      %c56_89 = arith.constant 56 : index
      %c0_90 = arith.constant 0 : index
      %283 = vector.load %arg5[%c0_88, %c56_89, %c0_90] : memref<1x64x32xf32, #tpu.memory_space<vmem>>, vector<1x8x32xf32>
      %284 = vector.shape_cast %283 : vector<1x8x32xf32> to vector<8x32xf32>
      %285 = vector.shape_cast %282 : vector<8x32xf32> to vector<1x8x32xf32>
      tpu.vector_store %arg5[%c0_88, %c56_89, %c0_90], %285 {strides = array<i32>} : memref<1x64x32xf32, #tpu.memory_space<vmem>>, vector<1x8x32xf32>,
    } else {
    }
    %c1_i32 = arith.constant 1 : i32
    %25 = arith.cmpi eq, %arg0, %c1_i32 : i32
    %26 = arith.extui %25 : i1 to i32
    %c0_i32_23 = arith.constant 0 : i32
    %27 = arith.cmpi ne, %26, %c0_i32_23 : i32
    scf.if %27 {
      %cst_24 = arith.constant 0.000000e+00 : f32
      %28 = vector.broadcast %cst_24 : f32 to vector<8x32xf32>
      %cst_25 = arith.constant 0.000000e+00 : f32
      %29 = vector.broadcast %cst_25 : f32 to vector<8x32xf32>
      %c56 = arith.constant 56 : index
      %c0_26 = arith.constant 0 : index
      %30 = vector.load %arg6[%c56, %c0_26] : memref<64x128xf32, #tpu.memory_space<vmem>>, vector<8x128xf32>
      %31 = arith.truncf %28 : vector<8x32xf32> to vector<8x32xbf16>
      %cst_27 = arith.constant dense<0.000000e+00> : vector<8x128xf32>
      %32 = tpu.matmul %31, %21, %cst_27 {dimension_numbers = #tpu.dot_dimension_numbers<[1], [0], [0], [1], [0, 0, 1, 1], [], []>} : vector<8x32xbf16>, vector<32x128xbf16>, vector<8x128xf32> -> vector<8x128xf32>
      %33 = arith.addf %30, %32 : vector<8x128xf32>
      %34 = vector.extract_strided_slice %33 {offsets = [0, 0], sizes = [8, 32], strides = [1, 1]} : vector<8x128xf32> to vector<8x32xf32>
      %35 = arith.negf %34 : vector<8x32xf32>
      %36 = math.exp %35 : vector<8x32xf32>
      %cst_28 = arith.constant 1.000000e+00 : f32
      %37 = vector.broadcast %cst_28 : f32 to vector<8x32xf32>
      %38 = arith.addf %37, %36 : vector<8x32xf32>
      %39 = arith.divf %37, %38 : vector<8x32xf32>
      %40 = vector.extract_strided_slice %33 {offsets = [0, 32], sizes = [8, 32], strides = [1, 1]} : vector<8x128xf32> to vector<8x32xf32>
      %41 = arith.negf %40 : vector<8x32xf32>
      %42 = math.exp %41 : vector<8x32xf32>
      %cst_29 = arith.constant 1.000000e+00 : f32
      %43 = vector.broadcast %cst_29 : f32 to vector<8x32xf32>
      %44 = arith.addf %43, %42 : vector<8x32xf32>
      %45 = arith.divf %43, %44 : vector<8x32xf32>
      %46 = vector.extract_strided_slice %33 {offsets = [0, 64], sizes = [8, 32], strides = [1, 1]} : vector<8x128xf32> to vector<8x32xf32>
      %47 = math.tanh %46 : vector<8x32xf32>
      %48 = vector.extract_strided_slice %33 {offsets = [0, 96], sizes = [8, 32], strides = [1, 1]} : vector<8x128xf32> to vector<8x32xf32>
      %49 = arith.negf %48 : vector<8x32xf32>
      %50 = math.exp %49 : vector<8x32xf32>
      %cst_30 = arith.constant 1.000000e+00 : f32
      %51 = vector.broadcast %cst_30 : f32 to vector<8x32xf32>
      %52 = arith.addf %51, %50 : vector<8x32xf32>
      %53 = arith.divf %51, %52 : vector<8x32xf32>
      %54 = arith.mulf %39, %29 : vector<8x32xf32>
      %55 = arith.mulf %45, %47 : vector<8x32xf32>
      %56 = arith.addf %54, %55 : vector<8x32xf32>
      %57 = math.tanh %56 : vector<8x32xf32>
      %58 = arith.mulf %53, %57 : vector<8x32xf32>
      %c0_31 = arith.constant 0 : index
      %c56_32 = arith.constant 56 : index
      %c0_33 = arith.constant 0 : index
      %59 = vector.load %arg5[%c0_31, %c56_32, %c0_33] : memref<1x64x32xf32, #tpu.memory_space<vmem>>, vector<1x8x32xf32>
      %60 = vector.shape_cast %59 : vector<1x8x32xf32> to vector<8x32xf32>
      %61 = vector.shape_cast %58 : vector<8x32xf32> to vector<1x8x32xf32>
      tpu.vector_store %arg5[%c0_31, %c56_32, %c0_33], %61 {strides = array<i32>} : memref<1x64x32xf32, #tpu.memory_space<vmem>>, vector<1x8x32xf32>,
      %c48 = arith.constant 48 : index
      %c0_34 = arith.constant 0 : index
      %62 = vector.load %arg6[%c48, %c0_34] : memref<64x128xf32, #tpu.memory_space<vmem>>, vector<8x128xf32>
      %63 = arith.truncf %58 : vector<8x32xf32> to vector<8x32xbf16>
      %cst_35 = arith.constant dense<0.000000e+00> : vector<8x128xf32>
      %64 = tpu.matmul %63, %21, %cst_35 {dimension_numbers = #tpu.dot_dimension_numbers<[1], [0], [0], [1], [0, 0, 1, 1], [], []>} : vector<8x32xbf16>, vector<32x128xbf16>, vector<8x128xf32> -> vector<8x128xf32>
      %65 = arith.addf %62, %64 : vector<8x128xf32>
      %66 = vector.extract_strided_slice %65 {offsets = [0, 0], sizes = [8, 32], strides = [1, 1]} : vector<8x128xf32> to vector<8x32xf32>
      %67 = arith.negf %66 : vector<8x32xf32>
      %68 = math.exp %67 : vector<8x32xf32>
      %cst_36 = arith.constant 1.000000e+00 : f32
      %69 = vector.broadcast %cst_36 : f32 to vector<8x32xf32>
      %70 = arith.addf %69, %68 : vector<8x32xf32>
      %71 = arith.divf %69, %70 : vector<8x32xf32>
      %72 = vector.extract_strided_slice %65 {offsets = [0, 32], sizes = [8, 32], strides = [1, 1]} : vector<8x128xf32> to vector<8x32xf32>
      %73 = arith.negf %72 : vector<8x32xf32>
      %74 = math.exp %73 : vector<8x32xf32>
      %cst_37 = arith.constant 1.000000e+00 : f32
      %75 = vector.broadcast %cst_37 : f32 to vector<8x32xf32>
      %76 = arith.addf %75, %74 : vector<8x32xf32>
      %77 = arith.divf %75, %76 : vector<8x32xf32>
      %78 = vector.extract_strided_slice %65 {offsets = [0, 64], sizes = [8, 32], strides = [1, 1]} : vector<8x128xf32> to vector<8x32xf32>
      %79 = math.tanh %78 : vector<8x32xf32>
      %80 = vector.extract_strided_slice %65 {offsets = [0, 96], sizes = [8, 32], strides = [1, 1]} : vector<8x128xf32> to vector<8x32xf32>
      %81 = arith.negf %80 : vector<8x32xf32>
      %82 = math.exp %81 : vector<8x32xf32>
      %cst_38 = arith.constant 1.000000e+00 : f32
      %83 = vector.broadcast %cst_38 : f32 to vector<8x32xf32>
      %84 = arith.addf %83, %82 : vector<8x32xf32>
      %85 = arith.divf %83, %84 : vector<8x32xf32>
      %86 = arith.mulf %71, %56 : vector<8x32xf32>
      %87 = arith.mulf %77, %79 : vector<8x32xf32>
      %88 = arith.addf %86, %87 : vector<8x32xf32>
      %89 = math.tanh %88 : vector<8x32xf32>
      %90 = arith.mulf %85, %89 : vector<8x32xf32>
      %c0_39 = arith.constant 0 : index
      %c48_40 = arith.constant 48 : index
      %c0_41 = arith.constant 0 : index
      %91 = vector.load %arg5[%c0_39, %c48_40, %c0_41] : memref<1x64x32xf32, #tpu.memory_space<vmem>>, vector<1x8x32xf32>
      %92 = vector.shape_cast %91 : vector<1x8x32xf32> to vector<8x32xf32>
      %93 = vector.shape_cast %90 : vector<8x32xf32> to vector<1x8x32xf32>
      tpu.vector_store %arg5[%c0_39, %c48_40, %c0_41], %93 {strides = array<i32>} : memref<1x64x32xf32, #tpu.memory_space<vmem>>, vector<1x8x32xf32>,
      %c40 = arith.constant 40 : index
      %c0_42 = arith.constant 0 : index
      %94 = vector.load %arg6[%c40, %c0_42] : memref<64x128xf32, #tpu.memory_space<vmem>>, vector<8x128xf32>
      %95 = arith.truncf %90 : vector<8x32xf32> to vector<8x32xbf16>
      %cst_43 = arith.constant dense<0.000000e+00> : vector<8x128xf32>
      %96 = tpu.matmul %95, %21, %cst_43 {dimension_numbers = #tpu.dot_dimension_numbers<[1], [0], [0], [1], [0, 0, 1, 1], [], []>} : vector<8x32xbf16>, vector<32x128xbf16>, vector<8x128xf32> -> vector<8x128xf32>
      %97 = arith.addf %94, %96 : vector<8x128xf32>
      %98 = vector.extract_strided_slice %97 {offsets = [0, 0], sizes = [8, 32], strides = [1, 1]} : vector<8x128xf32> to vector<8x32xf32>
      %99 = arith.negf %98 : vector<8x32xf32>
      %100 = math.exp %99 : vector<8x32xf32>
      %cst_44 = arith.constant 1.000000e+00 : f32
      %101 = vector.broadcast %cst_44 : f32 to vector<8x32xf32>
      %102 = arith.addf %101, %100 : vector<8x32xf32>
      %103 = arith.divf %101, %102 : vector<8x32xf32>
      %104 = vector.extract_strided_slice %97 {offsets = [0, 32], sizes = [8, 32], strides = [1, 1]} : vector<8x128xf32> to vector<8x32xf32>
      %105 = arith.negf %104 : vector<8x32xf32>
      %106 = math.exp %105 : vector<8x32xf32>
      %cst_45 = arith.constant 1.000000e+00 : f32
      %107 = vector.broadcast %cst_45 : f32 to vector<8x32xf32>
      %108 = arith.addf %107, %106 : vector<8x32xf32>
      %109 = arith.divf %107, %108 : vector<8x32xf32>
      %110 = vector.extract_strided_slice %97 {offsets = [0, 64], sizes = [8, 32], strides = [1, 1]} : vector<8x128xf32> to vector<8x32xf32>
      %111 = math.tanh %110 : vector<8x32xf32>
      %112 = vector.extract_strided_slice %97 {offsets = [0, 96], sizes = [8, 32], strides = [1, 1]} : vector<8x128xf32> to vector<8x32xf32>
      %113 = arith.negf %112 : vector<8x32xf32>
      %114 = math.exp %113 : vector<8x32xf32>
      %cst_46 = arith.constant 1.000000e+00 : f32
      %115 = vector.broadcast %cst_46 : f32 to vector<8x32xf32>
      %116 = arith.addf %115, %114 : vector<8x32xf32>
      %117 = arith.divf %115, %116 : vector<8x32xf32>
      %118 = arith.mulf %103, %88 : vector<8x32xf32>
      %119 = arith.mulf %109, %111 : vector<8x32xf32>
      %120 = arith.addf %118, %119 : vector<8x32xf32>
      %121 = math.tanh %120 : vector<8x32xf32>
      %122 = arith.mulf %117, %121 : vector<8x32xf32>
      %c0_47 = arith.constant 0 : index
      %c40_48 = arith.constant 40 : index
      %c0_49 = arith.constant 0 : index
      %123 = vector.load %arg5[%c0_47, %c40_48, %c0_49] : memref<1x64x32xf32, #tpu.memory_space<vmem>>, vector<1x8x32xf32>
      %124 = vector.shape_cast %123 : vector<1x8x32xf32> to vector<8x32xf32>
      %125 = vector.shape_cast %122 : vector<8x32xf32> to vector<1x8x32xf32>
      tpu.vector_store %arg5[%c0_47, %c40_48, %c0_49], %125 {strides = array<i32>} : memref<1x64x32xf32, #tpu.memory_space<vmem>>, vector<1x8x32xf32>,
      %c32 = arith.constant 32 : index
      %c0_50 = arith.constant 0 : index
      %126 = vector.load %arg6[%c32, %c0_50] : memref<64x128xf32, #tpu.memory_space<vmem>>, vector<8x128xf32>
      %127 = arith.truncf %122 : vector<8x32xf32> to vector<8x32xbf16>
      %cst_51 = arith.constant dense<0.000000e+00> : vector<8x128xf32>
      %128 = tpu.matmul %127, %21, %cst_51 {dimension_numbers = #tpu.dot_dimension_numbers<[1], [0], [0], [1], [0, 0, 1, 1], [], []>} : vector<8x32xbf16>, vector<32x128xbf16>, vector<8x128xf32> -> vector<8x128xf32>
      %129 = arith.addf %126, %128 : vector<8x128xf32>
      %130 = vector.extract_strided_slice %129 {offsets = [0, 0], sizes = [8, 32], strides = [1, 1]} : vector<8x128xf32> to vector<8x32xf32>
      %131 = arith.negf %130 : vector<8x32xf32>
      %132 = math.exp %131 : vector<8x32xf32>
      %cst_52 = arith.constant 1.000000e+00 : f32
      %133 = vector.broadcast %cst_52 : f32 to vector<8x32xf32>
      %134 = arith.addf %133, %132 : vector<8x32xf32>
      %135 = arith.divf %133, %134 : vector<8x32xf32>
      %136 = vector.extract_strided_slice %129 {offsets = [0, 32], sizes = [8, 32], strides = [1, 1]} : vector<8x128xf32> to vector<8x32xf32>
      %137 = arith.negf %136 : vector<8x32xf32>
      %138 = math.exp %137 : vector<8x32xf32>
      %cst_53 = arith.constant 1.000000e+00 : f32
      %139 = vector.broadcast %cst_53 : f32 to vector<8x32xf32>
      %140 = arith.addf %139, %138 : vector<8x32xf32>
      %141 = arith.divf %139, %140 : vector<8x32xf32>
      %142 = vector.extract_strided_slice %129 {offsets = [0, 64], sizes = [8, 32], strides = [1, 1]} : vector<8x128xf32> to vector<8x32xf32>
      %143 = math.tanh %142 : vector<8x32xf32>
      %144 = vector.extract_strided_slice %129 {offsets = [0, 96], sizes = [8, 32], strides = [1, 1]} : vector<8x128xf32> to vector<8x32xf32>
      %145 = arith.negf %144 : vector<8x32xf32>
      %146 = math.exp %145 : vector<8x32xf32>
      %cst_54 = arith.constant 1.000000e+00 : f32
      %147 = vector.broadcast %cst_54 : f32 to vector<8x32xf32>
      %148 = arith.addf %147, %146 : vector<8x32xf32>
      %149 = arith.divf %147, %148 : vector<8x32xf32>
      %150 = arith.mulf %135, %120 : vector<8x32xf32>
      %151 = arith.mulf %141, %143 : vector<8x32xf32>
      %152 = arith.addf %150, %151 : vector<8x32xf32>
      %153 = math.tanh %152 : vector<8x32xf32>
      %154 = arith.mulf %149, %153 : vector<8x32xf32>
      %c0_55 = arith.constant 0 : index
      %c32_56 = arith.constant 32 : index
      %c0_57 = arith.constant 0 : index
      %155 = vector.load %arg5[%c0_55, %c32_56, %c0_57] : memref<1x64x32xf32, #tpu.memory_space<vmem>>, vector<1x8x32xf32>
      %156 = vector.shape_cast %155 : vector<1x8x32xf32> to vector<8x32xf32>
      %157 = vector.shape_cast %154 : vector<8x32xf32> to vector<1x8x32xf32>
      tpu.vector_store %arg5[%c0_55, %c32_56, %c0_57], %157 {strides = array<i32>} : memref<1x64x32xf32, #tpu.memory_space<vmem>>, vector<1x8x32xf32>,
      %c24 = arith.constant 24 : index
      %c0_58 = arith.constant 0 : index
      %158 = vector.load %arg6[%c24, %c0_58] : memref<64x128xf32, #tpu.memory_space<vmem>>, vector<8x128xf32>
      %159 = arith.truncf %154 : vector<8x32xf32> to vector<8x32xbf16>
      %cst_59 = arith.constant dense<0.000000e+00> : vector<8x128xf32>
      %160 = tpu.matmul %159, %21, %cst_59 {dimension_numbers = #tpu.dot_dimension_numbers<[1], [0], [0], [1], [0, 0, 1, 1], [], []>} : vector<8x32xbf16>, vector<32x128xbf16>, vector<8x128xf32> -> vector<8x128xf32>
      %161 = arith.addf %158, %160 : vector<8x128xf32>
      %162 = vector.extract_strided_slice %161 {offsets = [0, 0], sizes = [8, 32], strides = [1, 1]} : vector<8x128xf32> to vector<8x32xf32>
      %163 = arith.negf %162 : vector<8x32xf32>
      %164 = math.exp %163 : vector<8x32xf32>
      %cst_60 = arith.constant 1.000000e+00 : f32
      %165 = vector.broadcast %cst_60 : f32 to vector<8x32xf32>
      %166 = arith.addf %165, %164 : vector<8x32xf32>
      %167 = arith.divf %165, %166 : vector<8x32xf32>
      %168 = vector.extract_strided_slice %161 {offsets = [0, 32], sizes = [8, 32], strides = [1, 1]} : vector<8x128xf32> to vector<8x32xf32>
      %169 = arith.negf %168 : vector<8x32xf32>
      %170 = math.exp %169 : vector<8x32xf32>
      %cst_61 = arith.constant 1.000000e+00 : f32
      %171 = vector.broadcast %cst_61 : f32 to vector<8x32xf32>
      %172 = arith.addf %171, %170 : vector<8x32xf32>
      %173 = arith.divf %171, %172 : vector<8x32xf32>
      %174 = vector.extract_strided_slice %161 {offsets = [0, 64], sizes = [8, 32], strides = [1, 1]} : vector<8x128xf32> to vector<8x32xf32>
      %175 = math.tanh %174 : vector<8x32xf32>
      %176 = vector.extract_strided_slice %161 {offsets = [0, 96], sizes = [8, 32], strides = [1, 1]} : vector<8x128xf32> to vector<8x32xf32>
      %177 = arith.negf %176 : vector<8x32xf32>
      %178 = math.exp %177 : vector<8x32xf32>
      %cst_62 = arith.constant 1.000000e+00 : f32
      %179 = vector.broadcast %cst_62 : f32 to vector<8x32xf32>
      %180 = arith.addf %179, %178 : vector<8x32xf32>
      %181 = arith.divf %179, %180 : vector<8x32xf32>
      %182 = arith.mulf %167, %152 : vector<8x32xf32>
      %183 = arith.mulf %173, %175 : vector<8x32xf32>
      %184 = arith.addf %182, %183 : vector<8x32xf32>
      %185 = math.tanh %184 : vector<8x32xf32>
      %186 = arith.mulf %181, %185 : vector<8x32xf32>
      %c0_63 = arith.constant 0 : index
      %c24_64 = arith.constant 24 : index
      %c0_65 = arith.constant 0 : index
      %187 = vector.load %arg5[%c0_63, %c24_64, %c0_65] : memref<1x64x32xf32, #tpu.memory_space<vmem>>, vector<1x8x32xf32>
      %188 = vector.shape_cast %187 : vector<1x8x32xf32> to vector<8x32xf32>
      %189 = vector.shape_cast %186 : vector<8x32xf32> to vector<1x8x32xf32>
      tpu.vector_store %arg5[%c0_63, %c24_64, %c0_65], %189 {strides = array<i32>} : memref<1x64x32xf32, #tpu.memory_space<vmem>>, vector<1x8x32xf32>,
      %c16 = arith.constant 16 : index
      %c0_66 = arith.constant 0 : index
      %190 = vector.load %arg6[%c16, %c0_66] : memref<64x128xf32, #tpu.memory_space<vmem>>, vector<8x128xf32>
      %191 = arith.truncf %186 : vector<8x32xf32> to vector<8x32xbf16>
      %cst_67 = arith.constant dense<0.000000e+00> : vector<8x128xf32>
      %192 = tpu.matmul %191, %21, %cst_67 {dimension_numbers = #tpu.dot_dimension_numbers<[1], [0], [0], [1], [0, 0, 1, 1], [], []>} : vector<8x32xbf16>, vector<32x128xbf16>, vector<8x128xf32> -> vector<8x128xf32>
      %193 = arith.addf %190, %192 : vector<8x128xf32>
      %194 = vector.extract_strided_slice %193 {offsets = [0, 0], sizes = [8, 32], strides = [1, 1]} : vector<8x128xf32> to vector<8x32xf32>
      %195 = arith.negf %194 : vector<8x32xf32>
      %196 = math.exp %195 : vector<8x32xf32>
      %cst_68 = arith.constant 1.000000e+00 : f32
      %197 = vector.broadcast %cst_68 : f32 to vector<8x32xf32>
      %198 = arith.addf %197, %196 : vector<8x32xf32>
      %199 = arith.divf %197, %198 : vector<8x32xf32>
      %200 = vector.extract_strided_slice %193 {offsets = [0, 32], sizes = [8, 32], strides = [1, 1]} : vector<8x128xf32> to vector<8x32xf32>
      %201 = arith.negf %200 : vector<8x32xf32>
      %202 = math.exp %201 : vector<8x32xf32>
      %cst_69 = arith.constant 1.000000e+00 : f32
      %203 = vector.broadcast %cst_69 : f32 to vector<8x32xf32>
      %204 = arith.addf %203, %202 : vector<8x32xf32>
      %205 = arith.divf %203, %204 : vector<8x32xf32>
      %206 = vector.extract_strided_slice %193 {offsets = [0, 64], sizes = [8, 32], strides = [1, 1]} : vector<8x128xf32> to vector<8x32xf32>
      %207 = math.tanh %206 : vector<8x32xf32>
      %208 = vector.extract_strided_slice %193 {offsets = [0, 96], sizes = [8, 32], strides = [1, 1]} : vector<8x128xf32> to vector<8x32xf32>
      %209 = arith.negf %208 : vector<8x32xf32>
      %210 = math.exp %209 : vector<8x32xf32>
      %cst_70 = arith.constant 1.000000e+00 : f32
      %211 = vector.broadcast %cst_70 : f32 to vector<8x32xf32>
      %212 = arith.addf %211, %210 : vector<8x32xf32>
      %213 = arith.divf %211, %212 : vector<8x32xf32>
      %214 = arith.mulf %199, %184 : vector<8x32xf32>
      %215 = arith.mulf %205, %207 : vector<8x32xf32>
      %216 = arith.addf %214, %215 : vector<8x32xf32>
      %217 = math.tanh %216 : vector<8x32xf32>
      %218 = arith.mulf %213, %217 : vector<8x32xf32>
      %c0_71 = arith.constant 0 : index
      %c16_72 = arith.constant 16 : index
      %c0_73 = arith.constant 0 : index
      %219 = vector.load %arg5[%c0_71, %c16_72, %c0_73] : memref<1x64x32xf32, #tpu.memory_space<vmem>>, vector<1x8x32xf32>
      %220 = vector.shape_cast %219 : vector<1x8x32xf32> to vector<8x32xf32>
      %221 = vector.shape_cast %218 : vector<8x32xf32> to vector<1x8x32xf32>
      tpu.vector_store %arg5[%c0_71, %c16_72, %c0_73], %221 {strides = array<i32>} : memref<1x64x32xf32, #tpu.memory_space<vmem>>, vector<1x8x32xf32>,
      %c8 = arith.constant 8 : index
      %c0_74 = arith.constant 0 : index
      %222 = vector.load %arg6[%c8, %c0_74] : memref<64x128xf32, #tpu.memory_space<vmem>>, vector<8x128xf32>
      %223 = arith.truncf %218 : vector<8x32xf32> to vector<8x32xbf16>
      %cst_75 = arith.constant dense<0.000000e+00> : vector<8x128xf32>
      %224 = tpu.matmul %223, %21, %cst_75 {dimension_numbers = #tpu.dot_dimension_numbers<[1], [0], [0], [1], [0, 0, 1, 1], [], []>} : vector<8x32xbf16>, vector<32x128xbf16>, vector<8x128xf32> -> vector<8x128xf32>
      %225 = arith.addf %222, %224 : vector<8x128xf32>
      %226 = vector.extract_strided_slice %225 {offsets = [0, 0], sizes = [8, 32], strides = [1, 1]} : vector<8x128xf32> to vector<8x32xf32>
      %227 = arith.negf %226 : vector<8x32xf32>
      %228 = math.exp %227 : vector<8x32xf32>
      %cst_76 = arith.constant 1.000000e+00 : f32
      %229 = vector.broadcast %cst_76 : f32 to vector<8x32xf32>
      %230 = arith.addf %229, %228 : vector<8x32xf32>
      %231 = arith.divf %229, %230 : vector<8x32xf32>
      %232 = vector.extract_strided_slice %225 {offsets = [0, 32], sizes = [8, 32], strides = [1, 1]} : vector<8x128xf32> to vector<8x32xf32>
      %233 = arith.negf %232 : vector<8x32xf32>
      %234 = math.exp %233 : vector<8x32xf32>
      %cst_77 = arith.constant 1.000000e+00 : f32
      %235 = vector.broadcast %cst_77 : f32 to vector<8x32xf32>
      %236 = arith.addf %235, %234 : vector<8x32xf32>
      %237 = arith.divf %235, %236 : vector<8x32xf32>
      %238 = vector.extract_strided_slice %225 {offsets = [0, 64], sizes = [8, 32], strides = [1, 1]} : vector<8x128xf32> to vector<8x32xf32>
      %239 = math.tanh %238 : vector<8x32xf32>
      %240 = vector.extract_strided_slice %225 {offsets = [0, 96], sizes = [8, 32], strides = [1, 1]} : vector<8x128xf32> to vector<8x32xf32>
      %241 = arith.negf %240 : vector<8x32xf32>
      %242 = math.exp %241 : vector<8x32xf32>
      %cst_78 = arith.constant 1.000000e+00 : f32
      %243 = vector.broadcast %cst_78 : f32 to vector<8x32xf32>
      %244 = arith.addf %243, %242 : vector<8x32xf32>
      %245 = arith.divf %243, %244 : vector<8x32xf32>
      %246 = arith.mulf %231, %216 : vector<8x32xf32>
      %247 = arith.mulf %237, %239 : vector<8x32xf32>
      %248 = arith.addf %246, %247 : vector<8x32xf32>
      %249 = math.tanh %248 : vector<8x32xf32>
      %250 = arith.mulf %245, %249 : vector<8x32xf32>
      %c0_79 = arith.constant 0 : index
      %c8_80 = arith.constant 8 : index
      %c0_81 = arith.constant 0 : index
      %251 = vector.load %arg5[%c0_79, %c8_80, %c0_81] : memref<1x64x32xf32, #tpu.memory_space<vmem>>, vector<1x8x32xf32>
      %252 = vector.shape_cast %251 : vector<1x8x32xf32> to vector<8x32xf32>
      %253 = vector.shape_cast %250 : vector<8x32xf32> to vector<1x8x32xf32>
      tpu.vector_store %arg5[%c0_79, %c8_80, %c0_81], %253 {strides = array<i32>} : memref<1x64x32xf32, #tpu.memory_space<vmem>>, vector<1x8x32xf32>,
      %c0_82 = arith.constant 0 : index
      %c0_83 = arith.constant 0 : index
      %254 = vector.load %arg6[%c0_82, %c0_83] : memref<64x128xf32, #tpu.memory_space<vmem>>, vector<8x128xf32>
      %255 = arith.truncf %250 : vector<8x32xf32> to vector<8x32xbf16>
      %cst_84 = arith.constant dense<0.000000e+00> : vector<8x128xf32>
      %256 = tpu.matmul %255, %21, %cst_84 {dimension_numbers = #tpu.dot_dimension_numbers<[1], [0], [0], [1], [0, 0, 1, 1], [], []>} : vector<8x32xbf16>, vector<32x128xbf16>, vector<8x128xf32> -> vector<8x128xf32>
      %257 = arith.addf %254, %256 : vector<8x128xf32>
      %258 = vector.extract_strided_slice %257 {offsets = [0, 0], sizes = [8, 32], strides = [1, 1]} : vector<8x128xf32> to vector<8x32xf32>
      %259 = arith.negf %258 : vector<8x32xf32>
      %260 = math.exp %259 : vector<8x32xf32>
      %cst_85 = arith.constant 1.000000e+00 : f32
      %261 = vector.broadcast %cst_85 : f32 to vector<8x32xf32>
      %262 = arith.addf %261, %260 : vector<8x32xf32>
      %263 = arith.divf %261, %262 : vector<8x32xf32>
      %264 = vector.extract_strided_slice %257 {offsets = [0, 32], sizes = [8, 32], strides = [1, 1]} : vector<8x128xf32> to vector<8x32xf32>
      %265 = arith.negf %264 : vector<8x32xf32>
      %266 = math.exp %265 : vector<8x32xf32>
      %cst_86 = arith.constant 1.000000e+00 : f32
      %267 = vector.broadcast %cst_86 : f32 to vector<8x32xf32>
      %268 = arith.addf %267, %266 : vector<8x32xf32>
      %269 = arith.divf %267, %268 : vector<8x32xf32>
      %270 = vector.extract_strided_slice %257 {offsets = [0, 64], sizes = [8, 32], strides = [1, 1]} : vector<8x128xf32> to vector<8x32xf32>
      %271 = math.tanh %270 : vector<8x32xf32>
      %272 = vector.extract_strided_slice %257 {offsets = [0, 96], sizes = [8, 32], strides = [1, 1]} : vector<8x128xf32> to vector<8x32xf32>
      %273 = arith.negf %272 : vector<8x32xf32>
      %274 = math.exp %273 : vector<8x32xf32>
      %cst_87 = arith.constant 1.000000e+00 : f32
      %275 = vector.broadcast %cst_87 : f32 to vector<8x32xf32>
      %276 = arith.addf %275, %274 : vector<8x32xf32>
      %277 = arith.divf %275, %276 : vector<8x32xf32>
      %278 = arith.mulf %263, %248 : vector<8x32xf32>
      %279 = arith.mulf %269, %271 : vector<8x32xf32>
      %280 = arith.addf %278, %279 : vector<8x32xf32>
      %281 = math.tanh %280 : vector<8x32xf32>
      %282 = arith.mulf %277, %281 : vector<8x32xf32>
      %c0_88 = arith.constant 0 : index
      %c0_89 = arith.constant 0 : index
      %c0_90 = arith.constant 0 : index
      %283 = vector.load %arg5[%c0_88, %c0_89, %c0_90] : memref<1x64x32xf32, #tpu.memory_space<vmem>>, vector<1x8x32xf32>
      %284 = vector.shape_cast %283 : vector<1x8x32xf32> to vector<8x32xf32>
      %285 = vector.shape_cast %282 : vector<8x32xf32> to vector<1x8x32xf32>
      tpu.vector_store %arg5[%c0_88, %c0_89, %c0_90], %285 {strides = array<i32>} : memref<1x64x32xf32, #tpu.memory_space<vmem>>, vector<1x8x32xf32>,
    } else {
    }
    return
  }
  func.func @transform_0(%arg0: i32) -> (i32, i32, i32) {
    %c0_i32 = arith.constant 0 : i32
    %c0_i32_0 = arith.constant 0 : i32
    %c0_i32_1 = arith.constant 0 : i32
    %c0_i32_2 = arith.constant 0 : i32
    return %c0_i32, %c0_i32_0, %c0_i32_1 : i32, i32, i32
  }
  func.func @transform_1(%arg0: i32) -> (i32, i32, i32, i32) {
    %c0_i32 = arith.constant 0 : i32
    %c0_i32_0 = arith.constant 0 : i32
    %c0_i32_1 = arith.constant 0 : i32
    %c0_i32_2 = arith.constant 0 : i32
    return %arg0, %c0_i32, %c0_i32_0, %c0_i32_1 : i32, i32, i32, i32
  }
  func.func @transform_2(%arg0: i32) -> (i32, i32, i32) {
    %c0_i32 = arith.constant 0 : i32
    %c0_i32_0 = arith.constant 0 : i32
    %c0_i32_1 = arith.constant 0 : i32
    return %arg0, %c0_i32, %c0_i32_0 : i32, i32, i32
  }
  func.func @transform_3(%arg0: i32) -> (i32, i32, i32) {
    %c0_i32 = arith.constant 0 : i32
    %c0_i32_0 = arith.constant 0 : i32
    %c0_i32_1 = arith.constant 0 : i32
    return %arg0, %c0_i32, %c0_i32_0 : i32, i32, i32
  }
  func.func @transform_4(%arg0: i32) -> (i32, i32, i32) {
    %c0_i32 = arith.constant 0 : i32
    %c0_i32_0 = arith.constant 0 : i32
    %c0_i32_1 = arith.constant 0 : i32
    return %arg0, %c0_i32, %c0_i32_0 : i32, i32, i32
  }
}

</mosaic_0001>

<llo_original>
// kernel: bilstm_tagger_forward.5
$region0: #{bilstm_tagger_forward.5}
  #allocation0 [shape = 'u32[]', space=smem, size = 0x4, offset = 0x4, fixed_abs, tag = 'smem constant byte address 0x4 - core index']
  #allocation1 [shape = 'u32[72,128]{1,0:T(1,128)}', space=vmem, size = 0x9000, scoped, tag = 'internal scratch']
  %s0 = inlined_call_operand.vmem [shape: f32[2,64,32], index: 0, kind: input, shape index: {}]
  %s1 = inlined_call_operand.vmem [shape: bf16[2,32,128], index: 1, kind: input, shape index: {}]
  %s2 = inlined_call_operand.vmem [shape: f32[1,128], index: 2, kind: input, shape index: {}]
  %s3 = inlined_call_operand.vmem [shape: f32[64,128], index: 3, kind: output, shape index: {}]
  %s4 = sld [smem:[#allocation0]]
  $region22: #{bilstm_tagger_forward.5} parent=0
    _
  %s6 = ssub.s32 1, %s4
  %s7 = scalar_select 0, %s6, %s4
  // Predicated region
  $region2: #{bilstm_tagger_forward.5} parent=0 // pred_check
    _
  $region3: #{bilstm_tagger_forward.5} parent=0 // pred_check_branch
    %9 = sbr.rel (0) target = $region5
  $region4: #{bilstm_tagger_forward.5} parent=0 // pred_region
    _
  $region5: #{bilstm_tagger_forward.5} parent=0 // pred_fallthru
    _
  // Predicated region
  $region6: #{bilstm_tagger_forward.5} parent=0 // pred_check
    _
  $region7: #{bilstm_tagger_forward.5} parent=0 // pred_check_branch
    %11 = sbr.rel (0) target = $region9
  $region8: #{bilstm_tagger_forward.5} parent=0 // pred_region
    _
  $region9: #{bilstm_tagger_forward.5} parent=0 // pred_fallthru
    _
  // Predicated region
  $region10: #{bilstm_tagger_forward.5} parent=0 // pred_check
    _
  $region11: #{bilstm_tagger_forward.5} parent=0 // pred_check_branch
    %13 = sbr.rel (0) target = $region13
  $region12: #{bilstm_tagger_forward.5} parent=0 // pred_region
    _
  $region13: #{bilstm_tagger_forward.5} parent=0 // pred_fallthru
    _
  %v15 = vld [vmem:[%s1] sm:$0xf]
  %v16 = vld [vmem:[%s1 + $0x4] sm:$0xf]
  %v17 = vld [vmem:[%s1 + $0x8] sm:$0xf]
  %v18 = vld [vmem:[%s1 + $0xc] sm:$0xf]
  %s19 = scalar_lea.vmem %s1, 16
  %v20 = vld [vmem:[%s19] sm:$0xf]
  %v21 = vld [vmem:[%s19 + $0x4] sm:$0xf]
  %v22 = vld [vmem:[%s19 + $0x8] sm:$0xf]
  %v23 = vld [vmem:[%s19 + $0xc] sm:$0xf]
  %v24 = vld [vmem:[%s0] sm:$0xff]
  %v25 = vld [vmem:[%s0 + $0x8] sm:$0xff]
  %v26 = vld [vmem:[%s0 + $0x10] sm:$0xff]
  %v27 = vld [vmem:[%s0 + $0x18] sm:$0xff]
  %v28 = vld [vmem:[%s0 + $0x20] sm:$0xff]
  %v29 = vld [vmem:[%s0 + $0x28] sm:$0xff]
  %v30 = vld [vmem:[%s0 + $0x30] sm:$0xff]
  %v31 = vld [vmem:[%s0 + $0x38] sm:$0xff]
  %v32 = vpack.c.bf16 %v25, %v24
  %v33 = vpack.c.bf16 %v27, %v26
  %v34 = vpack.c.bf16 %v29, %v28
  %v35 = vpack.c.bf16 %v31, %v30
  %s36 = scalar_lea.vmem %s0, 64
  %v37 = vld [vmem:[%s36] sm:$0xff]
  %v38 = vld [vmem:[%s36 + $0x8] sm:$0xff]
  %v39 = vld [vmem:[%s36 + $0x10] sm:$0xff]
  %v40 = vld [vmem:[%s36 + $0x18] sm:$0xff]
  %v41 = vld [vmem:[%s36 + $0x20] sm:$0xff]
  %v42 = vld [vmem:[%s36 + $0x28] sm:$0xff]
  %v43 = vld [vmem:[%s36 + $0x30] sm:$0xff]
  %v44 = vld [vmem:[%s36 + $0x38] sm:$0xff]
  %v45 = vpack.c.bf16 %v38, %v37
  %v46 = vpack.c.bf16 %v40, %v39
  %v47 = vpack.c.bf16 %v42, %v41
  %v48 = vpack.c.bf16 %v44, %v43
  %v53 = vunpack.c.l.b16 %v20
  %v54 = vunpack.c.l.b16 %v21
  %v55 = vunpack.c.l.b16 %v22
  %v56 = vunpack.c.l.b16 %v23
  %v57 = vpack.c.b16 %v54, %v53
  %v58 = vpack.c.b16 %v56, %v55
  %vm61 = vcmask 261120
  %v63 = vsel %vm61, %v45, 0
  %v66 = vsel %vm61, %v46, 0
  %v69 = vsel %vm61, %v47, 0
  %v72 = vsel %vm61, %v48, 0
  %74 = vmatpush.bf16.msra.mxu0 0
  %75 = vmatpush.bf16.msra.mxu0 0
  %76 = vmatpush.bf16.msra.mxu0 0
  %77 = vmatpush.bf16.msra.mxu0 0
  %78 = vmatpush.bf16.msra.mxu0 0
  %79 = vmatpush.bf16.msra.mxu0 0
  %80 = vmatpush.bf16.msra.mxu0 %v58
  %81 = vmatpush.bf16.msra.mxu0 %v57
  %82 = vmatmul.bf16.gmra.mxu0 %v63
  %v83 = vpop.f32.mrf.mxu0
  %v84 = vadd.f32 0.0, %v83
  %v85 = vpop.f32.mrf.mxu0
  %v86 = vadd.f32 0.0, %v85
  %87 = vmatmul.bf16.gmra.mxu0 %v66
  %v88 = vpop.f32.mrf.mxu0
  %v89 = vadd.f32 0.0, %v88
  %v90 = vpop.f32.mrf.mxu0
  %v91 = vadd.f32 0.0, %v90
  %92 = vmatmul.bf16.gmra.mxu0 %v69
  %v93 = vpop.f32.mrf.mxu0
  %v94 = vadd.f32 0.0, %v93
  %v95 = vpop.f32.mrf.mxu0
  %v96 = vadd.f32 0.0, %v95
  %97 = vmatmul.bf16.gmra.mxu0 %v72
  %v98 = vpop.f32.mrf.mxu0
  %v99 = vadd.f32 0.0, %v98
  %v100 = vpop.f32.mrf.mxu0
  %v101 = vadd.f32 0.0, %v100
  %102 = vdwg.mxu0
  %v107 = vunpack.c.l.b16 %v15
  %v108 = vunpack.c.l.b16 %v16
  %v109 = vunpack.c.l.b16 %v17
  %v110 = vunpack.c.l.b16 %v18
  %v111 = vpack.c.b16 %v108, %v107
  %v112 = vpack.c.b16 %v110, %v109
  %v116 = vsel %vm61, %v32, 0
  %v119 = vsel %vm61, %v33, 0
  %v122 = vsel %vm61, %v34, 0
  %v125 = vsel %vm61, %v35, 0
  %127 = vmatpush.bf16.msra.mxu0 0
  %128 = vmatpush.bf16.msra.mxu0 0
  %129 = vmatpush.bf16.msra.mxu0 0
  %130 = vmatpush.bf16.msra.mxu0 0
  %131 = vmatpush.bf16.msra.mxu0 0
  %132 = vmatpush.bf16.msra.mxu0 0
  %133 = vmatpush.bf16.msra.mxu0 %v112
  %134 = vmatpush.bf16.msra.mxu0 %v111
  %135 = vmatmul.bf16.gmra.mxu0 %v116
  %v136 = vpop.f32.mrf.mxu0
  %v137 = vadd.f32 %v84, %v136
  %v138 = vpop.f32.mrf.mxu0
  %v139 = vadd.f32 %v86, %v138
  %140 = vmatmul.bf16.gmra.mxu0 %v119
  %v141 = vpop.f32.mrf.mxu0
  %v142 = vadd.f32 %v89, %v141
  %v143 = vpop.f32.mrf.mxu0
  %v144 = vadd.f32 %v91, %v143
  %145 = vmatmul.bf16.gmra.mxu0 %v122
  %v146 = vpop.f32.mrf.mxu0
  %v147 = vadd.f32 %v94, %v146
  %v148 = vpop.f32.mrf.mxu0
  %v149 = vadd.f32 %v96, %v148
  %150 = vmatmul.bf16.gmra.mxu0 %v125
  %v151 = vpop.f32.mrf.mxu0
  %v152 = vadd.f32 %v99, %v151
  %v153 = vpop.f32.mrf.mxu0
  %v154 = vadd.f32 %v101, %v153
  %155 = vdwg.mxu0
  %v156 = vld [vmem:[%s2] sm:$0x1]
  %v158 = vperm.slane %v156, 0
  %v160 = vadd.f32 %v137, %v158
  %v161 = vadd.f32 %v139, %v158
  %v162 = vadd.f32 %v142, %v158
  %v163 = vadd.f32 %v144, %v158
  %v164 = vadd.f32 %v147, %v158
  %v165 = vadd.f32 %v149, %v158
  %v166 = vadd.f32 %v152, %v158
  %v167 = vadd.f32 %v154, %v158
  %168 = vst [vmem:[%s3] sm:$0xff] %v160
  %169 = vst [vmem:[%s3 + $0x8] sm:$0xff] %v161
  %170 = vst [vmem:[%s3 + $0x10] sm:$0xff] %v162
  %171 = vst [vmem:[%s3 + $0x18] sm:$0xff] %v163
  %172 = vst [vmem:[%s3 + $0x20] sm:$0xff] %v164
  %173 = vst [vmem:[%s3 + $0x28] sm:$0xff] %v165
  %174 = vst [vmem:[%s3 + $0x30] sm:$0xff] %v166
  %175 = vst [vmem:[%s3 + $0x38] sm:$0xff] %v167
  // Predicated region
  $region14: #{bilstm_tagger_forward.5} parent=0 // pred_check
    _
  $region15: #{bilstm_tagger_forward.5} parent=0 // pred_check_branch
    %177 = sbr.rel (0) target = $region17
  $region16: #{bilstm_tagger_forward.5} parent=0 // pred_region
    _
  $region17: #{bilstm_tagger_forward.5} parent=0 // pred_fallthru
    _
  // Predicated region
  $region18: #{bilstm_tagger_forward.5} parent=0 // pred_check
    _
  $region19: #{bilstm_tagger_forward.5} parent=0 // pred_check_branch
    %179 = sbr.rel (0) target = $region21
  $region20: #{bilstm_tagger_forward.5} parent=0 // pred_region
    _
  $region21: #{bilstm_tagger_forward.5} parent=0 // pred_fallthru
    _

// kernel: bilstm_tagger_forward.3
$region0: #{bilstm_tagger_forward.3}
  #allocation0 [shape = 'u32[]', space=smem, size = 0x4, offset = 0x4, fixed_abs, tag = 'smem constant byte address 0x4 - core index']
  #allocation1 [shape = 'u32[72,128]{1,0:T(1,128)}', space=vmem, size = 0x9000, scoped, tag = 'internal scratch']
  #allocation2 [shape = 'f32[64,128]{1,0:T(8,128)}', space=vmem, size = 0x8000, scoped, tag = 'scratch operand']
  %s0 = inlined_call_operand.vmem [shape: f32[1,64,32], index: 0, kind: input, shape index: {}]
  %s1 = inlined_call_operand.vmem [shape: bf16[2,1,32,128], index: 1, kind: input, shape index: {}]
  %s2 = inlined_call_operand.vmem [shape: bf16[2,32,128], index: 2, kind: input, shape index: {}]
  %s3 = inlined_call_operand.vmem [shape: f32[2,1,128], index: 3, kind: input, shape index: {}]
  %s4 = inlined_call_operand.vmem [shape: f32[2,64,32], index: 4, kind: output, shape index: {}]
  %s5 = sld [smem:[#allocation0]]
  $region57: #{bilstm_tagger_forward.3} parent=0
    _
  %s7 = ssub.s32 1, %s5
  %s8 = scalar_select 0, %s7, %s5
  loop: start=0, step=1, limit=4
  $region2: #{bilstm_tagger_forward.3} parent=0 // loop_pre_header
    _
  $region3: #{bilstm_tagger_forward.3} parent=0 // loop_header
    %s10 = sphi 0, %s14
    %p11 = scmp.ge.s32.totalorder %s10, 4
    %s18 = sphi 0, %s18
    %s20 = sphi 0, %s18
    %s21 = sphi 0, %s20
    %s35 = sphi 0, %s21
    %s41 = sphi 0, %s43
    %s44 = sphi 0, %s41
    %s45 = sphi 0, %s44
    %s61 = sphi 0, %s45
    %s67 = sphi 0, %s69
    %s70 = sphi 0, %s67
    %s71 = sphi 0, %s70
    %s87 = sphi 0, %s71
    %s93 = sphi 0, %s95
    %s96 = sphi 0, %s93
    %s97 = sphi 0, %s96
    %s113 = sphi 0, %s97
    %s119 = sphi 0, %s121
    %s122 = sphi 0, %s119
    %s123 = sphi 0, %s122
    %s139 = sphi 0, %s123
  $region4: #{bilstm_tagger_forward.3} parent=0 // loop_header_branch
    %13 = sbr.rel (%p11) target = $region8
  $region5: #{bilstm_tagger_forward.3} parent=0 // loop_body
    %s15 = ssub.s32 %s10, 1
    %s16 = ssub.s32 %s10, 2
    %s17 = sadd.s32 %s10, 1
    %s19 = sadd.s32 %s18, 1
    %p22 = scmp.eq.s32.totalorder %s10, 1
    %p23 = scmp.ne.s32.totalorder %s18, %s20
    %p24 = scmp.eq.s32.totalorder %s10, 0
    %p25 = por %p23, %p24
    %p26 = scmp.ne.s32.totalorder %s18, %s20
    %p27 = scmp.eq.s32.totalorder %s15, 1
    %p28 = por %p26, %p27
    %p29 = scmp.ne.s32.totalorder %s20, %s21
    %p30 = scmp.eq.s32.totalorder %s15, 0
    %p31 = por %p29, %p30
    %p32 = scmp.ne.s32.totalorder %s20, %s21
    %p33 = scmp.eq.s32.totalorder %s16, 1
    %p34 = por %p32, %p33
    %p36 = scmp.ne.s32.totalorder %s21, %s35
    %p37 = scmp.eq.s32.totalorder %s16, 0
    %p38 = por %p36, %p37
    %s39 = ssub.s32 %s10, %s17
    %p40 = scmp.eq.s32.totalorder %s39, 0
    %s42 = sadd.s32 %s41, 1
    %s43 = scalar_select %p40, %s41, %s42
    %p46 = pneg %p40
    %p47 = scmp.eq.s32.totalorder %s10, 1
    %p48 = por %p46, %p47
    %p49 = scmp.ne.s32.totalorder %s41, %s44
    %p50 = scmp.eq.s32.totalorder %s10, 0
    %p51 = por %p49, %p50
    %p52 = scmp.ne.s32.totalorder %s41, %s44
    %p53 = scmp.eq.s32.totalorder %s15, 1
    %p54 = por %p52, %p53
    %p55 = scmp.ne.s32.totalorder %s44, %s45
    %p56 = scmp.eq.s32.totalorder %s15, 0
    %p57 = por %p55, %p56
    %p58 = scmp.ne.s32.totalorder %s44, %s45
    %p59 = scmp.eq.s32.totalorder %s16, 1
    %p60 = por %p58, %p59
    %p62 = scmp.ne.s32.totalorder %s45, %s61
    %p63 = scmp.eq.s32.totalorder %s16, 0
    %p64 = por %p62, %p63
    %s65 = ssub.s32 %s10, %s17
    %p66 = scmp.eq.s32.totalorder %s65, 0
    %s68 = sadd.s32 %s67, 1
    %s69 = scalar_select %p66, %s67, %s68
    %p72 = pneg %p66
    %p73 = scmp.eq.s32.totalorder %s10, 1
    %p74 = por %p72, %p73
    %p75 = scmp.ne.s32.totalorder %s67, %s70
    %p76 = scmp.eq.s32.totalorder %s10, 0
    %p77 = por %p75, %p76
    %p78 = scmp.ne.s32.totalorder %s67, %s70
    %p79 = scmp.eq.s32.totalorder %s15, 1
    %p80 = por %p78, %p79
    %p81 = scmp.ne.s32.totalorder %s70, %s71
    %p82 = scmp.eq.s32.totalorder %s15, 0
    %p83 = por %p81, %p82
    %p84 = scmp.ne.s32.totalorder %s70, %s71
    %p85 = scmp.eq.s32.totalorder %s16, 1
    %p86 = por %p84, %p85
    %p88 = scmp.ne.s32.totalorder %s71, %s87
    %p89 = scmp.eq.s32.totalorder %s16, 0
    %p90 = por %p88, %p89
    %s91 = ssub.s32 %s10, %s17
    %p92 = scmp.eq.s32.totalorder %s91, 0
    %s94 = sadd.s32 %s93, 1
    %s95 = scalar_select %p92, %s93, %s94
    %p98 = pneg %p92
    %p99 = scmp.eq.s32.totalorder %s10, 1
    %p100 = por %p98, %p99
    %p101 = scmp.ne.s32.totalorder %s93, %s96
    %p102 = scmp.eq.s32.totalorder %s10, 0
    %p103 = por %p101, %p102
    %p104 = scmp.ne.s32.totalorder %s93, %s96
    %p105 = scmp.eq.s32.totalorder %s15, 1
    %p106 = por %p104, %p105
    %p107 = scmp.ne.s32.totalorder %s96, %s97
    %p108 = scmp.eq.s32.totalorder %s15, 0
    %p109 = por %p107, %p108
    %p110 = scmp.ne.s32.totalorder %s96, %s97
    %p111 = scmp.eq.s32.totalorder %s16, 1
    %p112 = por %p110, %p111
    %p114 = scmp.ne.s32.totalorder %s97, %s113
    %p115 = scmp.eq.s32.totalorder %s16, 0
    %p116 = por %p114, %p115
    %s117 = ssub.s32 %s10, %s17
    %p118 = scmp.eq.s32.totalorder %s117, 0
    %s120 = sadd.s32 %s119, 1
    %s121 = scalar_select %p118, %s119, %s120
    %p124 = pneg %p118
    %p125 = scmp.eq.s32.totalorder %s10, 1
    %p126 = por %p124, %p125
    %p127 = scmp.ne.s32.totalorder %s119, %s122
    %p128 = scmp.eq.s32.totalorder %s10, 0
    %p129 = por %p127, %p128
    %p130 = scmp.ne.s32.totalorder %s119, %s122
    %p131 = scmp.eq.s32.totalorder %s15, 1
    %p132 = por %p130, %p131
    %p133 = scmp.ne.s32.totalorder %s122, %s123
    %p134 = scmp.eq.s32.totalorder %s15, 0
    %p135 = por %p133, %p134
    %p136 = scmp.ne.s32.totalorder %s122, %s123
    %p137 = scmp.eq.s32.totalorder %s16, 1
    %p138 = por %p136, %p137
    %p140 = scmp.ne.s32.totalorder %s123, %s139
    %p141 = scmp.eq.s32.totalorder %s16, 0
    %p142 = por %p140, %p141
    %p143 = scmp.le.s32.totalorder 1, %s10
    %p144 = scmp.lt.s32.totalorder %s10, 3
    %p145 = pnand %p143, %p144
    %p146 = pneg %p145
    // Predicated region
    $region9: #{bilstm_tagger_forward.3} parent=5 // pred_check
      _
    $region10: #{bilstm_tagger_forward.3} parent=5 // pred_check_branch
      %148 = sbr.rel (%p145) target = $region12
    $region11: #{bilstm_tagger_forward.3} parent=5 // pred_region
      %s149 = ssub.s32 %s10, 1
      // Predicated region
      $region13: #{bilstm_tagger_forward.3} parent=11 // pred_check
        %p150 = pneg %p31
      $region14: #{bilstm_tagger_forward.3} parent=11 // pred_check_branch
        %152 = sbr.rel (%p150) target = $region16
      $region15: #{bilstm_tagger_forward.3} parent=11 // pred_region
        _
      $region16: #{bilstm_tagger_forward.3} parent=11 // pred_fallthru
        _
    $region12: #{bilstm_tagger_forward.3} parent=5 // pred_fallthru
      _
    %p153 = scmp.lt.s32.totalorder %s10, 2
    // Predicated region
    $region17: #{bilstm_tagger_forward.3} parent=5 // pred_check
      %p154 = pneg %p153
    $region18: #{bilstm_tagger_forward.3} parent=5 // pred_check_branch
      %156 = sbr.rel (%p154) target = $region20
    $region19: #{bilstm_tagger_forward.3} parent=5 // pred_region
      // Predicated region
      $region21: #{bilstm_tagger_forward.3} parent=19 // pred_check
        %p157 = pneg %p51
      $region22: #{bilstm_tagger_forward.3} parent=19 // pred_check_branch
        %159 = sbr.rel (%p157) target = $region24
      $region23: #{bilstm_tagger_forward.3} parent=19 // pred_region
        %p160 = scmp.lt.s32.totalorder %s10, 1
        %s161 = scalar_select %p160, %s10, 1
        %s162 = smul.addr %s161, 4
        %s163 = smul.addr %s162, 4
        %s164 = scalar_lea.vmem %s1, %s163
      $region24: #{bilstm_tagger_forward.3} parent=19 // pred_fallthru
        _
      // Predicated region
      $region25: #{bilstm_tagger_forward.3} parent=19 // pred_check
        %p165 = pneg %p77
      $region26: #{bilstm_tagger_forward.3} parent=19 // pred_check_branch
        %167 = sbr.rel (%p165) target = $region28
      $region27: #{bilstm_tagger_forward.3} parent=19 // pred_region
        %p168 = scmp.lt.s32.totalorder %s10, 1
        %s169 = scalar_select %p168, %s10, 1
        %s170 = smul.addr %s169, 4
        %s171 = smul.addr %s170, 4
        %s172 = scalar_lea.vmem %s2, %s171
      $region28: #{bilstm_tagger_forward.3} parent=19 // pred_fallthru
        _
      // Predicated region
      $region29: #{bilstm_tagger_forward.3} parent=19 // pred_check
        %p173 = pneg %p103
      $region30: #{bilstm_tagger_forward.3} parent=19 // pred_check_branch
        %175 = sbr.rel (%p173) target = $region32
      $region31: #{bilstm_tagger_forward.3} parent=19 // pred_region
        %p176 = scmp.lt.s32.totalorder %s10, 1
        %s177 = scalar_select %p176, %s10, 1
        %s178 = scalar_lea.vmem %s3, %s177
      $region32: #{bilstm_tagger_forward.3} parent=19 // pred_fallthru
        _
    $region20: #{bilstm_tagger_forward.3} parent=5 // pred_fallthru
      _
    %p179 = scmp.le.s32.totalorder 1, %s10
    %p180 = scmp.lt.s32.totalorder %s10, 3
    %p181 = pnand %p179, %p180
    %p182 = pneg %p181
    // Predicated region
    $region33: #{bilstm_tagger_forward.3} parent=5 // pred_check
      _
    $region34: #{bilstm_tagger_forward.3} parent=5 // pred_check_branch
      %184 = sbr.rel (%p181) target = $region36
    $region35: #{bilstm_tagger_forward.3} parent=5 // pred_region
      %s185 = ssub.s32 %s10, 1
      %p186 = pneg %p31
      %p187 = pneg %p28
      %p188 = scmp.lt.s32.totalorder %s15, 1
      %s189 = scalar_select %p188, %s15, 1
      %s190 = smul.addr %s189, 4
      %s191 = smul.addr %s190, 4
      %s192 = scalar_lea.vmem %s1, %s191
      %p193 = pneg %p57
      %p194 = pneg %p54
      %p195 = scmp.lt.s32.totalorder %s15, 1
      %s196 = scalar_select %p195, %s15, 1
      %s197 = smul.addr %s196, 4
      %s198 = smul.addr %s197, 4
      %s199 = scalar_lea.vmem %s2, %s198
      %p200 = pneg %p83
      %p201 = pneg %p80
      %p202 = scmp.lt.s32.totalorder %s15, 1
      %s203 = scalar_select %p202, %s15, 1
      %s204 = scalar_lea.vmem %s3, %s203
      %p205 = pneg %p109
      %p206 = pneg %p106
      %p207 = pneg %p135
      %p208 = pneg %p132
      %p209 = scmp.lt.s32.totalorder %s15, 1
      %s210 = scalar_select %p209, %s15, 1
      %s211 = smul.addr %s210, 8
      %s212 = smul.addr %s211, 8
      %s213 = scalar_lea.vmem %s4, %s212
      %p214 = scmp.lt.s32.totalorder %s15, 1
      %s215 = scalar_select %p214, %s15, 1
      %s216 = smul.addr %s215, 4
      %s217 = smul.addr %s216, 4
      %s218 = scalar_lea.vmem %s1, %s217
      %p219 = scmp.lt.s32.totalorder %s15, 1
      %s220 = scalar_select %p219, %s15, 1
      %s221 = smul.addr %s220, 4
      %s222 = smul.addr %s221, 4
      %s223 = scalar_lea.vmem %s2, %s222
      %p224 = scmp.lt.s32.totalorder %s15, 1
      %s225 = scalar_select %p224, %s15, 1
      %s226 = scalar_lea.vmem %s3, %s225
      %p227 = scmp.lt.s32.totalorder %s15, 1
      %s228 = scalar_select %p227, %s15, 1
      %s229 = smul.addr %s228, 8
      %s230 = smul.addr %s229, 8
      %s231 = scalar_lea.vmem %s4, %s230
      %v233 = vld [vmem:[%s218] sm:$0xf]
      %v234 = vld [vmem:[%s218 + $0x4] sm:$0xf]
      %v235 = vld [vmem:[%s218 + $0x8] sm:$0xf]
      %v236 = vld [vmem:[%s218 + $0xc] sm:$0xf]
      %v237 = vld [vmem:[%s0] sm:$0xff]
      %v238 = vld [vmem:[%s0 + $0x8] sm:$0xff]
      %v239 = vld [vmem:[%s0 + $0x10] sm:$0xff]
      %v240 = vld [vmem:[%s0 + $0x18] sm:$0xff]
      %v241 = vld [vmem:[%s0 + $0x20] sm:$0xff]
      %v242 = vld [vmem:[%s0 + $0x28] sm:$0xff]
      %v243 = vld [vmem:[%s0 + $0x30] sm:$0xff]
      %v244 = vld [vmem:[%s0 + $0x38] sm:$0xff]
      %v245 = vpack.c.bf16 %v238, %v237
      %v246 = vpack.c.bf16 %v240, %v239
      %v247 = vpack.c.bf16 %v242, %v241
      %v248 = vpack.c.bf16 %v244, %v243
      %v249 = vld [vmem:[%s226] sm:$0x1]
      %v251 = vperm.slane %v249, 0
      %v257 = vunpack.c.l.b16 %v233
      %v258 = vunpack.c.l.b16 %v234
      %v259 = vunpack.c.l.b16 %v235
      %v260 = vunpack.c.l.b16 %v236
      %v261 = vpack.c.b16 %v258, %v257
      %v262 = vpack.c.b16 %v260, %v259
      %vm265 = vcmask 261120
      %v267 = vsel %vm265, %v245, 0
      %v270 = vsel %vm265, %v246, 0
      %v273 = vsel %vm265, %v247, 0
      %v276 = vsel %vm265, %v248, 0
      %278 = vmatpush.bf16.msra.mxu0 0
      %279 = vmatpush.bf16.msra.mxu0 0
      %280 = vmatpush.bf16.msra.mxu0 0
      %281 = vmatpush.bf16.msra.mxu0 0
      %282 = vmatpush.bf16.msra.mxu0 0
      %283 = vmatpush.bf16.msra.mxu0 0
      %284 = vmatpush.bf16.msra.mxu0 %v262
      %285 = vmatpush.bf16.msra.mxu0 %v261
      %286 = vmatmul.bf16.gmra.mxu0 %v267
      %v287 = vpop.f32.mrf.mxu0
      %v288 = vadd.f32 %v251, %v287
      %v289 = vpop.f32.mrf.mxu0
      %v290 = vadd.f32 %v251, %v289
      %291 = vmatmul.bf16.gmra.mxu0 %v270
      %v292 = vpop.f32.mrf.mxu0
      %v293 = vadd.f32 %v251, %v292
      %v294 = vpop.f32.mrf.mxu0
      %v295 = vadd.f32 %v251, %v294
      %296 = vmatmul.bf16.gmra.mxu0 %v273
      %v297 = vpop.f32.mrf.mxu0
      %v298 = vadd.f32 %v251, %v297
      %v299 = vpop.f32.mrf.mxu0
      %v300 = vadd.f32 %v251, %v299
      %301 = vmatmul.bf16.gmra.mxu0 %v276
      %v302 = vpop.f32.mrf.mxu0
      %v303 = vadd.f32 %v251, %v302
      %v304 = vpop.f32.mrf.mxu0
      %v305 = vadd.f32 %v251, %v304
      %306 = vdwg.mxu0
      %307 = vst [vmem:[#allocation2] sm:$0xff] %v288
      %308 = vst [vmem:[#allocation2 + $0x8] sm:$0xff] %v290
      %309 = vst [vmem:[#allocation2 + $0x10] sm:$0xff] %v293
      %310 = vst [vmem:[#allocation2 + $0x18] sm:$0xff] %v295
      %311 = vst [vmem:[#allocation2 + $0x20] sm:$0xff] %v298
      %312 = vst [vmem:[#allocation2 + $0x28] sm:$0xff] %v300
      %313 = vst [vmem:[#allocation2 + $0x30] sm:$0xff] %v303
      %314 = vst [vmem:[#allocation2 + $0x38] sm:$0xff] %v305
      %v315 = vld [vmem:[%s223] sm:$0xf]
      %v316 = vld [vmem:[%s223 + $0x4] sm:$0xf]
      %v317 = vld [vmem:[%s223 + $0x8] sm:$0xf]
      %v318 = vld [vmem:[%s223 + $0xc] sm:$0xf]
      %p319 = scmp.eq.s32.totalorder %s15, 0
      // Predicated region
      $region37: #{bilstm_tagger_forward.3} parent=35 // pred_check
        %p320 = pneg %p319
      $region38: #{bilstm_tagger_forward.3} parent=35 // pred_check_branch
        %322 = sbr.rel (%p320) target = $region40
      $region39: #{bilstm_tagger_forward.3} parent=35 // pred_region
        %v323 = vld [vmem:[#allocation2] sm:$0xff]
        %v328 = vunpack.c.l.b16 %v315
        %v329 = vunpack.c.l.b16 %v316
        %v330 = vunpack.c.l.b16 %v317
        %v331 = vunpack.c.l.b16 %v318
        %v332 = vpack.c.b16 %v329, %v328
        %v333 = vpack.c.b16 %v331, %v330
        %v337 = vsel %vm265, 0, 0
        %339 = vmatpush.bf16.msra.mxu0 0
        %340 = vmatpush.bf16.msra.mxu0 0
        %341 = vmatpush.bf16.msra.mxu0 0
        %342 = vmatpush.bf16.msra.mxu0 0
        %343 = vmatpush.bf16.msra.mxu0 0
        %344 = vmatpush.bf16.msra.mxu0 0
        %345 = vmatpush.bf16.msra.mxu0 %v333
        %346 = vmatpush.bf16.msra.mxu0 %v332
        %347 = vmatmul.bf16.gmra.mxu0 %v337
        %v348 = vpop.f32.mrf.mxu0
        %v349 = vadd.f32 0.0, %v348
        %v350 = vpop.f32.mrf.mxu0
        %351 = vdwg.mxu0
        %v352 = vadd.f32 %v323, %v349
        %v353 = vxor.u32 %v352, 2147483648
        %v354 = vmul.f32 %v353, 1.442695
        %v355 = vpow.pop %v354
        %v356 = vadd.f32 %v355, 1.0
        %v357 = vrcp.pop %v356
        %v358 = vmul.f32 %v356, %v357
        %v359 = vsub.f32 1.0, %v358
        %v360 = vmul.f32 %v357, %v359
        %v361 = vadd.f32 %v357, %v360
        %vm362 = vweird.f32 %v356
        %vm363 = vweird.f32 %v357
        %vm364 = vmor %vm362, %vm363
        %v365 = vsel %vm364, %v357, %v361
        %v366 = vand.u32 2147483647, %v356
        %vm367 = vcmp.eq.f32.partialorder %v366, 8.507059e+37
        %v368 = vand.u32 %v356, 2147483648
        %v369 = vor.u32 1.1754944e-38, %v368
        %v370 = vsel %vm367, %v369, %v365
        %v371 = vmul.f32 1.0, %v370
        %v372 = vtanh.pop %v352
        %v373 = vmul.f32 %v371, 0.0
        %375 = vrot.lane.b32.xlu0 %v372, 96
        %v376 = vpop.permute.xlu0 %375
        %v378 = vmul.f32 %v371, %v376
        %380 = vrot.lane.b32.xlu0 %v378, 96
        %v381 = vpop.permute.xlu0 %380
        %v383 = vadd.f32 %v373, %v381
        %v384 = vtanh.pop %v383
        %386 = vrot.lane.b32.xlu0 %v384, 96
        %v387 = vpop.permute.xlu0 %386
        %v389 = vmul.f32 %v371, %v387
        %391 = vrot.lane.b32.xlu0 %v389, 32
        %v392 = vpop.permute.xlu0 %391
        %394 = vst.msk [vmem:[%s231] sm:$0xff] %vm265, %v392
        %v395 = vld [vmem:[#allocation2 + $0x8] sm:$0xff]
        %v396 = vpack.c.bf16 %v389, %v389
        %398 = vrot.lane.b32.xlu0 %v396, 32
        %v399 = vpop.permute.xlu0 %398
        %v401 = vsel %vm265, %v399, 0
        %403 = vmatpush.bf16.msra.mxu0 0
        %404 = vmatpush.bf16.msra.mxu0 0
        %405 = vmatpush.bf16.msra.mxu0 0
        %406 = vmatpush.bf16.msra.mxu0 0
        %407 = vmatpush.bf16.msra.mxu0 0
        %408 = vmatpush.bf16.msra.mxu0 0
        %409 = vmatpush.bf16.msra.mxu0 %v333
        %410 = vmatpush.bf16.msra.mxu0 %v332
        %411 = vmatmul.bf16.gmra.mxu0 %v401
        %v412 = vpop.f32.mrf.mxu0
        %v413 = vadd.f32 0.0, %v412
        %v414 = vpop.f32.mrf.mxu0
        %415 = vdwg.mxu0
        %v416 = vadd.f32 %v395, %v413
        %v417 = vxor.u32 %v416, 2147483648
        %v418 = vmul.f32 %v417, 1.442695
        %v419 = vpow.pop %v418
        %v420 = vadd.f32 %v419, 1.0
        %v421 = vrcp.pop %v420
        %v422 = vmul.f32 %v420, %v421
        %v423 = vsub.f32 1.0, %v422
        %v424 = vmul.f32 %v421, %v423
        %v425 = vadd.f32 %v421, %v424
        %vm426 = vweird.f32 %v420
        %vm427 = vweird.f32 %v421
        %vm428 = vmor %vm426, %vm427
        %v429 = vsel %vm428, %v421, %v425
        %v430 = vand.u32 2147483647, %v420
        %vm431 = vcmp.eq.f32.partialorder %v430, 8.507059e+37
        %v432 = vand.u32 %v420, 2147483648
        %v433 = vor.u32 1.1754944e-38, %v432
        %v434 = vsel %vm431, %v433, %v429
        %v435 = vmul.f32 1.0, %v434
        %v436 = vtanh.pop %v416
        %v437 = vmul.f32 %v435, %v383
        %439 = vrot.lane.b32.xlu0 %v436, 96
        %v440 = vpop.permute.xlu0 %439
        %v442 = vmul.f32 %v435, %v440
        %444 = vrot.lane.b32.xlu0 %v442, 96
        %v445 = vpop.permute.xlu0 %444
        %v447 = vadd.f32 %v437, %v445
        %v448 = vtanh.pop %v447
        %450 = vrot.lane.b32.xlu0 %v448, 96
        %v451 = vpop.permute.xlu0 %450
        %v453 = vmul.f32 %v435, %v451
        %455 = vrot.lane.b32.xlu0 %v453, 32
        %v456 = vpop.permute.xlu0 %455
        %458 = vst.msk [vmem:[%s231 + $0x8] sm:$0xff] %vm265, %v456
        %v459 = vld [vmem:[#allocation2 + $0x10] sm:$0xff]
        %v460 = vpack.c.bf16 %v453, %v453
        %462 = vrot.lane.b32.xlu0 %v460, 32
        %v463 = vpop.permute.xlu0 %462
        %v465 = vsel %vm265, %v463, 0
        %467 = vmatpush.bf16.msra.mxu0 0
        %468 = vmatpush.bf16.msra.mxu0 0
        %469 = vmatpush.bf16.msra.mxu0 0
        %470 = vmatpush.bf16.msra.mxu0 0
        %471 = vmatpush.bf16.msra.mxu0 0
        %472 = vmatpush.bf16.msra.mxu0 0
        %473 = vmatpush.bf16.msra.mxu0 %v333
        %474 = vmatpush.bf16.msra.mxu0 %v332
        %475 = vmatmul.bf16.gmra.mxu0 %v465
        %v476 = vpop.f32.mrf.mxu0
        %v477 = vadd.f32 0.0, %v476
        %v478 = vpop.f32.mrf.mxu0
        %479 = vdwg.mxu0
        %v480 = vadd.f32 %v459, %v477
        %v481 = vxor.u32 %v480, 2147483648
        %v482 = vmul.f32 %v481, 1.442695
        %v483 = vpow.pop %v482
        %v484 = vadd.f32 %v483, 1.0
        %v485 = vrcp.pop %v484
        %v486 = vmul.f32 %v484, %v485
        %v487 = vsub.f32 1.0, %v486
        %v488 = vmul.f32 %v485, %v487
        %v489 = vadd.f32 %v485, %v488
        %vm490 = vweird.f32 %v484
        %vm491 = vweird.f32 %v485
        %vm492 = vmor %vm490, %vm491
        %v493 = vsel %vm492, %v485, %v489
        %v494 = vand.u32 2147483647, %v484
        %vm495 = vcmp.eq.f32.partialorder %v494, 8.507059e+37
        %v496 = vand.u32 %v484, 2147483648
        %v497 = vor.u32 1.1754944e-38, %v496
        %v498 = vsel %vm495, %v497, %v493
        %v499 = vmul.f32 1.0, %v498
        %v500 = vtanh.pop %v480
        %v501 = vmul.f32 %v499, %v447
        %503 = vrot.lane.b32.xlu0 %v500, 96
        %v504 = vpop.permute.xlu0 %503
        %v506 = vmul.f32 %v499, %v504
        %508 = vrot.lane.b32.xlu0 %v506, 96
        %v509 = vpop.permute.xlu0 %508
        %v511 = vadd.f32 %v501, %v509
        %v512 = vtanh.pop %v511
        %514 = vrot.lane.b32.xlu0 %v512, 96
        %v515 = vpop.permute.xlu0 %514
        %v517 = vmul.f32 %v499, %v515
        %519 = vrot.lane.b32.xlu0 %v517, 32
        %v520 = vpop.permute.xlu0 %519
        %522 = vst.msk [vmem:[%s231 + $0x10] sm:$0xff] %vm265, %v520
        %v523 = vld [vmem:[#allocation2 + $0x18] sm:$0xff]
        %v524 = vpack.c.bf16 %v517, %v517
        %526 = vrot.lane.b32.xlu0 %v524, 32
        %v527 = vpop.permute.xlu0 %526
        %v529 = vsel %vm265, %v527, 0
        %531 = vmatpush.bf16.msra.mxu0 0
        %532 = vmatpush.bf16.msra.mxu0 0
        %533 = vmatpush.bf16.msra.mxu0 0
        %534 = vmatpush.bf16.msra.mxu0 0
        %535 = vmatpush.bf16.msra.mxu0 0
        %536 = vmatpush.bf16.msra.mxu0 0
        %537 = vmatpush.bf16.msra.mxu0 %v333
        %538 = vmatpush.bf16.msra.mxu0 %v332
        %539 = vmatmul.bf16.gmra.mxu0 %v529
        %v540 = vpop.f32.mrf.mxu0
        %v541 = vadd.f32 0.0, %v540
        %v542 = vpop.f32.mrf.mxu0
        %543 = vdwg.mxu0
        %v544 = vadd.f32 %v523, %v541
        %v545 = vxor.u32 %v544, 2147483648
        %v546 = vmul.f32 %v545, 1.442695
        %v547 = vpow.pop %v546
        %v548 = vadd.f32 %v547, 1.0
        %v549 = vrcp.pop %v548
        %v550 = vmul.f32 %v548, %v549
        %v551 = vsub.f32 1.0, %v550
        %v552 = vmul.f32 %v549, %v551
        %v553 = vadd.f32 %v549, %v552
        %vm554 = vweird.f32 %v548
        %vm555 = vweird.f32 %v549
        %vm556 = vmor %vm554, %vm555
        %v557 = vsel %vm556, %v549, %v553
        %v558 = vand.u32 2147483647, %v548
        %vm559 = vcmp.eq.f32.partialorder %v558, 8.507059e+37
        %v560 = vand.u32 %v548, 2147483648
        %v561 = vor.u32 1.1754944e-38, %v560
        %v562 = vsel %vm559, %v561, %v557
        %v563 = vmul.f32 1.0, %v562
        %v564 = vtanh.pop %v544
        %v565 = vmul.f32 %v563, %v511
        %567 = vrot.lane.b32.xlu0 %v564, 96
        %v568 = vpop.permute.xlu0 %567
        %v570 = vmul.f32 %v563, %v568
        %572 = vrot.lane.b32.xlu0 %v570, 96
        %v573 = vpop.permute.xlu0 %572
        %v575 = vadd.f32 %v565, %v573
        %v576 = vtanh.pop %v575
        %578 = vrot.lane.b32.xlu0 %v576, 96
        %v579 = vpop.permute.xlu0 %578
        %v581 = vmul.f32 %v563, %v579
        %583 = vrot.lane.b32.xlu0 %v581, 32
        %v584 = vpop.permute.xlu0 %583
        %586 = vst.msk [vmem:[%s231 + $0x18] sm:$0xff] %vm265, %v584
        %v587 = vld [vmem:[#allocation2 + $0x20] sm:$0xff]
        %v588 = vpack.c.bf16 %v581, %v581
        %590 = vrot.lane.b32.xlu0 %v588, 32
        %v591 = vpop.permute.xlu0 %590
        %v593 = vsel %vm265, %v591, 0
        %595 = vmatpush.bf16.msra.mxu0 0
        %596 = vmatpush.bf16.msra.mxu0 0
        %597 = vmatpush.bf16.msra.mxu0 0
        %598 = vmatpush.bf16.msra.mxu0 0
        %599 = vmatpush.bf16.msra.mxu0 0
        %600 = vmatpush.bf16.msra.mxu0 0
        %601 = vmatpush.bf16.msra.mxu0 %v333
        %602 = vmatpush.bf16.msra.mxu0 %v332
        %603 = vmatmul.bf16.gmra.mxu0 %v593
        %v604 = vpop.f32.mrf.mxu0
        %v605 = vadd.f32 0.0, %v604
        %v606 = vpop.f32.mrf.mxu0
        %607 = vdwg.mxu0
        %v608 = vadd.f32 %v587, %v605
        %v609 = vxor.u32 %v608, 2147483648
        %v610 = vmul.f32 %v609, 1.442695
        %v611 = vpow.pop %v610
        %v612 = vadd.f32 %v611, 1.0
        %v613 = vrcp.pop %v612
        %v614 = vmul.f32 %v612, %v613
        %v615 = vsub.f32 1.0, %v614
        %v616 = vmul.f32 %v613, %v615
        %v617 = vadd.f32 %v613, %v616
        %vm618 = vweird.f32 %v612
        %vm619 = vweird.f32 %v613
        %vm620 = vmor %vm618, %vm619
        %v621 = vsel %vm620, %v613, %v617
        %v622 = vand.u32 2147483647, %v612
        %vm623 = vcmp.eq.f32.partialorder %v622, 8.507059e+37
        %v624 = vand.u32 %v612, 2147483648
        %v625 = vor.u32 1.1754944e-38, %v624
        %v626 = vsel %vm623, %v625, %v621
        %v627 = vmul.f32 1.0, %v626
        %v628 = vtanh.pop %v608
        %v629 = vmul.f32 %v627, %v575
        %631 = vrot.lane.b32.xlu0 %v628, 96
        %v632 = vpop.permute.xlu0 %631
        %v634 = vmul.f32 %v627, %v632
        %636 = vrot.lane.b32.xlu0 %v634, 96
        %v637 = vpop.permute.xlu0 %636
        %v639 = vadd.f32 %v629, %v637
        %v640 = vtanh.pop %v639
        %642 = vrot.lane.b32.xlu0 %v640, 96
        %v643 = vpop.permute.xlu0 %642
        %v645 = vmul.f32 %v627, %v643
        %647 = vrot.lane.b32.xlu0 %v645, 32
        %v648 = vpop.permute.xlu0 %647
        %650 = vst.msk [vmem:[%s231 + $0x20] sm:$0xff] %vm265, %v648
        %v651 = vld [vmem:[#allocation2 + $0x28] sm:$0xff]
        %v652 = vpack.c.bf16 %v645, %v645
        %654 = vrot.lane.b32.xlu0 %v652, 32
        %v655 = vpop.permute.xlu0 %654
        %v657 = vsel %vm265, %v655, 0
        %659 = vmatpush.bf16.msra.mxu0 0
        %660 = vmatpush.bf16.msra.mxu0 0
        %661 = vmatpush.bf16.msra.mxu0 0
        %662 = vmatpush.bf16.msra.mxu0 0
        %663 = vmatpush.bf16.msra.mxu0 0
        %664 = vmatpush.bf16.msra.mxu0 0
        %665 = vmatpush.bf16.msra.mxu0 %v333
        %666 = vmatpush.bf16.msra.mxu0 %v332
        %667 = vmatmul.bf16.gmra.mxu0 %v657
        %v668 = vpop.f32.mrf.mxu0
        %v669 = vadd.f32 0.0, %v668
        %v670 = vpop.f32.mrf.mxu0
        %671 = vdwg.mxu0
        %v672 = vadd.f32 %v651, %v669
        %v673 = vxor.u32 %v672, 2147483648
        %v674 = vmul.f32 %v673, 1.442695
        %v675 = vpow.pop %v674
        %v676 = vadd.f32 %v675, 1.0
        %v677 = vrcp.pop %v676
        %v678 = vmul.f32 %v676, %v677
        %v679 = vsub.f32 1.0, %v678
        %v680 = vmul.f32 %v677, %v679
        %v681 = vadd.f32 %v677, %v680
        %vm682 = vweird.f32 %v676
        %vm683 = vweird.f32 %v677
        %vm684 = vmor %vm682, %vm683
        %v685 = vsel %vm684, %v677, %v681
        %v686 = vand.u32 2147483647, %v676
        %vm687 = vcmp.eq.f32.partialorder %v686, 8.507059e+37
        %v688 = vand.u32 %v676, 2147483648
        %v689 = vor.u32 1.1754944e-38, %v688
        %v690 = vsel %vm687, %v689, %v685
        %v691 = vmul.f32 1.0, %v690
        %v692 = vtanh.pop %v672
        %v693 = vmul.f32 %v691, %v639
        %695 = vrot.lane.b32.xlu0 %v692, 96
        %v696 = vpop.permute.xlu0 %695
        %v698 = vmul.f32 %v691, %v696
        %700 = vrot.lane.b32.xlu0 %v698, 96
        %v701 = vpop.permute.xlu0 %700
        %v703 = vadd.f32 %v693, %v701
        %v704 = vtanh.pop %v703
        %706 = vrot.lane.b32.xlu0 %v704, 96
        %v707 = vpop.permute.xlu0 %706
        %v709 = vmul.f32 %v691, %v707
        %711 = vrot.lane.b32.xlu0 %v709, 32
        %v712 = vpop.permute.xlu0 %711
        %714 = vst.msk [vmem:[%s231 + $0x28] sm:$0xff] %vm265, %v712
        %v715 = vld [vmem:[#allocation2 + $0x30] sm:$0xff]
        %v716 = vpack.c.bf16 %v709, %v709
        %718 = vrot.lane.b32.xlu0 %v716, 32
        %v719 = vpop.permute.xlu0 %718
        %v721 = vsel %vm265, %v719, 0
        %723 = vmatpush.bf16.msra.mxu0 0
        %724 = vmatpush.bf16.msra.mxu0 0
        %725 = vmatpush.bf16.msra.mxu0 0
        %726 = vmatpush.bf16.msra.mxu0 0
        %727 = vmatpush.bf16.msra.mxu0 0
        %728 = vmatpush.bf16.msra.mxu0 0
        %729 = vmatpush.bf16.msra.mxu0 %v333
        %730 = vmatpush.bf16.msra.mxu0 %v332
        %731 = vmatmul.bf16.gmra.mxu0 %v721
        %v732 = vpop.f32.mrf.mxu0
        %v733 = vadd.f32 0.0, %v732
        %v734 = vpop.f32.mrf.mxu0
        %735 = vdwg.mxu0
        %v736 = vadd.f32 %v715, %v733
        %v737 = vxor.u32 %v736, 2147483648
        %v738 = vmul.f32 %v737, 1.442695
        %v739 = vpow.pop %v738
        %v740 = vadd.f32 %v739, 1.0
        %v741 = vrcp.pop %v740
        %v742 = vmul.f32 %v740, %v741
        %v743 = vsub.f32 1.0, %v742
        %v744 = vmul.f32 %v741, %v743
        %v745 = vadd.f32 %v741, %v744
        %vm746 = vweird.f32 %v740
        %vm747 = vweird.f32 %v741
        %vm748 = vmor %vm746, %vm747
        %v749 = vsel %vm748, %v741, %v745
        %v750 = vand.u32 2147483647, %v740
        %vm751 = vcmp.eq.f32.partialorder %v750, 8.507059e+37
        %v752 = vand.u32 %v740, 2147483648
        %v753 = vor.u32 1.1754944e-38, %v752
        %v754 = vsel %vm751, %v753, %v749
        %v755 = vmul.f32 1.0, %v754
        %v756 = vtanh.pop %v736
        %v757 = vmul.f32 %v755, %v703
        %759 = vrot.lane.b32.xlu0 %v756, 96
        %v760 = vpop.permute.xlu0 %759
        %v762 = vmul.f32 %v755, %v760
        %764 = vrot.lane.b32.xlu0 %v762, 96
        %v765 = vpop.permute.xlu0 %764
        %v767 = vadd.f32 %v757, %v765
        %v768 = vtanh.pop %v767
        %770 = vrot.lane.b32.xlu0 %v768, 96
        %v771 = vpop.permute.xlu0 %770
        %v773 = vmul.f32 %v755, %v771
        %775 = vrot.lane.b32.xlu0 %v773, 32
        %v776 = vpop.permute.xlu0 %775
        %778 = vst.msk [vmem:[%s231 + $0x30] sm:$0xff] %vm265, %v776
        %v779 = vld [vmem:[#allocation2 + $0x38] sm:$0xff]
        %v780 = vpack.c.bf16 %v773, %v773
        %782 = vrot.lane.b32.xlu0 %v780, 32
        %v783 = vpop.permute.xlu0 %782
        %v785 = vsel %vm265, %v783, 0
        %787 = vmatpush.bf16.msra.mxu0 0
        %788 = vmatpush.bf16.msra.mxu0 0
        %789 = vmatpush.bf16.msra.mxu0 0
        %790 = vmatpush.bf16.msra.mxu0 0
        %791 = vmatpush.bf16.msra.mxu0 0
        %792 = vmatpush.bf16.msra.mxu0 0
        %793 = vmatpush.bf16.msra.mxu0 %v333
        %794 = vmatpush.bf16.msra.mxu0 %v332
        %795 = vmatmul.bf16.gmra.mxu0 %v785
        %v796 = vpop.f32.mrf.mxu0
        %v797 = vadd.f32 0.0, %v796
        %v798 = vpop.f32.mrf.mxu0
        %799 = vdwg.mxu0
        %v800 = vadd.f32 %v779, %v797
        %v801 = vxor.u32 %v800, 2147483648
        %v802 = vmul.f32 %v801, 1.442695
        %v803 = vpow.pop %v802
        %v804 = vadd.f32 %v803, 1.0
        %v805 = vrcp.pop %v804
        %v806 = vmul.f32 %v804, %v805
        %v807 = vsub.f32 1.0, %v806
        %v808 = vmul.f32 %v805, %v807
        %v809 = vadd.f32 %v805, %v808
        %vm810 = vweird.f32 %v804
        %vm811 = vweird.f32 %v805
        %vm812 = vmor %vm810, %vm811
        %v813 = vsel %vm812, %v805, %v809
        %v814 = vand.u32 2147483647, %v804
        %vm815 = vcmp.eq.f32.partialorder %v814, 8.507059e+37
        %v816 = vand.u32 %v804, 2147483648
        %v817 = vor.u32 1.1754944e-38, %v816
        %v818 = vsel %vm815, %v817, %v813
        %v819 = vmul.f32 1.0, %v818
        %v820 = vtanh.pop %v800
        %v821 = vmul.f32 %v819, %v767
        %823 = vrot.lane.b32.xlu0 %v820, 96
        %v824 = vpop.permute.xlu0 %823
        %v826 = vmul.f32 %v819, %v824
        %828 = vrot.lane.b32.xlu0 %v826, 96
        %v829 = vpop.permute.xlu0 %828
        %v831 = vadd.f32 %v821, %v829
        %v832 = vtanh.pop %v831
        %834 = vrot.lane.b32.xlu0 %v832, 96
        %v835 = vpop.permute.xlu0 %834
        %v837 = vmul.f32 %v819, %v835
        %839 = vrot.lane.b32.xlu0 %v837, 32
        %v840 = vpop.permute.xlu0 %839
        %842 = vst.msk [vmem:[%s231 + $0x38] sm:$0xff] %vm265, %v840
      $region40: #{bilstm_tagger_forward.3} parent=35 // pred_fallthru
        _
      %p843 = scmp.eq.s32.totalorder %s15, 1
      // Predicated region
      $region41: #{bilstm_tagger_forward.3} parent=35 // pred_check
        %p844 = pneg %p843
      $region42: #{bilstm_tagger_forward.3} parent=35 // pred_check_branch
        %846 = sbr.rel (%p844) target = $region44
      $region43: #{bilstm_tagger_forward.3} parent=35 // pred_region
        %v847 = vld [vmem:[#allocation2 + $0x38] sm:$0xff]
        %v852 = vunpack.c.l.b16 %v315
        %v853 = vunpack.c.l.b16 %v316
        %v854 = vunpack.c.l.b16 %v317
        %v855 = vunpack.c.l.b16 %v318
        %v856 = vpack.c.b16 %v853, %v852
        %v857 = vpack.c.b16 %v855, %v854
        %v861 = vsel %vm265, 0, 0
        %863 = vmatpush.bf16.msra.mxu0 0
        %864 = vmatpush.bf16.msra.mxu0 0
        %865 = vmatpush.bf16.msra.mxu0 0
        %866 = vmatpush.bf16.msra.mxu0 0
        %867 = vmatpush.bf16.msra.mxu0 0
        %868 = vmatpush.bf16.msra.mxu0 0
        %869 = vmatpush.bf16.msra.mxu0 %v857
        %870 = vmatpush.bf16.msra.mxu0 %v856
        %871 = vmatmul.bf16.gmra.mxu0 %v861
        %v872 = vpop.f32.mrf.mxu0
        %v873 = vadd.f32 0.0, %v872
        %v874 = vpop.f32.mrf.mxu0
        %875 = vdwg.mxu0
        %v876 = vadd.f32 %v847, %v873
        %v877 = vxor.u32 %v876, 2147483648
        %v878 = vmul.f32 %v877, 1.442695
        %v879 = vpow.pop %v878
        %v880 = vadd.f32 %v879, 1.0
        %v881 = vrcp.pop %v880
        %v882 = vmul.f32 %v880, %v881
        %v883 = vsub.f32 1.0, %v882
        %v884 = vmul.f32 %v881, %v883
        %v885 = vadd.f32 %v881, %v884
        %vm886 = vweird.f32 %v880
        %vm887 = vweird.f32 %v881
        %vm888 = vmor %vm886, %vm887
        %v889 = vsel %vm888, %v881, %v885
        %v890 = vand.u32 2147483647, %v880
        %vm891 = vcmp.eq.f32.partialorder %v890, 8.507059e+37
        %v892 = vand.u32 %v880, 2147483648
        %v893 = vor.u32 1.1754944e-38, %v892
        %v894 = vsel %vm891, %v893, %v889
        %v895 = vmul.f32 1.0, %v894
        %v896 = vtanh.pop %v876
        %v897 = vmul.f32 %v895, 0.0
        %899 = vrot.lane.b32.xlu0 %v896, 96
        %v900 = vpop.permute.xlu0 %899
        %v902 = vmul.f32 %v895, %v900
        %904 = vrot.lane.b32.xlu0 %v902, 96
        %v905 = vpop.permute.xlu0 %904
        %v907 = vadd.f32 %v897, %v905
        %v908 = vtanh.pop %v907
        %910 = vrot.lane.b32.xlu0 %v908, 96
        %v911 = vpop.permute.xlu0 %910
        %v913 = vmul.f32 %v895, %v911
        %915 = vrot.lane.b32.xlu0 %v913, 32
        %v916 = vpop.permute.xlu0 %915
        %918 = vst.msk [vmem:[%s231 + $0x38] sm:$0xff] %vm265, %v916
        %v919 = vld [vmem:[#allocation2 + $0x30] sm:$0xff]
        %v920 = vpack.c.bf16 %v913, %v913
        %922 = vrot.lane.b32.xlu0 %v920, 32
        %v923 = vpop.permute.xlu0 %922
        %v925 = vsel %vm265, %v923, 0
        %927 = vmatpush.bf16.msra.mxu0 0
        %928 = vmatpush.bf16.msra.mxu0 0
        %929 = vmatpush.bf16.msra.mxu0 0
        %930 = vmatpush.bf16.msra.mxu0 0
        %931 = vmatpush.bf16.msra.mxu0 0
        %932 = vmatpush.bf16.msra.mxu0 0
        %933 = vmatpush.bf16.msra.mxu0 %v857
        %934 = vmatpush.bf16.msra.mxu0 %v856
        %935 = vmatmul.bf16.gmra.mxu0 %v925
        %v936 = vpop.f32.mrf.mxu0
        %v937 = vadd.f32 0.0, %v936
        %v938 = vpop.f32.mrf.mxu0
        %939 = vdwg.mxu0
        %v940 = vadd.f32 %v919, %v937
        %v941 = vxor.u32 %v940, 2147483648
        %v942 = vmul.f32 %v941, 1.442695
        %v943 = vpow.pop %v942
        %v944 = vadd.f32 %v943, 1.0
        %v945 = vrcp.pop %v944
        %v946 = vmul.f32 %v944, %v945
        %v947 = vsub.f32 1.0, %v946
        %v948 = vmul.f32 %v945, %v947
        %v949 = vadd.f32 %v945, %v948
        %vm950 = vweird.f32 %v944
        %vm951 = vweird.f32 %v945
        %vm952 = vmor %vm950, %vm951
        %v953 = vsel %vm952, %v945, %v949
        %v954 = vand.u32 2147483647, %v944
        %vm955 = vcmp.eq.f32.partialorder %v954, 8.507059e+37
        %v956 = vand.u32 %v944, 2147483648
        %v957 = vor.u32 1.1754944e-38, %v956
        %v958 = vsel %vm955, %v957, %v953
        %v959 = vmul.f32 1.0, %v958
        %v960 = vtanh.pop %v940
        %v961 = vmul.f32 %v959, %v907
        %963 = vrot.lane.b32.xlu0 %v960, 96
        %v964 = vpop.permute.xlu0 %963
        %v966 = vmul.f32 %v959, %v964
        %968 = vrot.lane.b32.xlu0 %v966, 96
        %v969 = vpop.permute.xlu0 %968
        %v971 = vadd.f32 %v961, %v969
        %v972 = vtanh.pop %v971
        %974 = vrot.lane.b32.xlu0 %v972, 96
        %v975 = vpop.permute.xlu0 %974
        %v977 = vmul.f32 %v959, %v975
        %979 = vrot.lane.b32.xlu0 %v977, 32
        %v980 = vpop.permute.xlu0 %979
        %982 = vst.msk [vmem:[%s231 + $0x30] sm:$0xff] %vm265, %v980
        %v983 = vld [vmem:[#allocation2 + $0x28] sm:$0xff]
        %v984 = vpack.c.bf16 %v977, %v977
        %986 = vrot.lane.b32.xlu0 %v984, 32
        %v987 = vpop.permute.xlu0 %986
        %v989 = vsel %vm265, %v987, 0
        %991 = vmatpush.bf16.msra.mxu0 0
        %992 = vmatpush.bf16.msra.mxu0 0
        %993 = vmatpush.bf16.msra.mxu0 0
        %994 = vmatpush.bf16.msra.mxu0 0
        %995 = vmatpush.bf16.msra.mxu0 0
        %996 = vmatpush.bf16.msra.mxu0 0
        %997 = vmatpush.bf16.msra.mxu0 %v857
        %998 = vmatpush.bf16.msra.mxu0 %v856
        %999 = vmatmul.bf16.gmra.mxu0 %v989
        %v1000 = vpop.f32.mrf.mxu0
        %v1001 = vadd.f32 0.0, %v1000
        %v1002 = vpop.f32.mrf.mxu0
        %1003 = vdwg.mxu0
        %v1004 = vadd.f32 %v983, %v1001
        %v1005 = vxor.u32 %v1004, 2147483648
        %v1006 = vmul.f32 %v1005, 1.442695
        %v1007 = vpow.pop %v1006
        %v1008 = vadd.f32 %v1007, 1.0
        %v1009 = vrcp.pop %v1008
        %v1010 = vmul.f32 %v1008, %v1009
        %v1011 = vsub.f32 1.0, %v1010
        %v1012 = vmul.f32 %v1009, %v1011
        %v1013 = vadd.f32 %v1009, %v1012
        %vm1014 = vweird.f32 %v1008
        %vm1015 = vweird.f32 %v1009
        %vm1016 = vmor %vm1014, %vm1015
        %v1017 = vsel %vm1016, %v1009, %v1013
        %v1018 = vand.u32 2147483647, %v1008
        %vm1019 = vcmp.eq.f32.partialorder %v1018, 8.507059e+37
        %v1020 = vand.u32 %v1008, 2147483648
        %v1021 = vor.u32 1.1754944e-38, %v1020
        %v1022 = vsel %vm1019, %v1021, %v1017
        %v1023 = vmul.f32 1.0, %v1022
        %v1024 = vtanh.pop %v1004
        %v1025 = vmul.f32 %v1023, %v971
        %1027 = vrot.lane.b32.xlu0 %v1024, 96
        %v1028 = vpop.permute.xlu0 %1027
        %v1030 = vmul.f32 %v1023, %v1028
        %1032 = vrot.lane.b32.xlu0 %v1030, 96
        %v1033 = vpop.permute.xlu0 %1032
        %v1035 = vadd.f32 %v1025, %v1033
        %v1036 = vtanh.pop %v1035
        %1038 = vrot.lane.b32.xlu0 %v1036, 96
        %v1039 = vpop.permute.xlu0 %1038
        %v1041 = vmul.f32 %v1023, %v1039
        %1043 = vrot.lane.b32.xlu0 %v1041, 32
        %v1044 = vpop.permute.xlu0 %1043
        %1046 = vst.msk [vmem:[%s231 + $0x28] sm:$0xff] %vm265, %v1044
        %v1047 = vld [vmem:[#allocation2 + $0x20] sm:$0xff]
        %v1048 = vpack.c.bf16 %v1041, %v1041
        %1050 = vrot.lane.b32.xlu0 %v1048, 32
        %v1051 = vpop.permute.xlu0 %1050
        %v1053 = vsel %vm265, %v1051, 0
        %1055 = vmatpush.bf16.msra.mxu0 0
        %1056 = vmatpush.bf16.msra.mxu0 0
        %1057 = vmatpush.bf16.msra.mxu0 0
        %1058 = vmatpush.bf16.msra.mxu0 0
        %1059 = vmatpush.bf16.msra.mxu0 0
        %1060 = vmatpush.bf16.msra.mxu0 0
        %1061 = vmatpush.bf16.msra.mxu0 %v857
        %1062 = vmatpush.bf16.msra.mxu0 %v856
        %1063 = vmatmul.bf16.gmra.mxu0 %v1053
        %v1064 = vpop.f32.mrf.mxu0
        %v1065 = vadd.f32 0.0, %v1064
        %v1066 = vpop.f32.mrf.mxu0
        %1067 = vdwg.mxu0
        %v1068 = vadd.f32 %v1047, %v1065
        %v1069 = vxor.u32 %v1068, 2147483648
        %v1070 = vmul.f32 %v1069, 1.442695
        %v1071 = vpow.pop %v1070
        %v1072 = vadd.f32 %v1071, 1.0
        %v1073 = vrcp.pop %v1072
        %v1074 = vmul.f32 %v1072, %v1073
        %v1075 = vsub.f32 1.0, %v1074
        %v1076 = vmul.f32 %v1073, %v1075
        %v1077 = vadd.f32 %v1073, %v1076
        %vm1078 = vweird.f32 %v1072
        %vm1079 = vweird.f32 %v1073
        %vm1080 = vmor %vm1078, %vm1079
        %v1081 = vsel %vm1080, %v1073, %v1077
        %v1082 = vand.u32 2147483647, %v1072
        %vm1083 = vcmp.eq.f32.partialorder %v1082, 8.507059e+37
        %v1084 = vand.u32 %v1072, 2147483648
        %v1085 = vor.u32 1.1754944e-38, %v1084
        %v1086 = vsel %vm1083, %v1085, %v1081
        %v1087 = vmul.f32 1.0, %v1086
        %v1088 = vtanh.pop %v1068
        %v1089 = vmul.f32 %v1087, %v1035
        %1091 = vrot.lane.b32.xlu0 %v1088, 96
        %v1092 = vpop.permute.xlu0 %1091
        %v1094 = vmul.f32 %v1087, %v1092
        %1096 = vrot.lane.b32.xlu0 %v1094, 96
        %v1097 = vpop.permute.xlu0 %1096
        %v1099 = vadd.f32 %v1089, %v1097
        %v1100 = vtanh.pop %v1099
        %1102 = vrot.lane.b32.xlu0 %v1100, 96
        %v1103 = vpop.permute.xlu0 %1102
        %v1105 = vmul.f32 %v1087, %v1103
        %1107 = vrot.lane.b32.xlu0 %v1105, 32
        %v1108 = vpop.permute.xlu0 %1107
        %1110 = vst.msk [vmem:[%s231 + $0x20] sm:$0xff] %vm265, %v1108
        %v1111 = vld [vmem:[#allocation2 + $0x18] sm:$0xff]
        %v1112 = vpack.c.bf16 %v1105, %v1105
        %1114 = vrot.lane.b32.xlu0 %v1112, 32
        %v1115 = vpop.permute.xlu0 %1114
        %v1117 = vsel %vm265, %v1115, 0
        %1119 = vmatpush.bf16.msra.mxu0 0
        %1120 = vmatpush.bf16.msra.mxu0 0
        %1121 = vmatpush.bf16.msra.mxu0 0
        %1122 = vmatpush.bf16.msra.mxu0 0
        %1123 = vmatpush.bf16.msra.mxu0 0
        %1124 = vmatpush.bf16.msra.mxu0 0
        %1125 = vmatpush.bf16.msra.mxu0 %v857
        %1126 = vmatpush.bf16.msra.mxu0 %v856
        %1127 = vmatmul.bf16.gmra.mxu0 %v1117
        %v1128 = vpop.f32.mrf.mxu0
        %v1129 = vadd.f32 0.0, %v1128
        %v1130 = vpop.f32.mrf.mxu0
        %1131 = vdwg.mxu0
        %v1132 = vadd.f32 %v1111, %v1129
        %v1133 = vxor.u32 %v1132, 2147483648
        %v1134 = vmul.f32 %v1133, 1.442695
        %v1135 = vpow.pop %v1134
        %v1136 = vadd.f32 %v1135, 1.0
        %v1137 = vrcp.pop %v1136
        %v1138 = vmul.f32 %v1136, %v1137
        %v1139 = vsub.f32 1.0, %v1138
        %v1140 = vmul.f32 %v1137, %v1139
        %v1141 = vadd.f32 %v1137, %v1140
        %vm1142 = vweird.f32 %v1136
        %vm1143 = vweird.f32 %v1137
        %vm1144 = vmor %vm1142, %vm1143
        %v1145 = vsel %vm1144, %v1137, %v1141
        %v1146 = vand.u32 2147483647, %v1136
        %vm1147 = vcmp.eq.f32.partialorder %v1146, 8.507059e+37
        %v1148 = vand.u32 %v1136, 2147483648
        %v1149 = vor.u32 1.1754944e-38, %v1148
        %v1150 = vsel %vm1147, %v1149, %v1145
        %v1151 = vmul.f32 1.0, %v1150
        %v1152 = vtanh.pop %v1132
        %v1153 = vmul.f32 %v1151, %v1099
        %1155 = vrot.lane.b32.xlu0 %v1152, 96
        %v1156 = vpop.permute.xlu0 %1155
        %v1158 = vmul.f32 %v1151, %v1156
        %1160 = vrot.lane.b32.xlu0 %v1158, 96
        %v1161 = vpop.permute.xlu0 %1160
        %v1163 = vadd.f32 %v1153, %v1161
        %v1164 = vtanh.pop %v1163
        %1166 = vrot.lane.b32.xlu0 %v1164, 96
        %v1167 = vpop.permute.xlu0 %1166
        %v1169 = vmul.f32 %v1151, %v1167
        %1171 = vrot.lane.b32.xlu0 %v1169, 32
        %v1172 = vpop.permute.xlu0 %1171
        %1174 = vst.msk [vmem:[%s231 + $0x18] sm:$0xff] %vm265, %v1172
        %v1175 = vld [vmem:[#allocation2 + $0x10] sm:$0xff]
        %v1176 = vpack.c.bf16 %v1169, %v1169
        %1178 = vrot.lane.b32.xlu0 %v1176, 32
        %v1179 = vpop.permute.xlu0 %1178
        %v1181 = vsel %vm265, %v1179, 0
        %1183 = vmatpush.bf16.msra.mxu0 0
        %1184 = vmatpush.bf16.msra.mxu0 0
        %1185 = vmatpush.bf16.msra.mxu0 0
        %1186 = vmatpush.bf16.msra.mxu0 0
        %1187 = vmatpush.bf16.msra.mxu0 0
        %1188 = vmatpush.bf16.msra.mxu0 0
        %1189 = vmatpush.bf16.msra.mxu0 %v857
        %1190 = vmatpush.bf16.msra.mxu0 %v856
        %1191 = vmatmul.bf16.gmra.mxu0 %v1181
        %v1192 = vpop.f32.mrf.mxu0
        %v1193 = vadd.f32 0.0, %v1192
        %v1194 = vpop.f32.mrf.mxu0
        %1195 = vdwg.mxu0
        %v1196 = vadd.f32 %v1175, %v1193
        %v1197 = vxor.u32 %v1196, 2147483648
        %v1198 = vmul.f32 %v1197, 1.442695
        %v1199 = vpow.pop %v1198
        %v1200 = vadd.f32 %v1199, 1.0
        %v1201 = vrcp.pop %v1200
        %v1202 = vmul.f32 %v1200, %v1201
        %v1203 = vsub.f32 1.0, %v1202
        %v1204 = vmul.f32 %v1201, %v1203
        %v1205 = vadd.f32 %v1201, %v1204
        %vm1206 = vweird.f32 %v1200
        %vm1207 = vweird.f32 %v1201
        %vm1208 = vmor %vm1206, %vm1207
        %v1209 = vsel %vm1208, %v1201, %v1205
        %v1210 = vand.u32 2147483647, %v1200
        %vm1211 = vcmp.eq.f32.partialorder %v1210, 8.507059e+37
        %v1212 = vand.u32 %v1200, 2147483648
        %v1213 = vor.u32 1.1754944e-38, %v1212
        %v1214 = vsel %vm1211, %v1213, %v1209
        %v1215 = vmul.f32 1.0, %v1214
        %v1216 = vtanh.pop %v1196
        %v1217 = vmul.f32 %v1215, %v1163
        %1219 = vrot.lane.b32.xlu0 %v1216, 96
        %v1220 = vpop.permute.xlu0 %1219
        %v1222 = vmul.f32 %v1215, %v1220
        %1224 = vrot.lane.b32.xlu0 %v1222, 96
        %v1225 = vpop.permute.xlu0 %1224
        %v1227 = vadd.f32 %v1217, %v1225
        %v1228 = vtanh.pop %v1227
        %1230 = vrot.lane.b32.xlu0 %v1228, 96
        %v1231 = vpop.permute.xlu0 %1230
        %v1233 = vmul.f32 %v1215, %v1231
        %1235 = vrot.lane.b32.xlu0 %v1233, 32
        %v1236 = vpop.permute.xlu0 %1235
        %1238 = vst.msk [vmem:[%s231 + $0x10] sm:$0xff] %vm265, %v1236
        %v1239 = vld [vmem:[#allocation2 + $0x8] sm:$0xff]
        %v1240 = vpack.c.bf16 %v1233, %v1233
        %1242 = vrot.lane.b32.xlu0 %v1240, 32
        %v1243 = vpop.permute.xlu0 %1242
        %v1245 = vsel %vm265, %v1243, 0
        %1247 = vmatpush.bf16.msra.mxu0 0
        %1248 = vmatpush.bf16.msra.mxu0 0
        %1249 = vmatpush.bf16.msra.mxu0 0
        %1250 = vmatpush.bf16.msra.mxu0 0
        %1251 = vmatpush.bf16.msra.mxu0 0
        %1252 = vmatpush.bf16.msra.mxu0 0
        %1253 = vmatpush.bf16.msra.mxu0 %v857
        %1254 = vmatpush.bf16.msra.mxu0 %v856
        %1255 = vmatmul.bf16.gmra.mxu0 %v1245
        %v1256 = vpop.f32.mrf.mxu0
        %v1257 = vadd.f32 0.0, %v1256
        %v1258 = vpop.f32.mrf.mxu0
        %1259 = vdwg.mxu0
        %v1260 = vadd.f32 %v1239, %v1257
        %v1261 = vxor.u32 %v1260, 2147483648
        %v1262 = vmul.f32 %v1261, 1.442695
        %v1263 = vpow.pop %v1262
        %v1264 = vadd.f32 %v1263, 1.0
        %v1265 = vrcp.pop %v1264
        %v1266 = vmul.f32 %v1264, %v1265
        %v1267 = vsub.f32 1.0, %v1266
        %v1268 = vmul.f32 %v1265, %v1267
        %v1269 = vadd.f32 %v1265, %v1268
        %vm1270 = vweird.f32 %v1264
        %vm1271 = vweird.f32 %v1265
        %vm1272 = vmor %vm1270, %vm1271
        %v1273 = vsel %vm1272, %v1265, %v1269
        %v1274 = vand.u32 2147483647, %v1264
        %vm1275 = vcmp.eq.f32.partialorder %v1274, 8.507059e+37
        %v1276 = vand.u32 %v1264, 2147483648
        %v1277 = vor.u32 1.1754944e-38, %v1276
        %v1278 = vsel %vm1275, %v1277, %v1273
        %v1279 = vmul.f32 1.0, %v1278
        %v1280 = vtanh.pop %v1260
        %v1281 = vmul.f32 %v1279, %v1227
        %1283 = vrot.lane.b32.xlu0 %v1280, 96
        %v1284 = vpop.permute.xlu0 %1283
        %v1286 = vmul.f32 %v1279, %v1284
        %1288 = vrot.lane.b32.xlu0 %v1286, 96
        %v1289 = vpop.permute.xlu0 %1288
        %v1291 = vadd.f32 %v1281, %v1289
        %v1292 = vtanh.pop %v1291
        %1294 = vrot.lane.b32.xlu0 %v1292, 96
        %v1295 = vpop.permute.xlu0 %1294
        %v1297 = vmul.f32 %v1279, %v1295
        %1299 = vrot.lane.b32.xlu0 %v1297, 32
        %v1300 = vpop.permute.xlu0 %1299
        %1302 = vst.msk [vmem:[%s231 + $0x8] sm:$0xff] %vm265, %v1300
        %v1303 = vld [vmem:[#allocation2] sm:$0xff]
        %v1304 = vpack.c.bf16 %v1297, %v1297
        %1306 = vrot.lane.b32.xlu0 %v1304, 32
        %v1307 = vpop.permute.xlu0 %1306
        %v1309 = vsel %vm265, %v1307, 0
        %1311 = vmatpush.bf16.msra.mxu0 0
        %1312 = vmatpush.bf16.msra.mxu0 0
        %1313 = vmatpush.bf16.msra.mxu0 0
        %1314 = vmatpush.bf16.msra.mxu0 0
        %1315 = vmatpush.bf16.msra.mxu0 0
        %1316 = vmatpush.bf16.msra.mxu0 0
        %1317 = vmatpush.bf16.msra.mxu0 %v857
        %1318 = vmatpush.bf16.msra.mxu0 %v856
        %1319 = vmatmul.bf16.gmra.mxu0 %v1309
        %v1320 = vpop.f32.mrf.mxu0
        %v1321 = vadd.f32 0.0, %v1320
        %v1322 = vpop.f32.mrf.mxu0
        %1323 = vdwg.mxu0
        %v1324 = vadd.f32 %v1303, %v1321
        %v1325 = vxor.u32 %v1324, 2147483648
        %v1326 = vmul.f32 %v1325, 1.442695
        %v1327 = vpow.pop %v1326
        %v1328 = vadd.f32 %v1327, 1.0
        %v1329 = vrcp.pop %v1328
        %v1330 = vmul.f32 %v1328, %v1329
        %v1331 = vsub.f32 1.0, %v1330
        %v1332 = vmul.f32 %v1329, %v1331
        %v1333 = vadd.f32 %v1329, %v1332
        %vm1334 = vweird.f32 %v1328
        %vm1335 = vweird.f32 %v1329
        %vm1336 = vmor %vm1334, %vm1335
        %v1337 = vsel %vm1336, %v1329, %v1333
        %v1338 = vand.u32 2147483647, %v1328
        %vm1339 = vcmp.eq.f32.partialorder %v1338, 8.507059e+37
        %v1340 = vand.u32 %v1328, 2147483648
        %v1341 = vor.u32 1.1754944e-38, %v1340
        %v1342 = vsel %vm1339, %v1341, %v1337
        %v1343 = vmul.f32 1.0, %v1342
        %v1344 = vtanh.pop %v1324
        %v1345 = vmul.f32 %v1343, %v1291
        %1347 = vrot.lane.b32.xlu0 %v1344, 96
        %v1348 = vpop.permute.xlu0 %1347
        %v1350 = vmul.f32 %v1343, %v1348
        %1352 = vrot.lane.b32.xlu0 %v1350, 96
        %v1353 = vpop.permute.xlu0 %1352
        %v1355 = vadd.f32 %v1345, %v1353
        %v1356 = vtanh.pop %v1355
        %1358 = vrot.lane.b32.xlu0 %v1356, 96
        %v1359 = vpop.permute.xlu0 %1358
        %v1361 = vmul.f32 %v1343, %v1359
        %1363 = vrot.lane.b32.xlu0 %v1361, 32
        %v1364 = vpop.permute.xlu0 %1363
        %1366 = vst.msk [vmem:[%s231] sm:$0xff] %vm265, %v1364
      $region44: #{bilstm_tagger_forward.3} parent=35 // pred_fallthru
        _
      %p1367 = scmp.lt.s32.totalorder %s15, 1
      %s1368 = scalar_select %p1367, %s15, 1
      %s1369 = smul.addr %s1368, 8
      %s1370 = smul.addr %s1369, 8
      %s1371 = scalar_lea.vmem %s4, %s1370
      // Predicated region
      $region45: #{bilstm_tagger_forward.3} parent=35 // pred_check
        %p1372 = pneg %p132
      $region46: #{bilstm_tagger_forward.3} parent=35 // pred_check_branch
        %1374 = sbr.rel (%p1372) target = $region48
      $region47: #{bilstm_tagger_forward.3} parent=35 // pred_region
        _
      $region48: #{bilstm_tagger_forward.3} parent=35 // pred_fallthru
        _
    $region36: #{bilstm_tagger_forward.3} parent=5 // pred_fallthru
      _
    %p1375 = scmp.le.s32.totalorder 2, %s10
    // Predicated region
    $region49: #{bilstm_tagger_forward.3} parent=5 // pred_check
      %p1376 = pneg %p1375
    $region50: #{bilstm_tagger_forward.3} parent=5 // pred_check_branch
      %1378 = sbr.rel (%p1376) target = $region52
    $region51: #{bilstm_tagger_forward.3} parent=5 // pred_region
      %s1379 = ssub.s32 %s10, 2
      // Predicated region
      $region53: #{bilstm_tagger_forward.3} parent=51 // pred_check
        %p1380 = pneg %p138
      $region54: #{bilstm_tagger_forward.3} parent=51 // pred_check_branch
        %1382 = sbr.rel (%p1380) target = $region56
      $region55: #{bilstm_tagger_forward.3} parent=51 // pred_region
        %p1383 = scmp.lt.s32.totalorder %s16, 1
        %s1384 = scalar_select %p1383, %s16, 1
        %s1385 = smul.addr %s1384, 8
        %s1386 = smul.addr %s1385, 8
        %s1387 = scalar_lea.vmem %s4, %s1386
      $region56: #{bilstm_tagger_forward.3} parent=51 // pred_fallthru
        _
    $region52: #{bilstm_tagger_forward.3} parent=5 // pred_fallthru
      _
  $region6: #{bilstm_tagger_forward.3} parent=0 // loop_footer
    %s14 = sadd.s32 1, %s10
  $region7: #{bilstm_tagger_forward.3} parent=0 // loop_footer_branch
    %9 = sbr.rel target = $region3
  $region8: #{bilstm_tagger_forward.3} parent=0 // loop_exit
    _

// kernel: bilstm_tagger_forward.4
$region0: #{bilstm_tagger_forward.4}
  #allocation0 [shape = 'u32[]', space=smem, size = 0x4, offset = 0x4, fixed_abs, tag = 'smem constant byte address 0x4 - core index']
  #allocation1 [shape = 'u32[72,128]{1,0:T(1,128)}', space=vmem, size = 0x9000, scoped, tag = 'internal scratch']
  #allocation2 [shape = 'f32[64,128]{1,0:T(8,128)}', space=vmem, size = 0x8000, scoped, tag = 'scratch operand']
  %s0 = inlined_call_operand.vmem [shape: f32[2,64,32], index: 0, kind: input, shape index: {}]
  %s1 = inlined_call_operand.vmem [shape: bf16[2,2,32,128], index: 1, kind: input, shape index: {}]
  %s2 = inlined_call_operand.vmem [shape: bf16[2,32,128], index: 2, kind: input, shape index: {}]
  %s3 = inlined_call_operand.vmem [shape: f32[2,1,128], index: 3, kind: input, shape index: {}]
  %s4 = inlined_call_operand.vmem [shape: f32[2,64,32], index: 4, kind: output, shape index: {}]
  %s5 = sld [smem:[#allocation0]]
  $region57: #{bilstm_tagger_forward.4} parent=0
    _
  %s7 = ssub.s32 1, %s5
  %s8 = scalar_select 0, %s7, %s5
  loop: start=0, step=1, limit=4
  $region2: #{bilstm_tagger_forward.4} parent=0 // loop_pre_header
    _
  $region3: #{bilstm_tagger_forward.4} parent=0 // loop_header
    %s10 = sphi 0, %s14
    %p11 = scmp.ge.s32.totalorder %s10, 4
    %s18 = sphi 0, %s18
    %s20 = sphi 0, %s18
    %s21 = sphi 0, %s20
    %s35 = sphi 0, %s21
    %s41 = sphi 0, %s43
    %s44 = sphi 0, %s41
    %s45 = sphi 0, %s44
    %s61 = sphi 0, %s45
    %s67 = sphi 0, %s69
    %s70 = sphi 0, %s67
    %s71 = sphi 0, %s70
    %s87 = sphi 0, %s71
    %s93 = sphi 0, %s95
    %s96 = sphi 0, %s93
    %s97 = sphi 0, %s96
    %s113 = sphi 0, %s97
    %s119 = sphi 0, %s121
    %s122 = sphi 0, %s119
    %s123 = sphi 0, %s122
    %s139 = sphi 0, %s123
  $region4: #{bilstm_tagger_forward.4} parent=0 // loop_header_branch
    %13 = sbr.rel (%p11) target = $region8
  $region5: #{bilstm_tagger_forward.4} parent=0 // loop_body
    %s15 = ssub.s32 %s10, 1
    %s16 = ssub.s32 %s10, 2
    %s17 = sadd.s32 %s10, 1
    %s19 = sadd.s32 %s18, 1
    %p22 = scmp.eq.s32.totalorder %s10, 1
    %p23 = scmp.ne.s32.totalorder %s18, %s20
    %p24 = scmp.eq.s32.totalorder %s10, 0
    %p25 = por %p23, %p24
    %p26 = scmp.ne.s32.totalorder %s18, %s20
    %p27 = scmp.eq.s32.totalorder %s15, 1
    %p28 = por %p26, %p27
    %p29 = scmp.ne.s32.totalorder %s20, %s21
    %p30 = scmp.eq.s32.totalorder %s15, 0
    %p31 = por %p29, %p30
    %p32 = scmp.ne.s32.totalorder %s20, %s21
    %p33 = scmp.eq.s32.totalorder %s16, 1
    %p34 = por %p32, %p33
    %p36 = scmp.ne.s32.totalorder %s21, %s35
    %p37 = scmp.eq.s32.totalorder %s16, 0
    %p38 = por %p36, %p37
    %s39 = ssub.s32 %s10, %s17
    %p40 = scmp.eq.s32.totalorder %s39, 0
    %s42 = sadd.s32 %s41, 1
    %s43 = scalar_select %p40, %s41, %s42
    %p46 = pneg %p40
    %p47 = scmp.eq.s32.totalorder %s10, 1
    %p48 = por %p46, %p47
    %p49 = scmp.ne.s32.totalorder %s41, %s44
    %p50 = scmp.eq.s32.totalorder %s10, 0
    %p51 = por %p49, %p50
    %p52 = scmp.ne.s32.totalorder %s41, %s44
    %p53 = scmp.eq.s32.totalorder %s15, 1
    %p54 = por %p52, %p53
    %p55 = scmp.ne.s32.totalorder %s44, %s45
    %p56 = scmp.eq.s32.totalorder %s15, 0
    %p57 = por %p55, %p56
    %p58 = scmp.ne.s32.totalorder %s44, %s45
    %p59 = scmp.eq.s32.totalorder %s16, 1
    %p60 = por %p58, %p59
    %p62 = scmp.ne.s32.totalorder %s45, %s61
    %p63 = scmp.eq.s32.totalorder %s16, 0
    %p64 = por %p62, %p63
    %s65 = ssub.s32 %s10, %s17
    %p66 = scmp.eq.s32.totalorder %s65, 0
    %s68 = sadd.s32 %s67, 1
    %s69 = scalar_select %p66, %s67, %s68
    %p72 = pneg %p66
    %p73 = scmp.eq.s32.totalorder %s10, 1
    %p74 = por %p72, %p73
    %p75 = scmp.ne.s32.totalorder %s67, %s70
    %p76 = scmp.eq.s32.totalorder %s10, 0
    %p77 = por %p75, %p76
    %p78 = scmp.ne.s32.totalorder %s67, %s70
    %p79 = scmp.eq.s32.totalorder %s15, 1
    %p80 = por %p78, %p79
    %p81 = scmp.ne.s32.totalorder %s70, %s71
    %p82 = scmp.eq.s32.totalorder %s15, 0
    %p83 = por %p81, %p82
    %p84 = scmp.ne.s32.totalorder %s70, %s71
    %p85 = scmp.eq.s32.totalorder %s16, 1
    %p86 = por %p84, %p85
    %p88 = scmp.ne.s32.totalorder %s71, %s87
    %p89 = scmp.eq.s32.totalorder %s16, 0
    %p90 = por %p88, %p89
    %s91 = ssub.s32 %s10, %s17
    %p92 = scmp.eq.s32.totalorder %s91, 0
    %s94 = sadd.s32 %s93, 1
    %s95 = scalar_select %p92, %s93, %s94
    %p98 = pneg %p92
    %p99 = scmp.eq.s32.totalorder %s10, 1
    %p100 = por %p98, %p99
    %p101 = scmp.ne.s32.totalorder %s93, %s96
    %p102 = scmp.eq.s32.totalorder %s10, 0
    %p103 = por %p101, %p102
    %p104 = scmp.ne.s32.totalorder %s93, %s96
    %p105 = scmp.eq.s32.totalorder %s15, 1
    %p106 = por %p104, %p105
    %p107 = scmp.ne.s32.totalorder %s96, %s97
    %p108 = scmp.eq.s32.totalorder %s15, 0
    %p109 = por %p107, %p108
    %p110 = scmp.ne.s32.totalorder %s96, %s97
    %p111 = scmp.eq.s32.totalorder %s16, 1
    %p112 = por %p110, %p111
    %p114 = scmp.ne.s32.totalorder %s97, %s113
    %p115 = scmp.eq.s32.totalorder %s16, 0
    %p116 = por %p114, %p115
    %s117 = ssub.s32 %s10, %s17
    %p118 = scmp.eq.s32.totalorder %s117, 0
    %s120 = sadd.s32 %s119, 1
    %s121 = scalar_select %p118, %s119, %s120
    %p124 = pneg %p118
    %p125 = scmp.eq.s32.totalorder %s10, 1
    %p126 = por %p124, %p125
    %p127 = scmp.ne.s32.totalorder %s119, %s122
    %p128 = scmp.eq.s32.totalorder %s10, 0
    %p129 = por %p127, %p128
    %p130 = scmp.ne.s32.totalorder %s119, %s122
    %p131 = scmp.eq.s32.totalorder %s15, 1
    %p132 = por %p130, %p131
    %p133 = scmp.ne.s32.totalorder %s122, %s123
    %p134 = scmp.eq.s32.totalorder %s15, 0
    %p135 = por %p133, %p134
    %p136 = scmp.ne.s32.totalorder %s122, %s123
    %p137 = scmp.eq.s32.totalorder %s16, 1
    %p138 = por %p136, %p137
    %p140 = scmp.ne.s32.totalorder %s123, %s139
    %p141 = scmp.eq.s32.totalorder %s16, 0
    %p142 = por %p140, %p141
    %p143 = scmp.le.s32.totalorder 1, %s10
    %p144 = scmp.lt.s32.totalorder %s10, 3
    %p145 = pnand %p143, %p144
    %p146 = pneg %p145
    // Predicated region
    $region9: #{bilstm_tagger_forward.4} parent=5 // pred_check
      _
    $region10: #{bilstm_tagger_forward.4} parent=5 // pred_check_branch
      %148 = sbr.rel (%p145) target = $region12
    $region11: #{bilstm_tagger_forward.4} parent=5 // pred_region
      %s149 = ssub.s32 %s10, 1
      // Predicated region
      $region13: #{bilstm_tagger_forward.4} parent=11 // pred_check
        %p150 = pneg %p31
      $region14: #{bilstm_tagger_forward.4} parent=11 // pred_check_branch
        %152 = sbr.rel (%p150) target = $region16
      $region15: #{bilstm_tagger_forward.4} parent=11 // pred_region
        _
      $region16: #{bilstm_tagger_forward.4} parent=11 // pred_fallthru
        _
    $region12: #{bilstm_tagger_forward.4} parent=5 // pred_fallthru
      _
    %p153 = scmp.lt.s32.totalorder %s10, 2
    // Predicated region
    $region17: #{bilstm_tagger_forward.4} parent=5 // pred_check
      %p154 = pneg %p153
    $region18: #{bilstm_tagger_forward.4} parent=5 // pred_check_branch
      %156 = sbr.rel (%p154) target = $region20
    $region19: #{bilstm_tagger_forward.4} parent=5 // pred_region
      // Predicated region
      $region21: #{bilstm_tagger_forward.4} parent=19 // pred_check
        %p157 = pneg %p51
      $region22: #{bilstm_tagger_forward.4} parent=19 // pred_check_branch
        %159 = sbr.rel (%p157) target = $region24
      $region23: #{bilstm_tagger_forward.4} parent=19 // pred_region
        %p160 = scmp.lt.s32.totalorder %s10, 1
        %s161 = scalar_select %p160, %s10, 1
        %s162 = smul.addr %s161, 8
        %s163 = smul.addr %s162, 4
        %s164 = scalar_lea.vmem %s1, %s163
      $region24: #{bilstm_tagger_forward.4} parent=19 // pred_fallthru
        _
      // Predicated region
      $region25: #{bilstm_tagger_forward.4} parent=19 // pred_check
        %p165 = pneg %p77
      $region26: #{bilstm_tagger_forward.4} parent=19 // pred_check_branch
        %167 = sbr.rel (%p165) target = $region28
      $region27: #{bilstm_tagger_forward.4} parent=19 // pred_region
        %p168 = scmp.lt.s32.totalorder %s10, 1
        %s169 = scalar_select %p168, %s10, 1
        %s170 = smul.addr %s169, 4
        %s171 = smul.addr %s170, 4
        %s172 = scalar_lea.vmem %s2, %s171
      $region28: #{bilstm_tagger_forward.4} parent=19 // pred_fallthru
        _
      // Predicated region
      $region29: #{bilstm_tagger_forward.4} parent=19 // pred_check
        %p173 = pneg %p103
      $region30: #{bilstm_tagger_forward.4} parent=19 // pred_check_branch
        %175 = sbr.rel (%p173) target = $region32
      $region31: #{bilstm_tagger_forward.4} parent=19 // pred_region
        %p176 = scmp.lt.s32.totalorder %s10, 1
        %s177 = scalar_select %p176, %s10, 1
        %s178 = scalar_lea.vmem %s3, %s177
      $region32: #{bilstm_tagger_forward.4} parent=19 // pred_fallthru
        _
    $region20: #{bilstm_tagger_forward.4} parent=5 // pred_fallthru
      _
    %p179 = scmp.le.s32.totalorder 1, %s10
    %p180 = scmp.lt.s32.totalorder %s10, 3
    %p181 = pnand %p179, %p180
    %p182 = pneg %p181
    // Predicated region
    $region33: #{bilstm_tagger_forward.4} parent=5 // pred_check
      _
    $region34: #{bilstm_tagger_forward.4} parent=5 // pred_check_branch
      %184 = sbr.rel (%p181) target = $region36
    $region35: #{bilstm_tagger_forward.4} parent=5 // pred_region
      %s185 = ssub.s32 %s10, 1
      %p186 = pneg %p31
      %p187 = pneg %p28
      %p188 = scmp.lt.s32.totalorder %s15, 1
      %s189 = scalar_select %p188, %s15, 1
      %s190 = smul.addr %s189, 8
      %s191 = smul.addr %s190, 4
      %s192 = scalar_lea.vmem %s1, %s191
      %p193 = pneg %p57
      %p194 = pneg %p54
      %p195 = scmp.lt.s32.totalorder %s15, 1
      %s196 = scalar_select %p195, %s15, 1
      %s197 = smul.addr %s196, 4
      %s198 = smul.addr %s197, 4
      %s199 = scalar_lea.vmem %s2, %s198
      %p200 = pneg %p83
      %p201 = pneg %p80
      %p202 = scmp.lt.s32.totalorder %s15, 1
      %s203 = scalar_select %p202, %s15, 1
      %s204 = scalar_lea.vmem %s3, %s203
      %p205 = pneg %p109
      %p206 = pneg %p106
      %p207 = pneg %p135
      %p208 = pneg %p132
      %p209 = scmp.lt.s32.totalorder %s15, 1
      %s210 = scalar_select %p209, %s15, 1
      %s211 = smul.addr %s210, 8
      %s212 = smul.addr %s211, 8
      %s213 = scalar_lea.vmem %s4, %s212
      %p214 = scmp.lt.s32.totalorder %s15, 1
      %s215 = scalar_select %p214, %s15, 1
      %s216 = smul.addr %s215, 8
      %s217 = smul.addr %s216, 4
      %s218 = scalar_lea.vmem %s1, %s217
      %p219 = scmp.lt.s32.totalorder %s15, 1
      %s220 = scalar_select %p219, %s15, 1
      %s221 = smul.addr %s220, 4
      %s222 = smul.addr %s221, 4
      %s223 = scalar_lea.vmem %s2, %s222
      %p224 = scmp.lt.s32.totalorder %s15, 1
      %s225 = scalar_select %p224, %s15, 1
      %s226 = scalar_lea.vmem %s3, %s225
      %p227 = scmp.lt.s32.totalorder %s15, 1
      %s228 = scalar_select %p227, %s15, 1
      %s229 = smul.addr %s228, 8
      %s230 = smul.addr %s229, 8
      %s231 = scalar_lea.vmem %s4, %s230
      %v233 = vld [vmem:[%s218] sm:$0xf]
      %v234 = vld [vmem:[%s218 + $0x4] sm:$0xf]
      %v235 = vld [vmem:[%s218 + $0x8] sm:$0xf]
      %v236 = vld [vmem:[%s218 + $0xc] sm:$0xf]
      %v237 = vld [vmem:[%s0] sm:$0xff]
      %v238 = vld [vmem:[%s0 + $0x8] sm:$0xff]
      %v239 = vld [vmem:[%s0 + $0x10] sm:$0xff]
      %v240 = vld [vmem:[%s0 + $0x18] sm:$0xff]
      %v241 = vld [vmem:[%s0 + $0x20] sm:$0xff]
      %v242 = vld [vmem:[%s0 + $0x28] sm:$0xff]
      %v243 = vld [vmem:[%s0 + $0x30] sm:$0xff]
      %v244 = vld [vmem:[%s0 + $0x38] sm:$0xff]
      %v245 = vpack.c.bf16 %v238, %v237
      %v246 = vpack.c.bf16 %v240, %v239
      %v247 = vpack.c.bf16 %v242, %v241
      %v248 = vpack.c.bf16 %v244, %v243
      %s249 = scalar_lea.vmem %s218, 16
      %v250 = vld [vmem:[%s249] sm:$0xf]
      %v251 = vld [vmem:[%s249 + $0x4] sm:$0xf]
      %v252 = vld [vmem:[%s249 + $0x8] sm:$0xf]
      %v253 = vld [vmem:[%s249 + $0xc] sm:$0xf]
      %s254 = scalar_lea.vmem %s0, 64
      %v255 = vld [vmem:[%s254] sm:$0xff]
      %v256 = vld [vmem:[%s254 + $0x8] sm:$0xff]
      %v257 = vld [vmem:[%s254 + $0x10] sm:$0xff]
      %v258 = vld [vmem:[%s254 + $0x18] sm:$0xff]
      %v259 = vld [vmem:[%s254 + $0x20] sm:$0xff]
      %v260 = vld [vmem:[%s254 + $0x28] sm:$0xff]
      %v261 = vld [vmem:[%s254 + $0x30] sm:$0xff]
      %v262 = vld [vmem:[%s254 + $0x38] sm:$0xff]
      %v263 = vpack.c.bf16 %v256, %v255
      %v264 = vpack.c.bf16 %v258, %v257
      %v265 = vpack.c.bf16 %v260, %v259
      %v266 = vpack.c.bf16 %v262, %v261
      %v271 = vunpack.c.l.b16 %v250
      %v272 = vunpack.c.l.b16 %v251
      %v273 = vunpack.c.l.b16 %v252
      %v274 = vunpack.c.l.b16 %v253
      %v275 = vpack.c.b16 %v272, %v271
      %v276 = vpack.c.b16 %v274, %v273
      %vm279 = vcmask 261120
      %v281 = vsel %vm279, %v263, 0
      %v284 = vsel %vm279, %v264, 0
      %v287 = vsel %vm279, %v265, 0
      %v290 = vsel %vm279, %v266, 0
      %292 = vmatpush.bf16.msra.mxu0 0
      %293 = vmatpush.bf16.msra.mxu0 0
      %294 = vmatpush.bf16.msra.mxu0 0
      %295 = vmatpush.bf16.msra.mxu0 0
      %296 = vmatpush.bf16.msra.mxu0 0
      %297 = vmatpush.bf16.msra.mxu0 0
      %298 = vmatpush.bf16.msra.mxu0 %v276
      %299 = vmatpush.bf16.msra.mxu0 %v275
      %300 = vmatmul.bf16.gmra.mxu0 %v281
      %v301 = vpop.f32.mrf.mxu0
      %v302 = vadd.f32 0.0, %v301
      %v303 = vpop.f32.mrf.mxu0
      %v304 = vadd.f32 0.0, %v303
      %305 = vmatmul.bf16.gmra.mxu0 %v284
      %v306 = vpop.f32.mrf.mxu0
      %v307 = vadd.f32 0.0, %v306
      %v308 = vpop.f32.mrf.mxu0
      %v309 = vadd.f32 0.0, %v308
      %310 = vmatmul.bf16.gmra.mxu0 %v287
      %v311 = vpop.f32.mrf.mxu0
      %v312 = vadd.f32 0.0, %v311
      %v313 = vpop.f32.mrf.mxu0
      %v314 = vadd.f32 0.0, %v313
      %315 = vmatmul.bf16.gmra.mxu0 %v290
      %v316 = vpop.f32.mrf.mxu0
      %v317 = vadd.f32 0.0, %v316
      %v318 = vpop.f32.mrf.mxu0
      %v319 = vadd.f32 0.0, %v318
      %320 = vdwg.mxu0
      %v325 = vunpack.c.l.b16 %v233
      %v326 = vunpack.c.l.b16 %v234
      %v327 = vunpack.c.l.b16 %v235
      %v328 = vunpack.c.l.b16 %v236
      %v329 = vpack.c.b16 %v326, %v325
      %v330 = vpack.c.b16 %v328, %v327
      %v334 = vsel %vm279, %v245, 0
      %v337 = vsel %vm279, %v246, 0
      %v340 = vsel %vm279, %v247, 0
      %v343 = vsel %vm279, %v248, 0
      %345 = vmatpush.bf16.msra.mxu0 0
      %346 = vmatpush.bf16.msra.mxu0 0
      %347 = vmatpush.bf16.msra.mxu0 0
      %348 = vmatpush.bf16.msra.mxu0 0
      %349 = vmatpush.bf16.msra.mxu0 0
      %350 = vmatpush.bf16.msra.mxu0 0
      %351 = vmatpush.bf16.msra.mxu0 %v330
      %352 = vmatpush.bf16.msra.mxu0 %v329
      %353 = vmatmul.bf16.gmra.mxu0 %v334
      %v354 = vpop.f32.mrf.mxu0
      %v355 = vadd.f32 %v302, %v354
      %v356 = vpop.f32.mrf.mxu0
      %v357 = vadd.f32 %v304, %v356
      %358 = vmatmul.bf16.gmra.mxu0 %v337
      %v359 = vpop.f32.mrf.mxu0
      %v360 = vadd.f32 %v307, %v359
      %v361 = vpop.f32.mrf.mxu0
      %v362 = vadd.f32 %v309, %v361
      %363 = vmatmul.bf16.gmra.mxu0 %v340
      %v364 = vpop.f32.mrf.mxu0
      %v365 = vadd.f32 %v312, %v364
      %v366 = vpop.f32.mrf.mxu0
      %v367 = vadd.f32 %v314, %v366
      %368 = vmatmul.bf16.gmra.mxu0 %v343
      %v369 = vpop.f32.mrf.mxu0
      %v370 = vadd.f32 %v317, %v369
      %v371 = vpop.f32.mrf.mxu0
      %v372 = vadd.f32 %v319, %v371
      %373 = vdwg.mxu0
      %v374 = vld [vmem:[%s226] sm:$0x1]
      %v376 = vperm.slane %v374, 0
      %v378 = vadd.f32 %v355, %v376
      %v379 = vadd.f32 %v357, %v376
      %v380 = vadd.f32 %v360, %v376
      %v381 = vadd.f32 %v362, %v376
      %v382 = vadd.f32 %v365, %v376
      %v383 = vadd.f32 %v367, %v376
      %v384 = vadd.f32 %v370, %v376
      %v385 = vadd.f32 %v372, %v376
      %386 = vst [vmem:[#allocation2] sm:$0xff] %v378
      %387 = vst [vmem:[#allocation2 + $0x8] sm:$0xff] %v379
      %388 = vst [vmem:[#allocation2 + $0x10] sm:$0xff] %v380
      %389 = vst [vmem:[#allocation2 + $0x18] sm:$0xff] %v381
      %390 = vst [vmem:[#allocation2 + $0x20] sm:$0xff] %v382
      %391 = vst [vmem:[#allocation2 + $0x28] sm:$0xff] %v383
      %392 = vst [vmem:[#allocation2 + $0x30] sm:$0xff] %v384
      %393 = vst [vmem:[#allocation2 + $0x38] sm:$0xff] %v385
      %v394 = vld [vmem:[%s223] sm:$0xf]
      %v395 = vld [vmem:[%s223 + $0x4] sm:$0xf]
      %v396 = vld [vmem:[%s223 + $0x8] sm:$0xf]
      %v397 = vld [vmem:[%s223 + $0xc] sm:$0xf]
      %p398 = scmp.eq.s32.totalorder %s15, 0
      // Predicated region
      $region37: #{bilstm_tagger_forward.4} parent=35 // pred_check
        %p399 = pneg %p398
      $region38: #{bilstm_tagger_forward.4} parent=35 // pred_check_branch
        %401 = sbr.rel (%p399) target = $region40
      $region39: #{bilstm_tagger_forward.4} parent=35 // pred_region
        %v402 = vld [vmem:[#allocation2] sm:$0xff]
        %v407 = vunpack.c.l.b16 %v394
        %v408 = vunpack.c.l.b16 %v395
        %v409 = vunpack.c.l.b16 %v396
        %v410 = vunpack.c.l.b16 %v397
        %v411 = vpack.c.b16 %v408, %v407
        %v412 = vpack.c.b16 %v410, %v409
        %v416 = vsel %vm279, 0, 0
        %418 = vmatpush.bf16.msra.mxu0 0
        %419 = vmatpush.bf16.msra.mxu0 0
        %420 = vmatpush.bf16.msra.mxu0 0
        %421 = vmatpush.bf16.msra.mxu0 0
        %422 = vmatpush.bf16.msra.mxu0 0
        %423 = vmatpush.bf16.msra.mxu0 0
        %424 = vmatpush.bf16.msra.mxu0 %v412
        %425 = vmatpush.bf16.msra.mxu0 %v411
        %426 = vmatmul.bf16.gmra.mxu0 %v416
        %v427 = vpop.f32.mrf.mxu0
        %v428 = vadd.f32 0.0, %v427
        %v429 = vpop.f32.mrf.mxu0
        %430 = vdwg.mxu0
        %v431 = vadd.f32 %v402, %v428
        %v432 = vxor.u32 %v431, 2147483648
        %v433 = vmul.f32 %v432, 1.442695
        %v434 = vpow.pop %v433
        %v435 = vadd.f32 %v434, 1.0
        %v436 = vrcp.pop %v435
        %v437 = vmul.f32 %v435, %v436
        %v438 = vsub.f32 1.0, %v437
        %v439 = vmul.f32 %v436, %v438
        %v440 = vadd.f32 %v436, %v439
        %vm441 = vweird.f32 %v435
        %vm442 = vweird.f32 %v436
        %vm443 = vmor %vm441, %vm442
        %v444 = vsel %vm443, %v436, %v440
        %v445 = vand.u32 2147483647, %v435
        %vm446 = vcmp.eq.f32.partialorder %v445, 8.507059e+37
        %v447 = vand.u32 %v435, 2147483648
        %v448 = vor.u32 1.1754944e-38, %v447
        %v449 = vsel %vm446, %v448, %v444
        %v450 = vmul.f32 1.0, %v449
        %v451 = vtanh.pop %v431
        %v452 = vmul.f32 %v450, 0.0
        %454 = vrot.lane.b32.xlu0 %v451, 96
        %v455 = vpop.permute.xlu0 %454
        %v457 = vmul.f32 %v450, %v455
        %459 = vrot.lane.b32.xlu0 %v457, 96
        %v460 = vpop.permute.xlu0 %459
        %v462 = vadd.f32 %v452, %v460
        %v463 = vtanh.pop %v462
        %465 = vrot.lane.b32.xlu0 %v463, 96
        %v466 = vpop.permute.xlu0 %465
        %v468 = vmul.f32 %v450, %v466
        %470 = vrot.lane.b32.xlu0 %v468, 32
        %v471 = vpop.permute.xlu0 %470
        %473 = vst.msk [vmem:[%s231] sm:$0xff] %vm279, %v471
        %v474 = vld [vmem:[#allocation2 + $0x8] sm:$0xff]
        %v475 = vpack.c.bf16 %v468, %v468
        %477 = vrot.lane.b32.xlu0 %v475, 32
        %v478 = vpop.permute.xlu0 %477
        %v480 = vsel %vm279, %v478, 0
        %482 = vmatpush.bf16.msra.mxu0 0
        %483 = vmatpush.bf16.msra.mxu0 0
        %484 = vmatpush.bf16.msra.mxu0 0
        %485 = vmatpush.bf16.msra.mxu0 0
        %486 = vmatpush.bf16.msra.mxu0 0
        %487 = vmatpush.bf16.msra.mxu0 0
        %488 = vmatpush.bf16.msra.mxu0 %v412
        %489 = vmatpush.bf16.msra.mxu0 %v411
        %490 = vmatmul.bf16.gmra.mxu0 %v480
        %v491 = vpop.f32.mrf.mxu0
        %v492 = vadd.f32 0.0, %v491
        %v493 = vpop.f32.mrf.mxu0
        %494 = vdwg.mxu0
        %v495 = vadd.f32 %v474, %v492
        %v496 = vxor.u32 %v495, 2147483648
        %v497 = vmul.f32 %v496, 1.442695
        %v498 = vpow.pop %v497
        %v499 = vadd.f32 %v498, 1.0
        %v500 = vrcp.pop %v499
        %v501 = vmul.f32 %v499, %v500
        %v502 = vsub.f32 1.0, %v501
        %v503 = vmul.f32 %v500, %v502
        %v504 = vadd.f32 %v500, %v503
        %vm505 = vweird.f32 %v499
        %vm506 = vweird.f32 %v500
        %vm507 = vmor %vm505, %vm506
        %v508 = vsel %vm507, %v500, %v504
        %v509 = vand.u32 2147483647, %v499
        %vm510 = vcmp.eq.f32.partialorder %v509, 8.507059e+37
        %v511 = vand.u32 %v499, 2147483648
        %v512 = vor.u32 1.1754944e-38, %v511
        %v513 = vsel %vm510, %v512, %v508
        %v514 = vmul.f32 1.0, %v513
        %v515 = vtanh.pop %v495
        %v516 = vmul.f32 %v514, %v462
        %518 = vrot.lane.b32.xlu0 %v515, 96
        %v519 = vpop.permute.xlu0 %518
        %v521 = vmul.f32 %v514, %v519
        %523 = vrot.lane.b32.xlu0 %v521, 96
        %v524 = vpop.permute.xlu0 %523
        %v526 = vadd.f32 %v516, %v524
        %v527 = vtanh.pop %v526
        %529 = vrot.lane.b32.xlu0 %v527, 96
        %v530 = vpop.permute.xlu0 %529
        %v532 = vmul.f32 %v514, %v530
        %534 = vrot.lane.b32.xlu0 %v532, 32
        %v535 = vpop.permute.xlu0 %534
        %537 = vst.msk [vmem:[%s231 + $0x8] sm:$0xff] %vm279, %v535
        %v538 = vld [vmem:[#allocation2 + $0x10] sm:$0xff]
        %v539 = vpack.c.bf16 %v532, %v532
        %541 = vrot.lane.b32.xlu0 %v539, 32
        %v542 = vpop.permute.xlu0 %541
        %v544 = vsel %vm279, %v542, 0
        %546 = vmatpush.bf16.msra.mxu0 0
        %547 = vmatpush.bf16.msra.mxu0 0
        %548 = vmatpush.bf16.msra.mxu0 0
        %549 = vmatpush.bf16.msra.mxu0 0
        %550 = vmatpush.bf16.msra.mxu0 0
        %551 = vmatpush.bf16.msra.mxu0 0
        %552 = vmatpush.bf16.msra.mxu0 %v412
        %553 = vmatpush.bf16.msra.mxu0 %v411
        %554 = vmatmul.bf16.gmra.mxu0 %v544
        %v555 = vpop.f32.mrf.mxu0
        %v556 = vadd.f32 0.0, %v555
        %v557 = vpop.f32.mrf.mxu0
        %558 = vdwg.mxu0
        %v559 = vadd.f32 %v538, %v556
        %v560 = vxor.u32 %v559, 2147483648
        %v561 = vmul.f32 %v560, 1.442695
        %v562 = vpow.pop %v561
        %v563 = vadd.f32 %v562, 1.0
        %v564 = vrcp.pop %v563
        %v565 = vmul.f32 %v563, %v564
        %v566 = vsub.f32 1.0, %v565
        %v567 = vmul.f32 %v564, %v566
        %v568 = vadd.f32 %v564, %v567
        %vm569 = vweird.f32 %v563
        %vm570 = vweird.f32 %v564
        %vm571 = vmor %vm569, %vm570
        %v572 = vsel %vm571, %v564, %v568
        %v573 = vand.u32 2147483647, %v563
        %vm574 = vcmp.eq.f32.partialorder %v573, 8.507059e+37
        %v575 = vand.u32 %v563, 2147483648
        %v576 = vor.u32 1.1754944e-38, %v575
        %v577 = vsel %vm574, %v576, %v572
        %v578 = vmul.f32 1.0, %v577
        %v579 = vtanh.pop %v559
        %v580 = vmul.f32 %v578, %v526
        %582 = vrot.lane.b32.xlu0 %v579, 96
        %v583 = vpop.permute.xlu0 %582
        %v585 = vmul.f32 %v578, %v583
        %587 = vrot.lane.b32.xlu0 %v585, 96
        %v588 = vpop.permute.xlu0 %587
        %v590 = vadd.f32 %v580, %v588
        %v591 = vtanh.pop %v590
        %593 = vrot.lane.b32.xlu0 %v591, 96
        %v594 = vpop.permute.xlu0 %593
        %v596 = vmul.f32 %v578, %v594
        %598 = vrot.lane.b32.xlu0 %v596, 32
        %v599 = vpop.permute.xlu0 %598
        %601 = vst.msk [vmem:[%s231 + $0x10] sm:$0xff] %vm279, %v599
        %v602 = vld [vmem:[#allocation2 + $0x18] sm:$0xff]
        %v603 = vpack.c.bf16 %v596, %v596
        %605 = vrot.lane.b32.xlu0 %v603, 32
        %v606 = vpop.permute.xlu0 %605
        %v608 = vsel %vm279, %v606, 0
        %610 = vmatpush.bf16.msra.mxu0 0
        %611 = vmatpush.bf16.msra.mxu0 0
        %612 = vmatpush.bf16.msra.mxu0 0
        %613 = vmatpush.bf16.msra.mxu0 0
        %614 = vmatpush.bf16.msra.mxu0 0
        %615 = vmatpush.bf16.msra.mxu0 0
        %616 = vmatpush.bf16.msra.mxu0 %v412
        %617 = vmatpush.bf16.msra.mxu0 %v411
        %618 = vmatmul.bf16.gmra.mxu0 %v608
        %v619 = vpop.f32.mrf.mxu0
        %v620 = vadd.f32 0.0, %v619
        %v621 = vpop.f32.mrf.mxu0
        %622 = vdwg.mxu0
        %v623 = vadd.f32 %v602, %v620
        %v624 = vxor.u32 %v623, 2147483648
        %v625 = vmul.f32 %v624, 1.442695
        %v626 = vpow.pop %v625
        %v627 = vadd.f32 %v626, 1.0
        %v628 = vrcp.pop %v627
        %v629 = vmul.f32 %v627, %v628
        %v630 = vsub.f32 1.0, %v629
        %v631 = vmul.f32 %v628, %v630
        %v632 = vadd.f32 %v628, %v631
        %vm633 = vweird.f32 %v627
        %vm634 = vweird.f32 %v628
        %vm635 = vmor %vm633, %vm634
        %v636 = vsel %vm635, %v628, %v632
        %v637 = vand.u32 2147483647, %v627
        %vm638 = vcmp.eq.f32.partialorder %v637, 8.507059e+37
        %v639 = vand.u32 %v627, 2147483648
        %v640 = vor.u32 1.1754944e-38, %v639
        %v641 = vsel %vm638, %v640, %v636
        %v642 = vmul.f32 1.0, %v641
        %v643 = vtanh.pop %v623
        %v644 = vmul.f32 %v642, %v590
        %646 = vrot.lane.b32.xlu0 %v643, 96
        %v647 = vpop.permute.xlu0 %646
        %v649 = vmul.f32 %v642, %v647
        %651 = vrot.lane.b32.xlu0 %v649, 96
        %v652 = vpop.permute.xlu0 %651
        %v654 = vadd.f32 %v644, %v652
        %v655 = vtanh.pop %v654
        %657 = vrot.lane.b32.xlu0 %v655, 96
        %v658 = vpop.permute.xlu0 %657
        %v660 = vmul.f32 %v642, %v658
        %662 = vrot.lane.b32.xlu0 %v660, 32
        %v663 = vpop.permute.xlu0 %662
        %665 = vst.msk [vmem:[%s231 + $0x18] sm:$0xff] %vm279, %v663
        %v666 = vld [vmem:[#allocation2 + $0x20] sm:$0xff]
        %v667 = vpack.c.bf16 %v660, %v660
        %669 = vrot.lane.b32.xlu0 %v667, 32
        %v670 = vpop.permute.xlu0 %669
        %v672 = vsel %vm279, %v670, 0
        %674 = vmatpush.bf16.msra.mxu0 0
        %675 = vmatpush.bf16.msra.mxu0 0
        %676 = vmatpush.bf16.msra.mxu0 0
        %677 = vmatpush.bf16.msra.mxu0 0
        %678 = vmatpush.bf16.msra.mxu0 0
        %679 = vmatpush.bf16.msra.mxu0 0
        %680 = vmatpush.bf16.msra.mxu0 %v412
        %681 = vmatpush.bf16.msra.mxu0 %v411
        %682 = vmatmul.bf16.gmra.mxu0 %v672
        %v683 = vpop.f32.mrf.mxu0
        %v684 = vadd.f32 0.0, %v683
        %v685 = vpop.f32.mrf.mxu0
        %686 = vdwg.mxu0
        %v687 = vadd.f32 %v666, %v684
        %v688 = vxor.u32 %v687, 2147483648
        %v689 = vmul.f32 %v688, 1.442695
        %v690 = vpow.pop %v689
        %v691 = vadd.f32 %v690, 1.0
        %v692 = vrcp.pop %v691
        %v693 = vmul.f32 %v691, %v692
        %v694 = vsub.f32 1.0, %v693
        %v695 = vmul.f32 %v692, %v694
        %v696 = vadd.f32 %v692, %v695
        %vm697 = vweird.f32 %v691
        %vm698 = vweird.f32 %v692
        %vm699 = vmor %vm697, %vm698
        %v700 = vsel %vm699, %v692, %v696
        %v701 = vand.u32 2147483647, %v691
        %vm702 = vcmp.eq.f32.partialorder %v701, 8.507059e+37
        %v703 = vand.u32 %v691, 2147483648
        %v704 = vor.u32 1.1754944e-38, %v703
        %v705 = vsel %vm702, %v704, %v700
        %v706 = vmul.f32 1.0, %v705
        %v707 = vtanh.pop %v687
        %v708 = vmul.f32 %v706, %v654
        %710 = vrot.lane.b32.xlu0 %v707, 96
        %v711 = vpop.permute.xlu0 %710
        %v713 = vmul.f32 %v706, %v711
        %715 = vrot.lane.b32.xlu0 %v713, 96
        %v716 = vpop.permute.xlu0 %715
        %v718 = vadd.f32 %v708, %v716
        %v719 = vtanh.pop %v718
        %721 = vrot.lane.b32.xlu0 %v719, 96
        %v722 = vpop.permute.xlu0 %721
        %v724 = vmul.f32 %v706, %v722
        %726 = vrot.lane.b32.xlu0 %v724, 32
        %v727 = vpop.permute.xlu0 %726
        %729 = vst.msk [vmem:[%s231 + $0x20] sm:$0xff] %vm279, %v727
        %v730 = vld [vmem:[#allocation2 + $0x28] sm:$0xff]
        %v731 = vpack.c.bf16 %v724, %v724
        %733 = vrot.lane.b32.xlu0 %v731, 32
        %v734 = vpop.permute.xlu0 %733
        %v736 = vsel %vm279, %v734, 0
        %738 = vmatpush.bf16.msra.mxu0 0
        %739 = vmatpush.bf16.msra.mxu0 0
        %740 = vmatpush.bf16.msra.mxu0 0
        %741 = vmatpush.bf16.msra.mxu0 0
        %742 = vmatpush.bf16.msra.mxu0 0
        %743 = vmatpush.bf16.msra.mxu0 0
        %744 = vmatpush.bf16.msra.mxu0 %v412
        %745 = vmatpush.bf16.msra.mxu0 %v411
        %746 = vmatmul.bf16.gmra.mxu0 %v736
        %v747 = vpop.f32.mrf.mxu0
        %v748 = vadd.f32 0.0, %v747
        %v749 = vpop.f32.mrf.mxu0
        %750 = vdwg.mxu0
        %v751 = vadd.f32 %v730, %v748
        %v752 = vxor.u32 %v751, 2147483648
        %v753 = vmul.f32 %v752, 1.442695
        %v754 = vpow.pop %v753
        %v755 = vadd.f32 %v754, 1.0
        %v756 = vrcp.pop %v755
        %v757 = vmul.f32 %v755, %v756
        %v758 = vsub.f32 1.0, %v757
        %v759 = vmul.f32 %v756, %v758
        %v760 = vadd.f32 %v756, %v759
        %vm761 = vweird.f32 %v755
        %vm762 = vweird.f32 %v756
        %vm763 = vmor %vm761, %vm762
        %v764 = vsel %vm763, %v756, %v760
        %v765 = vand.u32 2147483647, %v755
        %vm766 = vcmp.eq.f32.partialorder %v765, 8.507059e+37
        %v767 = vand.u32 %v755, 2147483648
        %v768 = vor.u32 1.1754944e-38, %v767
        %v769 = vsel %vm766, %v768, %v764
        %v770 = vmul.f32 1.0, %v769
        %v771 = vtanh.pop %v751
        %v772 = vmul.f32 %v770, %v718
        %774 = vrot.lane.b32.xlu0 %v771, 96
        %v775 = vpop.permute.xlu0 %774
        %v777 = vmul.f32 %v770, %v775
        %779 = vrot.lane.b32.xlu0 %v777, 96
        %v780 = vpop.permute.xlu0 %779
        %v782 = vadd.f32 %v772, %v780
        %v783 = vtanh.pop %v782
        %785 = vrot.lane.b32.xlu0 %v783, 96
        %v786 = vpop.permute.xlu0 %785
        %v788 = vmul.f32 %v770, %v786
        %790 = vrot.lane.b32.xlu0 %v788, 32
        %v791 = vpop.permute.xlu0 %790
        %793 = vst.msk [vmem:[%s231 + $0x28] sm:$0xff] %vm279, %v791
        %v794 = vld [vmem:[#allocation2 + $0x30] sm:$0xff]
        %v795 = vpack.c.bf16 %v788, %v788
        %797 = vrot.lane.b32.xlu0 %v795, 32
        %v798 = vpop.permute.xlu0 %797
        %v800 = vsel %vm279, %v798, 0
        %802 = vmatpush.bf16.msra.mxu0 0
        %803 = vmatpush.bf16.msra.mxu0 0
        %804 = vmatpush.bf16.msra.mxu0 0
        %805 = vmatpush.bf16.msra.mxu0 0
        %806 = vmatpush.bf16.msra.mxu0 0
        %807 = vmatpush.bf16.msra.mxu0 0
        %808 = vmatpush.bf16.msra.mxu0 %v412
        %809 = vmatpush.bf16.msra.mxu0 %v411
        %810 = vmatmul.bf16.gmra.mxu0 %v800
        %v811 = vpop.f32.mrf.mxu0
        %v812 = vadd.f32 0.0, %v811
        %v813 = vpop.f32.mrf.mxu0
        %814 = vdwg.mxu0
        %v815 = vadd.f32 %v794, %v812
        %v816 = vxor.u32 %v815, 2147483648
        %v817 = vmul.f32 %v816, 1.442695
        %v818 = vpow.pop %v817
        %v819 = vadd.f32 %v818, 1.0
        %v820 = vrcp.pop %v819
        %v821 = vmul.f32 %v819, %v820
        %v822 = vsub.f32 1.0, %v821
        %v823 = vmul.f32 %v820, %v822
        %v824 = vadd.f32 %v820, %v823
        %vm825 = vweird.f32 %v819
        %vm826 = vweird.f32 %v820
        %vm827 = vmor %vm825, %vm826
        %v828 = vsel %vm827, %v820, %v824
        %v829 = vand.u32 2147483647, %v819
        %vm830 = vcmp.eq.f32.partialorder %v829, 8.507059e+37
        %v831 = vand.u32 %v819, 2147483648
        %v832 = vor.u32 1.1754944e-38, %v831
        %v833 = vsel %vm830, %v832, %v828
        %v834 = vmul.f32 1.0, %v833
        %v835 = vtanh.pop %v815
        %v836 = vmul.f32 %v834, %v782
        %838 = vrot.lane.b32.xlu0 %v835, 96
        %v839 = vpop.permute.xlu0 %838
        %v841 = vmul.f32 %v834, %v839
        %843 = vrot.lane.b32.xlu0 %v841, 96
        %v844 = vpop.permute.xlu0 %843
        %v846 = vadd.f32 %v836, %v844
        %v847 = vtanh.pop %v846
        %849 = vrot.lane.b32.xlu0 %v847, 96
        %v850 = vpop.permute.xlu0 %849
        %v852 = vmul.f32 %v834, %v850
        %854 = vrot.lane.b32.xlu0 %v852, 32
        %v855 = vpop.permute.xlu0 %854
        %857 = vst.msk [vmem:[%s231 + $0x30] sm:$0xff] %vm279, %v855
        %v858 = vld [vmem:[#allocation2 + $0x38] sm:$0xff]
        %v859 = vpack.c.bf16 %v852, %v852
        %861 = vrot.lane.b32.xlu0 %v859, 32
        %v862 = vpop.permute.xlu0 %861
        %v864 = vsel %vm279, %v862, 0
        %866 = vmatpush.bf16.msra.mxu0 0
        %867 = vmatpush.bf16.msra.mxu0 0
        %868 = vmatpush.bf16.msra.mxu0 0
        %869 = vmatpush.bf16.msra.mxu0 0
        %870 = vmatpush.bf16.msra.mxu0 0
        %871 = vmatpush.bf16.msra.mxu0 0
        %872 = vmatpush.bf16.msra.mxu0 %v412
        %873 = vmatpush.bf16.msra.mxu0 %v411
        %874 = vmatmul.bf16.gmra.mxu0 %v864
        %v875 = vpop.f32.mrf.mxu0
        %v876 = vadd.f32 0.0, %v875
        %v877 = vpop.f32.mrf.mxu0
        %878 = vdwg.mxu0
        %v879 = vadd.f32 %v858, %v876
        %v880 = vxor.u32 %v879, 2147483648
        %v881 = vmul.f32 %v880, 1.442695
        %v882 = vpow.pop %v881
        %v883 = vadd.f32 %v882, 1.0
        %v884 = vrcp.pop %v883
        %v885 = vmul.f32 %v883, %v884
        %v886 = vsub.f32 1.0, %v885
        %v887 = vmul.f32 %v884, %v886
        %v888 = vadd.f32 %v884, %v887
        %vm889 = vweird.f32 %v883
        %vm890 = vweird.f32 %v884
        %vm891 = vmor %vm889, %vm890
        %v892 = vsel %vm891, %v884, %v888
        %v893 = vand.u32 2147483647, %v883
        %vm894 = vcmp.eq.f32.partialorder %v893, 8.507059e+37
        %v895 = vand.u32 %v883, 2147483648
        %v896 = vor.u32 1.1754944e-38, %v895
        %v897 = vsel %vm894, %v896, %v892
        %v898 = vmul.f32 1.0, %v897
        %v899 = vtanh.pop %v879
        %v900 = vmul.f32 %v898, %v846
        %902 = vrot.lane.b32.xlu0 %v899, 96
        %v903 = vpop.permute.xlu0 %902
        %v905 = vmul.f32 %v898, %v903
        %907 = vrot.lane.b32.xlu0 %v905, 96
        %v908 = vpop.permute.xlu0 %907
        %v910 = vadd.f32 %v900, %v908
        %v911 = vtanh.pop %v910
        %913 = vrot.lane.b32.xlu0 %v911, 96
        %v914 = vpop.permute.xlu0 %913
        %v916 = vmul.f32 %v898, %v914
        %918 = vrot.lane.b32.xlu0 %v916, 32
        %v919 = vpop.permute.xlu0 %918
        %921 = vst.msk [vmem:[%s231 + $0x38] sm:$0xff] %vm279, %v919
      $region40: #{bilstm_tagger_forward.4} parent=35 // pred_fallthru
        _
      %p922 = scmp.eq.s32.totalorder %s15, 1
      // Predicated region
      $region41: #{bilstm_tagger_forward.4} parent=35 // pred_check
        %p923 = pneg %p922
      $region42: #{bilstm_tagger_forward.4} parent=35 // pred_check_branch
        %925 = sbr.rel (%p923) target = $region44
      $region43: #{bilstm_tagger_forward.4} parent=35 // pred_region
        %v926 = vld [vmem:[#allocation2 + $0x38] sm:$0xff]
        %v931 = vunpack.c.l.b16 %v394
        %v932 = vunpack.c.l.b16 %v395
        %v933 = vunpack.c.l.b16 %v396
        %v934 = vunpack.c.l.b16 %v397
        %v935 = vpack.c.b16 %v932, %v931
        %v936 = vpack.c.b16 %v934, %v933
        %v940 = vsel %vm279, 0, 0
        %942 = vmatpush.bf16.msra.mxu0 0
        %943 = vmatpush.bf16.msra.mxu0 0
        %944 = vmatpush.bf16.msra.mxu0 0
        %945 = vmatpush.bf16.msra.mxu0 0
        %946 = vmatpush.bf16.msra.mxu0 0
        %947 = vmatpush.bf16.msra.mxu0 0
        %948 = vmatpush.bf16.msra.mxu0 %v936
        %949 = vmatpush.bf16.msra.mxu0 %v935
        %950 = vmatmul.bf16.gmra.mxu0 %v940
        %v951 = vpop.f32.mrf.mxu0
        %v952 = vadd.f32 0.0, %v951
        %v953 = vpop.f32.mrf.mxu0
        %954 = vdwg.mxu0
        %v955 = vadd.f32 %v926, %v952
        %v956 = vxor.u32 %v955, 2147483648
        %v957 = vmul.f32 %v956, 1.442695
        %v958 = vpow.pop %v957
        %v959 = vadd.f32 %v958, 1.0
        %v960 = vrcp.pop %v959
        %v961 = vmul.f32 %v959, %v960
        %v962 = vsub.f32 1.0, %v961
        %v963 = vmul.f32 %v960, %v962
        %v964 = vadd.f32 %v960, %v963
        %vm965 = vweird.f32 %v959
        %vm966 = vweird.f32 %v960
        %vm967 = vmor %vm965, %vm966
        %v968 = vsel %vm967, %v960, %v964
        %v969 = vand.u32 2147483647, %v959
        %vm970 = vcmp.eq.f32.partialorder %v969, 8.507059e+37
        %v971 = vand.u32 %v959, 2147483648
        %v972 = vor.u32 1.1754944e-38, %v971
        %v973 = vsel %vm970, %v972, %v968
        %v974 = vmul.f32 1.0, %v973
        %v975 = vtanh.pop %v955
        %v976 = vmul.f32 %v974, 0.0
        %978 = vrot.lane.b32.xlu0 %v975, 96
        %v979 = vpop.permute.xlu0 %978
        %v981 = vmul.f32 %v974, %v979
        %983 = vrot.lane.b32.xlu0 %v981, 96
        %v984 = vpop.permute.xlu0 %983
        %v986 = vadd.f32 %v976, %v984
        %v987 = vtanh.pop %v986
        %989 = vrot.lane.b32.xlu0 %v987, 96
        %v990 = vpop.permute.xlu0 %989
        %v992 = vmul.f32 %v974, %v990
        %994 = vrot.lane.b32.xlu0 %v992, 32
        %v995 = vpop.permute.xlu0 %994
        %997 = vst.msk [vmem:[%s231 + $0x38] sm:$0xff] %vm279, %v995
        %v998 = vld [vmem:[#allocation2 + $0x30] sm:$0xff]
        %v999 = vpack.c.bf16 %v992, %v992
        %1001 = vrot.lane.b32.xlu0 %v999, 32
        %v1002 = vpop.permute.xlu0 %1001
        %v1004 = vsel %vm279, %v1002, 0
        %1006 = vmatpush.bf16.msra.mxu0 0
        %1007 = vmatpush.bf16.msra.mxu0 0
        %1008 = vmatpush.bf16.msra.mxu0 0
        %1009 = vmatpush.bf16.msra.mxu0 0
        %1010 = vmatpush.bf16.msra.mxu0 0
        %1011 = vmatpush.bf16.msra.mxu0 0
        %1012 = vmatpush.bf16.msra.mxu0 %v936
        %1013 = vmatpush.bf16.msra.mxu0 %v935
        %1014 = vmatmul.bf16.gmra.mxu0 %v1004
        %v1015 = vpop.f32.mrf.mxu0
        %v1016 = vadd.f32 0.0, %v1015
        %v1017 = vpop.f32.mrf.mxu0
        %1018 = vdwg.mxu0
        %v1019 = vadd.f32 %v998, %v1016
        %v1020 = vxor.u32 %v1019, 2147483648
        %v1021 = vmul.f32 %v1020, 1.442695
        %v1022 = vpow.pop %v1021
        %v1023 = vadd.f32 %v1022, 1.0
        %v1024 = vrcp.pop %v1023
        %v1025 = vmul.f32 %v1023, %v1024
        %v1026 = vsub.f32 1.0, %v1025
        %v1027 = vmul.f32 %v1024, %v1026
        %v1028 = vadd.f32 %v1024, %v1027
        %vm1029 = vweird.f32 %v1023
        %vm1030 = vweird.f32 %v1024
        %vm1031 = vmor %vm1029, %vm1030
        %v1032 = vsel %vm1031, %v1024, %v1028
        %v1033 = vand.u32 2147483647, %v1023
        %vm1034 = vcmp.eq.f32.partialorder %v1033, 8.507059e+37
        %v1035 = vand.u32 %v1023, 2147483648
        %v1036 = vor.u32 1.1754944e-38, %v1035
        %v1037 = vsel %vm1034, %v1036, %v1032
        %v1038 = vmul.f32 1.0, %v1037
        %v1039 = vtanh.pop %v1019
        %v1040 = vmul.f32 %v1038, %v986
        %1042 = vrot.lane.b32.xlu0 %v1039, 96
        %v1043 = vpop.permute.xlu0 %1042
        %v1045 = vmul.f32 %v1038, %v1043
        %1047 = vrot.lane.b32.xlu0 %v1045, 96
        %v1048 = vpop.permute.xlu0 %1047
        %v1050 = vadd.f32 %v1040, %v1048
        %v1051 = vtanh.pop %v1050
        %1053 = vrot.lane.b32.xlu0 %v1051, 96
        %v1054 = vpop.permute.xlu0 %1053
        %v1056 = vmul.f32 %v1038, %v1054
        %1058 = vrot.lane.b32.xlu0 %v1056, 32
        %v1059 = vpop.permute.xlu0 %1058
        %1061 = vst.msk [vmem:[%s231 + $0x30] sm:$0xff] %vm279, %v1059
        %v1062 = vld [vmem:[#allocation2 + $0x28] sm:$0xff]
        %v1063 = vpack.c.bf16 %v1056, %v1056
        %1065 = vrot.lane.b32.xlu0 %v1063, 32
        %v1066 = vpop.permute.xlu0 %1065
        %v1068 = vsel %vm279, %v1066, 0
        %1070 = vmatpush.bf16.msra.mxu0 0
        %1071 = vmatpush.bf16.msra.mxu0 0
        %1072 = vmatpush.bf16.msra.mxu0 0
        %1073 = vmatpush.bf16.msra.mxu0 0
        %1074 = vmatpush.bf16.msra.mxu0 0
        %1075 = vmatpush.bf16.msra.mxu0 0
        %1076 = vmatpush.bf16.msra.mxu0 %v936
        %1077 = vmatpush.bf16.msra.mxu0 %v935
        %1078 = vmatmul.bf16.gmra.mxu0 %v1068
        %v1079 = vpop.f32.mrf.mxu0
        %v1080 = vadd.f32 0.0, %v1079
        %v1081 = vpop.f32.mrf.mxu0
        %1082 = vdwg.mxu0
        %v1083 = vadd.f32 %v1062, %v1080
        %v1084 = vxor.u32 %v1083, 2147483648
        %v1085 = vmul.f32 %v1084, 1.442695
        %v1086 = vpow.pop %v1085
        %v1087 = vadd.f32 %v1086, 1.0
        %v1088 = vrcp.pop %v1087
        %v1089 = vmul.f32 %v1087, %v1088
        %v1090 = vsub.f32 1.0, %v1089
        %v1091 = vmul.f32 %v1088, %v1090
        %v1092 = vadd.f32 %v1088, %v1091
        %vm1093 = vweird.f32 %v1087
        %vm1094 = vweird.f32 %v1088
        %vm1095 = vmor %vm1093, %vm1094
        %v1096 = vsel %vm1095, %v1088, %v1092
        %v1097 = vand.u32 2147483647, %v1087
        %vm1098 = vcmp.eq.f32.partialorder %v1097, 8.507059e+37
        %v1099 = vand.u32 %v1087, 2147483648
        %v1100 = vor.u32 1.1754944e-38, %v1099
        %v1101 = vsel %vm1098, %v1100, %v1096
        %v1102 = vmul.f32 1.0, %v1101
        %v1103 = vtanh.pop %v1083
        %v1104 = vmul.f32 %v1102, %v1050
        %1106 = vrot.lane.b32.xlu0 %v1103, 96
        %v1107 = vpop.permute.xlu0 %1106
        %v1109 = vmul.f32 %v1102, %v1107
        %1111 = vrot.lane.b32.xlu0 %v1109, 96
        %v1112 = vpop.permute.xlu0 %1111
        %v1114 = vadd.f32 %v1104, %v1112
        %v1115 = vtanh.pop %v1114
        %1117 = vrot.lane.b32.xlu0 %v1115, 96
        %v1118 = vpop.permute.xlu0 %1117
        %v1120 = vmul.f32 %v1102, %v1118
        %1122 = vrot.lane.b32.xlu0 %v1120, 32
        %v1123 = vpop.permute.xlu0 %1122
        %1125 = vst.msk [vmem:[%s231 + $0x28] sm:$0xff] %vm279, %v1123
        %v1126 = vld [vmem:[#allocation2 + $0x20] sm:$0xff]
        %v1127 = vpack.c.bf16 %v1120, %v1120
        %1129 = vrot.lane.b32.xlu0 %v1127, 32
        %v1130 = vpop.permute.xlu0 %1129
        %v1132 = vsel %vm279, %v1130, 0
        %1134 = vmatpush.bf16.msra.mxu0 0
        %1135 = vmatpush.bf16.msra.mxu0 0
        %1136 = vmatpush.bf16.msra.mxu0 0
        %1137 = vmatpush.bf16.msra.mxu0 0
        %1138 = vmatpush.bf16.msra.mxu0 0
        %1139 = vmatpush.bf16.msra.mxu0 0
        %1140 = vmatpush.bf16.msra.mxu0 %v936
        %1141 = vmatpush.bf16.msra.mxu0 %v935
        %1142 = vmatmul.bf16.gmra.mxu0 %v1132
        %v1143 = vpop.f32.mrf.mxu0
        %v1144 = vadd.f32 0.0, %v1143
        %v1145 = vpop.f32.mrf.mxu0
        %1146 = vdwg.mxu0
        %v1147 = vadd.f32 %v1126, %v1144
        %v1148 = vxor.u32 %v1147, 2147483648
        %v1149 = vmul.f32 %v1148, 1.442695
        %v1150 = vpow.pop %v1149
        %v1151 = vadd.f32 %v1150, 1.0
        %v1152 = vrcp.pop %v1151
        %v1153 = vmul.f32 %v1151, %v1152
        %v1154 = vsub.f32 1.0, %v1153
        %v1155 = vmul.f32 %v1152, %v1154
        %v1156 = vadd.f32 %v1152, %v1155
        %vm1157 = vweird.f32 %v1151
        %vm1158 = vweird.f32 %v1152
        %vm1159 = vmor %vm1157, %vm1158
        %v1160 = vsel %vm1159, %v1152, %v1156
        %v1161 = vand.u32 2147483647, %v1151
        %vm1162 = vcmp.eq.f32.partialorder %v1161, 8.507059e+37
        %v1163 = vand.u32 %v1151, 2147483648
        %v1164 = vor.u32 1.1754944e-38, %v1163
        %v1165 = vsel %vm1162, %v1164, %v1160
        %v1166 = vmul.f32 1.0, %v1165
        %v1167 = vtanh.pop %v1147
        %v1168 = vmul.f32 %v1166, %v1114
        %1170 = vrot.lane.b32.xlu0 %v1167, 96
        %v1171 = vpop.permute.xlu0 %1170
        %v1173 = vmul.f32 %v1166, %v1171
        %1175 = vrot.lane.b32.xlu0 %v1173, 96
        %v1176 = vpop.permute.xlu0 %1175
        %v1178 = vadd.f32 %v1168, %v1176
        %v1179 = vtanh.pop %v1178
        %1181 = vrot.lane.b32.xlu0 %v1179, 96
        %v1182 = vpop.permute.xlu0 %1181
        %v1184 = vmul.f32 %v1166, %v1182
        %1186 = vrot.lane.b32.xlu0 %v1184, 32
        %v1187 = vpop.permute.xlu0 %1186
        %1189 = vst.msk [vmem:[%s231 + $0x20] sm:$0xff] %vm279, %v1187
        %v1190 = vld [vmem:[#allocation2 + $0x18] sm:$0xff]
        %v1191 = vpack.c.bf16 %v1184, %v1184
        %1193 = vrot.lane.b32.xlu0 %v1191, 32
        %v1194 = vpop.permute.xlu0 %1193
        %v1196 = vsel %vm279, %v1194, 0
        %1198 = vmatpush.bf16.msra.mxu0 0
        %1199 = vmatpush.bf16.msra.mxu0 0
        %1200 = vmatpush.bf16.msra.mxu0 0
        %1201 = vmatpush.bf16.msra.mxu0 0
        %1202 = vmatpush.bf16.msra.mxu0 0
        %1203 = vmatpush.bf16.msra.mxu0 0
        %1204 = vmatpush.bf16.msra.mxu0 %v936
        %1205 = vmatpush.bf16.msra.mxu0 %v935
        %1206 = vmatmul.bf16.gmra.mxu0 %v1196
        %v1207 = vpop.f32.mrf.mxu0
        %v1208 = vadd.f32 0.0, %v1207
        %v1209 = vpop.f32.mrf.mxu0
        %1210 = vdwg.mxu0
        %v1211 = vadd.f32 %v1190, %v1208
        %v1212 = vxor.u32 %v1211, 2147483648
        %v1213 = vmul.f32 %v1212, 1.442695
        %v1214 = vpow.pop %v1213
        %v1215 = vadd.f32 %v1214, 1.0
        %v1216 = vrcp.pop %v1215
        %v1217 = vmul.f32 %v1215, %v1216
        %v1218 = vsub.f32 1.0, %v1217
        %v1219 = vmul.f32 %v1216, %v1218
        %v1220 = vadd.f32 %v1216, %v1219
        %vm1221 = vweird.f32 %v1215
        %vm1222 = vweird.f32 %v1216
        %vm1223 = vmor %vm1221, %vm1222
        %v1224 = vsel %vm1223, %v1216, %v1220
        %v1225 = vand.u32 2147483647, %v1215
        %vm1226 = vcmp.eq.f32.partialorder %v1225, 8.507059e+37
        %v1227 = vand.u32 %v1215, 2147483648
        %v1228 = vor.u32 1.1754944e-38, %v1227
        %v1229 = vsel %vm1226, %v1228, %v1224
        %v1230 = vmul.f32 1.0, %v1229
        %v1231 = vtanh.pop %v1211
        %v1232 = vmul.f32 %v1230, %v1178
        %1234 = vrot.lane.b32.xlu0 %v1231, 96
        %v1235 = vpop.permute.xlu0 %1234
        %v1237 = vmul.f32 %v1230, %v1235
        %1239 = vrot.lane.b32.xlu0 %v1237, 96
        %v1240 = vpop.permute.xlu0 %1239
        %v1242 = vadd.f32 %v1232, %v1240
        %v1243 = vtanh.pop %v1242
        %1245 = vrot.lane.b32.xlu0 %v1243, 96
        %v1246 = vpop.permute.xlu0 %1245
        %v1248 = vmul.f32 %v1230, %v1246
        %1250 = vrot.lane.b32.xlu0 %v1248, 32
        %v1251 = vpop.permute.xlu0 %1250
        %1253 = vst.msk [vmem:[%s231 + $0x18] sm:$0xff] %vm279, %v1251
        %v1254 = vld [vmem:[#allocation2 + $0x10] sm:$0xff]
        %v1255 = vpack.c.bf16 %v1248, %v1248
        %1257 = vrot.lane.b32.xlu0 %v1255, 32
        %v1258 = vpop.permute.xlu0 %1257
        %v1260 = vsel %vm279, %v1258, 0
        %1262 = vmatpush.bf16.msra.mxu0 0
        %1263 = vmatpush.bf16.msra.mxu0 0
        %1264 = vmatpush.bf16.msra.mxu0 0
        %1265 = vmatpush.bf16.msra.mxu0 0
        %1266 = vmatpush.bf16.msra.mxu0 0
        %1267 = vmatpush.bf16.msra.mxu0 0
        %1268 = vmatpush.bf16.msra.mxu0 %v936
        %1269 = vmatpush.bf16.msra.mxu0 %v935
        %1270 = vmatmul.bf16.gmra.mxu0 %v1260
        %v1271 = vpop.f32.mrf.mxu0
        %v1272 = vadd.f32 0.0, %v1271
        %v1273 = vpop.f32.mrf.mxu0
        %1274 = vdwg.mxu0
        %v1275 = vadd.f32 %v1254, %v1272
        %v1276 = vxor.u32 %v1275, 2147483648
        %v1277 = vmul.f32 %v1276, 1.442695
        %v1278 = vpow.pop %v1277
        %v1279 = vadd.f32 %v1278, 1.0
        %v1280 = vrcp.pop %v1279
        %v1281 = vmul.f32 %v1279, %v1280
        %v1282 = vsub.f32 1.0, %v1281
        %v1283 = vmul.f32 %v1280, %v1282
        %v1284 = vadd.f32 %v1280, %v1283
        %vm1285 = vweird.f32 %v1279
        %vm1286 = vweird.f32 %v1280
        %vm1287 = vmor %vm1285, %vm1286
        %v1288 = vsel %vm1287, %v1280, %v1284
        %v1289 = vand.u32 2147483647, %v1279
        %vm1290 = vcmp.eq.f32.partialorder %v1289, 8.507059e+37
        %v1291 = vand.u32 %v1279, 2147483648
        %v1292 = vor.u32 1.1754944e-38, %v1291
        %v1293 = vsel %vm1290, %v1292, %v1288
        %v1294 = vmul.f32 1.0, %v1293
        %v1295 = vtanh.pop %v1275
        %v1296 = vmul.f32 %v1294, %v1242
        %1298 = vrot.lane.b32.xlu0 %v1295, 96
        %v1299 = vpop.permute.xlu0 %1298
        %v1301 = vmul.f32 %v1294, %v1299
        %1303 = vrot.lane.b32.xlu0 %v1301, 96
        %v1304 = vpop.permute.xlu0 %1303
        %v1306 = vadd.f32 %v1296, %v1304
        %v1307 = vtanh.pop %v1306
        %1309 = vrot.lane.b32.xlu0 %v1307, 96
        %v1310 = vpop.permute.xlu0 %1309
        %v1312 = vmul.f32 %v1294, %v1310
        %1314 = vrot.lane.b32.xlu0 %v1312, 32
        %v1315 = vpop.permute.xlu0 %1314
        %1317 = vst.msk [vmem:[%s231 + $0x10] sm:$0xff] %vm279, %v1315
        %v1318 = vld [vmem:[#allocation2 + $0x8] sm:$0xff]
        %v1319 = vpack.c.bf16 %v1312, %v1312
        %1321 = vrot.lane.b32.xlu0 %v1319, 32
        %v1322 = vpop.permute.xlu0 %1321
        %v1324 = vsel %vm279, %v1322, 0
        %1326 = vmatpush.bf16.msra.mxu0 0
        %1327 = vmatpush.bf16.msra.mxu0 0
        %1328 = vmatpush.bf16.msra.mxu0 0
        %1329 = vmatpush.bf16.msra.mxu0 0
        %1330 = vmatpush.bf16.msra.mxu0 0
        %1331 = vmatpush.bf16.msra.mxu0 0
        %1332 = vmatpush.bf16.msra.mxu0 %v936
        %1333 = vmatpush.bf16.msra.mxu0 %v935
        %1334 = vmatmul.bf16.gmra.mxu0 %v1324
        %v1335 = vpop.f32.mrf.mxu0
        %v1336 = vadd.f32 0.0, %v1335
        %v1337 = vpop.f32.mrf.mxu0
        %1338 = vdwg.mxu0
        %v1339 = vadd.f32 %v1318, %v1336
        %v1340 = vxor.u32 %v1339, 2147483648
        %v1341 = vmul.f32 %v1340, 1.442695
        %v1342 = vpow.pop %v1341
        %v1343 = vadd.f32 %v1342, 1.0
        %v1344 = vrcp.pop %v1343
        %v1345 = vmul.f32 %v1343, %v1344
        %v1346 = vsub.f32 1.0, %v1345
        %v1347 = vmul.f32 %v1344, %v1346
        %v1348 = vadd.f32 %v1344, %v1347
        %vm1349 = vweird.f32 %v1343
        %vm1350 = vweird.f32 %v1344
        %vm1351 = vmor %vm1349, %vm1350
        %v1352 = vsel %vm1351, %v1344, %v1348
        %v1353 = vand.u32 2147483647, %v1343
        %vm1354 = vcmp.eq.f32.partialorder %v1353, 8.507059e+37
        %v1355 = vand.u32 %v1343, 2147483648
        %v1356 = vor.u32 1.1754944e-38, %v1355
        %v1357 = vsel %vm1354, %v1356, %v1352
        %v1358 = vmul.f32 1.0, %v1357
        %v1359 = vtanh.pop %v1339
        %v1360 = vmul.f32 %v1358, %v1306
        %1362 = vrot.lane.b32.xlu0 %v1359, 96
        %v1363 = vpop.permute.xlu0 %1362
        %v1365 = vmul.f32 %v1358, %v1363
        %1367 = vrot.lane.b32.xlu0 %v1365, 96
        %v1368 = vpop.permute.xlu0 %1367
        %v1370 = vadd.f32 %v1360, %v1368
        %v1371 = vtanh.pop %v1370
        %1373 = vrot.lane.b32.xlu0 %v1371, 96
        %v1374 = vpop.permute.xlu0 %1373
        %v1376 = vmul.f32 %v1358, %v1374
        %1378 = vrot.lane.b32.xlu0 %v1376, 32
        %v1379 = vpop.permute.xlu0 %1378
        %1381 = vst.msk [vmem:[%s231 + $0x8] sm:$0xff] %vm279, %v1379
        %v1382 = vld [vmem:[#allocation2] sm:$0xff]
        %v1383 = vpack.c.bf16 %v1376, %v1376
        %1385 = vrot.lane.b32.xlu0 %v1383, 32
        %v1386 = vpop.permute.xlu0 %1385
        %v1388 = vsel %vm279, %v1386, 0
        %1390 = vmatpush.bf16.msra.mxu0 0
        %1391 = vmatpush.bf16.msra.mxu0 0
        %1392 = vmatpush.bf16.msra.mxu0 0
        %1393 = vmatpush.bf16.msra.mxu0 0
        %1394 = vmatpush.bf16.msra.mxu0 0
        %1395 = vmatpush.bf16.msra.mxu0 0
        %1396 = vmatpush.bf16.msra.mxu0 %v936
        %1397 = vmatpush.bf16.msra.mxu0 %v935
        %1398 = vmatmul.bf16.gmra.mxu0 %v1388
        %v1399 = vpop.f32.mrf.mxu0
        %v1400 = vadd.f32 0.0, %v1399
        %v1401 = vpop.f32.mrf.mxu0
        %1402 = vdwg.mxu0
        %v1403 = vadd.f32 %v1382, %v1400
        %v1404 = vxor.u32 %v1403, 2147483648
        %v1405 = vmul.f32 %v1404, 1.442695
        %v1406 = vpow.pop %v1405
        %v1407 = vadd.f32 %v1406, 1.0
        %v1408 = vrcp.pop %v1407
        %v1409 = vmul.f32 %v1407, %v1408
        %v1410 = vsub.f32 1.0, %v1409
        %v1411 = vmul.f32 %v1408, %v1410
        %v1412 = vadd.f32 %v1408, %v1411
        %vm1413 = vweird.f32 %v1407
        %vm1414 = vweird.f32 %v1408
        %vm1415 = vmor %vm1413, %vm1414
        %v1416 = vsel %vm1415, %v1408, %v1412
        %v1417 = vand.u32 2147483647, %v1407
        %vm1418 = vcmp.eq.f32.partialorder %v1417, 8.507059e+37
        %v1419 = vand.u32 %v1407, 2147483648
        %v1420 = vor.u32 1.1754944e-38, %v1419
        %v1421 = vsel %vm1418, %v1420, %v1416
        %v1422 = vmul.f32 1.0, %v1421
        %v1423 = vtanh.pop %v1403
        %v1424 = vmul.f32 %v1422, %v1370
        %1426 = vrot.lane.b32.xlu0 %v1423, 96
        %v1427 = vpop.permute.xlu0 %1426
        %v1429 = vmul.f32 %v1422, %v1427
        %1431 = vrot.lane.b32.xlu0 %v1429, 96
        %v1432 = vpop.permute.xlu0 %1431
        %v1434 = vadd.f32 %v1424, %v1432
        %v1435 = vtanh.pop %v1434
        %1437 = vrot.lane.b32.xlu0 %v1435, 96
        %v1438 = vpop.permute.xlu0 %1437
        %v1440 = vmul.f32 %v1422, %v1438
        %1442 = vrot.lane.b32.xlu0 %v1440, 32
        %v1443 = vpop.permute.xlu0 %1442
        %1445 = vst.msk [vmem:[%s231] sm:$0xff] %vm279, %v1443
      $region44: #{bilstm_tagger_forward.4} parent=35 // pred_fallthru
        _
      %p1446 = scmp.lt.s32.totalorder %s15, 1
      %s1447 = scalar_select %p1446, %s15, 1
      %s1448 = smul.addr %s1447, 8
      %s1449 = smul.addr %s1448, 8
      %s1450 = scalar_lea.vmem %s4, %s1449
      // Predicated region
      $region45: #{bilstm_tagger_forward.4} parent=35 // pred_check
        %p1451 = pneg %p132
      $region46: #{bilstm_tagger_forward.4} parent=35 // pred_check_branch
        %1453 = sbr.rel (%p1451) target = $region48
      $region47: #{bilstm_tagger_forward.4} parent=35 // pred_region
        _
      $region48: #{bilstm_tagger_forward.4} parent=35 // pred_fallthru
        _
    $region36: #{bilstm_tagger_forward.4} parent=5 // pred_fallthru
      _
    %p1454 = scmp.le.s32.totalorder 2, %s10
    // Predicated region
    $region49: #{bilstm_tagger_forward.4} parent=5 // pred_check
      %p1455 = pneg %p1454
    $region50: #{bilstm_tagger_forward.4} parent=5 // pred_check_branch
      %1457 = sbr.rel (%p1455) target = $region52
    $region51: #{bilstm_tagger_forward.4} parent=5 // pred_region
      %s1458 = ssub.s32 %s10, 2
      // Predicated region
      $region53: #{bilstm_tagger_forward.4} parent=51 // pred_check
        %p1459 = pneg %p138
      $region54: #{bilstm_tagger_forward.4} parent=51 // pred_check_branch
        %1461 = sbr.rel (%p1459) target = $region56
      $region55: #{bilstm_tagger_forward.4} parent=51 // pred_region
        %p1462 = scmp.lt.s32.totalorder %s16, 1
        %s1463 = scalar_select %p1462, %s16, 1
        %s1464 = smul.addr %s1463, 8
        %s1465 = smul.addr %s1464, 8
        %s1466 = scalar_lea.vmem %s4, %s1465
      $region56: #{bilstm_tagger_forward.4} parent=51 // pred_fallthru
        _
    $region52: #{bilstm_tagger_forward.4} parent=5 // pred_fallthru
      _
  $region6: #{bilstm_tagger_forward.4} parent=0 // loop_footer
    %s14 = sadd.s32 1, %s10
  $region7: #{bilstm_tagger_forward.4} parent=0 // loop_footer_branch
    %9 = sbr.rel target = $region3
  $region8: #{bilstm_tagger_forward.4} parent=0 // loop_exit
    _

</llo_original>
